<compile_context>
chip_gen: v7x
topology: tpu7x:2x2x1
jax: 0.10.0
libtpu: 0.0.40
codegen_flags: <defaults>
</compile_context>

<pallas_src>
import jax
import jax.numpy as jnp
from jax import lax
from jax.experimental import pallas as pl
from jax.experimental.pallas import tpu as pltpu


_VMEM_LIMIT_BYTES = 48 * 1024 * 1024   # <= 64 MiB so it is valid on v7x as well.


# ----------------------------------------------------------------------------
# Pallas kernels: y = x @ w.T + b   with w in native (N, K) PyTorch layout
# ----------------------------------------------------------------------------
def _linear_kernel_acc(x_ref, w_ref, b_ref, o_ref, acc_ref):
    """Multi-step K reduction: accumulate into VMEM, finalize on the last step."""
    k = pl.program_id(2)

    @pl.when(k == 0)
    def _():
        acc_ref[...] = jnp.zeros_like(acc_ref)

    # (tm, tk) . (tn, tk) contracted on K -> (tm, tn); weight stays untransposed.
    acc_ref[...] += lax.dot_general(
        x_ref[...], w_ref[...],
        dimension_numbers=(((1,), (1,)), ((), ())),
        preferred_element_type=jnp.float32)

    @pl.when(k == pl.num_programs(2) - 1)
    def _():
        o_ref[...] = (acc_ref[...] + b_ref[...]).astype(o_ref.dtype)


def _linear_kernel_single_k(x_ref, w_ref, b_ref, o_ref):
    """Single K step: no VMEM accumulator / extra copy needed."""
    y = lax.dot_general(
        x_ref[...], w_ref[...],
        dimension_numbers=(((1,), (1,)), ((), ())),
        preferred_element_type=jnp.float32)
    o_ref[...] = (y + b_ref[...]).astype(o_ref.dtype)


# ----------------------------------------------------------------------------
# Tiling helpers + wrapper
# ----------------------------------------------------------------------------
def _pick_tile(dim, pref, align):
    """Largest tile <= pref that divides `dim` and is a multiple of `align`,
    falling back to the full dim (a full-extent block is always legal)."""
    if dim <= pref:
        return dim
    t = (pref // align) * align
    while t >= align:
        if dim % t == 0:
            return t
        t -= align
    return dim


def linear_pallas(x, w, b, *, tm_pref=256, tn_pref=512, tk_pref=2048):
    """y = x @ w.T + b, with w in PyTorch nn.Linear layout (out, in)."""
    M, K = x.shape
    N, K2 = w.shape
    assert K == K2 and b.shape == (N,)

    # Pad out_features up to a 128-lane multiple so output stores are lane-dense.
    n_pad = max(128, ((N + 127) // 128) * 128)
    if n_pad != N:
        w = jnp.pad(w, ((0, n_pad - N), (0, 0)))
        b = jnp.pad(b, (0, n_pad - N))

    tm = _pick_tile(M, tm_pref, 8)
    tn = _pick_tile(n_pad, tn_pref, 128)
    tk = _pick_tile(K, tk_pref, 128)
    gm, gn, gk = M // tm, n_pad // tn, K // tk

    if gk == 1:
        kernel = _linear_kernel_single_k
        scratch = []
    else:
        kernel = _linear_kernel_acc
        scratch = [pltpu.VMEM((tm, tn), jnp.float32)]

    out = pl.pallas_call(
        kernel,
        out_shape=jax.ShapeDtypeStruct((M, n_pad), jnp.float32),
        grid_spec=pltpu.PrefetchScalarGridSpec(
            num_scalar_prefetch=0,
            grid=(gm, gn, gk),
            in_specs=[
                pl.BlockSpec((tm, tk), lambda i, j, k: (i, k)),   # activations
                pl.BlockSpec((tn, tk), lambda i, j, k: (j, k)),   # weight, (N, K) native
                pl.BlockSpec((1, tn), lambda i, j, k: (0, j)),    # bias row
            ],
            out_specs=pl.BlockSpec((tm, tn), lambda i, j, k: (i, j)),
            scratch_shapes=scratch,
        ),
        compiler_params=pltpu.CompilerParams(
            dimension_semantics=("parallel", "parallel", "arbitrary"),
            vmem_limit_bytes=_VMEM_LIMIT_BYTES,
        ),
    )(x, w, b.reshape(1, n_pad))

    return out[:, :N] if n_pad != N else out


# ----------------------------------------------------------------------------
# Full forward pass (matches SimpleFeedForward.forward: stacked Linears only)
# ----------------------------------------------------------------------------
def simple_feed_forward(x, params):
    """params: list of (w, b) with w in PyTorch (out, in) layout, b (out,)."""
    y = x
    for w, b in params:
        y = linear_pallas(y, w, b)
    return y


# ----------------------------------------------------------------------------
# Pure-JAX reference + parameter init (PyTorch-like uniform init)
# ----------------------------------------------------------------------------
def reference_forward(x, params):
    y = x
    for w, b in params:
        y = jnp.dot(y, w.T, precision=lax.Precision.HIGHEST) + b
    return y


def init_params(key, layer_dim):
    params = []
    for i in range(len(layer_dim) - 1):
        key, kw, kb = jax.random.split(key, 3)
        fan_in = layer_dim[i]
        bound = 1.0 / (fan_in ** 0.5)
        w = jax.random.uniform(kw, (layer_dim[i + 1], fan_in), jnp.float32,
                               -bound, bound)
        b = jax.random.uniform(kb, (layer_dim[i + 1],), jnp.float32,
                               -bound, bound)
        params.append((w, b))
    return params


if __name__ == "__main__":
    key = jax.random.PRNGKey(0)
    kx, kp = jax.random.split(key)

    # SimpleFeedForward(layer_dim=[4096, 1024, 256, 10]) on a batch of 8.
    layer_dim = [4096, 1024, 256, 10]
    batch = 8
    x = jax.random.normal(kx, (batch, layer_dim[0]), jnp.float32)
    params = init_params(kp, layer_dim)

    out = jax.block_until_ready(jax.jit(simple_feed_forward)(x, params))
    assert out.shape == (batch, layer_dim[-1]) and out.dtype == jnp.float32

    ref = jax.block_until_ready(jax.jit(reference_forward)(x, params))
    assert jnp.allclose(out, ref, rtol=2e-2, atol=2e-2), (
        f"mismatch: max abs diff {jnp.max(jnp.abs(out - ref))}")

    print("KERNEL_OK")
</pallas_src>

<mosaic_0001>
module attributes {stable_mosaic.version = 11 : i64} {
  func.func @_linear_kernel_single_k(%arg0: i32, %arg1: i32, %arg2: i32, %arg3: memref<8x1024xf32, #tpu.memory_space<vmem>>, %arg4: memref<256x1024xf32, #tpu.memory_space<vmem>>, %arg5: memref<1x256xf32, #tpu.memory_space<vmem>>, %arg6: memref<8x256xf32, #tpu.memory_space<vmem>>) attributes {dimension_semantics = [#tpu.dimension_semantics<parallel>, #tpu.dimension_semantics<parallel>, #tpu.dimension_semantics<arbitrary>], iteration_bounds = array<i64: 1, 1, 1>, scalar_prefetch = 0 : i64, scratch_operands = 0 : i64, tpu.core_type = #tpu.core_type<tc>, window_params = [{transform_indices = @transform_0, window_bounds = array<i64: 8, 1024>}, {transform_indices = @transform_1, window_bounds = array<i64: 256, 1024>}, {transform_indices = @transform_2, window_bounds = array<i64: 1, 256>}, {transform_indices = @transform_3, window_bounds = array<i64: 8, 256>}]} {
    %c0 = arith.constant 0 : index
    %c0_0 = arith.constant 0 : index
    %0 = vector.load %arg3[%c0, %c0_0] : memref<8x1024xf32, #tpu.memory_space<vmem>>, vector<8x1024xf32>
    %c0_1 = arith.constant 0 : index
    %c0_2 = arith.constant 0 : index
    %1 = vector.load %arg4[%c0_1, %c0_2] : memref<256x1024xf32, #tpu.memory_space<vmem>>, vector<256x1024xf32>
    %cst = arith.constant dense<0.000000e+00> : vector<8x256xf32>
    %2 = tpu.matmul %0, %1, %cst {dimension_numbers = #tpu.dot_dimension_numbers<[1], [1], [0], [0], [0, 0, 1, 0], [], []>} : vector<8x1024xf32>, vector<256x1024xf32>, vector<8x256xf32> -> vector<8x256xf32>
    %c0_3 = arith.constant 0 : index
    %c0_4 = arith.constant 0 : index
    %3 = vector.load %arg5[%c0_3, %c0_4] : memref<1x256xf32, #tpu.memory_space<vmem>>, vector<1x256xf32>
    %4 = vector.broadcast %3 : vector<1x256xf32> to vector<8x256xf32>
    %5 = arith.addf %2, %4 : vector<8x256xf32>
    %c0_5 = arith.constant 0 : index
    %c0_6 = arith.constant 0 : index
    %6 = vector.load %arg6[%c0_5, %c0_6] : memref<8x256xf32, #tpu.memory_space<vmem>>, vector<8x256xf32>
    tpu.vector_store %arg6[%c0_5, %c0_6], %5 {strides = array<i32>} : memref<8x256xf32, #tpu.memory_space<vmem>>, vector<8x256xf32>,
    return
  }
  func.func @transform_0(%arg0: i32, %arg1: i32, %arg2: i32) -> (i32, i32) {
    %c0_i32 = arith.constant 0 : i32
    return %arg0, %arg2 : i32, i32
  }
  func.func @transform_1(%arg0: i32, %arg1: i32, %arg2: i32) -> (i32, i32) {
    %c0_i32 = arith.constant 0 : i32
    return %arg1, %arg2 : i32, i32
  }
  func.func @transform_2(%arg0: i32, %arg1: i32, %arg2: i32) -> (i32, i32) {
    %c0_i32 = arith.constant 0 : i32
    %c0_i32_0 = arith.constant 0 : i32
    return %c0_i32, %arg1 : i32, i32
  }
  func.func @transform_3(%arg0: i32, %arg1: i32, %arg2: i32) -> (i32, i32) {
    %c0_i32 = arith.constant 0 : i32
    return %arg0, %arg1 : i32, i32
  }
}

module attributes {stable_mosaic.version = 11 : i64} {
  func.func @_linear_kernel_acc(%arg0: i32, %arg1: i32, %arg2: i32, %arg3: memref<8x2048xf32, #tpu.memory_space<vmem>>, %arg4: memref<512x2048xf32, #tpu.memory_space<vmem>>, %arg5: memref<1x512xf32, #tpu.memory_space<vmem>>, %arg6: memref<8x512xf32, #tpu.memory_space<vmem>>, %arg7: memref<8x512xf32, #tpu.memory_space<vmem>>) attributes {dimension_semantics = [#tpu.dimension_semantics<parallel>, #tpu.dimension_semantics<parallel>, #tpu.dimension_semantics<arbitrary>], iteration_bounds = array<i64: 1, 2, 2>, scalar_prefetch = 0 : i64, scratch_operands = 1 : i64, tpu.core_type = #tpu.core_type<tc>, window_params = [{transform_indices = @transform_0, window_bounds = array<i64: 8, 2048>}, {transform_indices = @transform_1, window_bounds = array<i64: 512, 2048>}, {transform_indices = @transform_2, window_bounds = array<i64: 1, 512>}, {transform_indices = @transform_3, window_bounds = array<i64: 8, 512>}]} {
    %c0_i32 = arith.constant 0 : i32
    %0 = arith.cmpi eq, %arg2, %c0_i32 : i32
    %1 = arith.extui %0 : i1 to i32
    %c0_i32_0 = arith.constant 0 : i32
    %2 = arith.cmpi ne, %1, %c0_i32_0 : i32
    scf.if %2 {
      %cst_9 = arith.constant 0.000000e+00 : f32
      %12 = vector.broadcast %cst_9 : f32 to vector<8x512xf32>
      %c0_10 = arith.constant 0 : index
      %c0_11 = arith.constant 0 : index
      %13 = vector.load %arg7[%c0_10, %c0_11] : memref<8x512xf32, #tpu.memory_space<vmem>>, vector<8x512xf32>
      tpu.vector_store %arg7[%c0_10, %c0_11], %12 {strides = array<i32>} : memref<8x512xf32, #tpu.memory_space<vmem>>, vector<8x512xf32>,
    } else {
    }
    %c0 = arith.constant 0 : index
    %c0_1 = arith.constant 0 : index
    %3 = vector.load %arg7[%c0, %c0_1] : memref<8x512xf32, #tpu.memory_space<vmem>>, vector<8x512xf32>
    %c0_2 = arith.constant 0 : index
    %c0_3 = arith.constant 0 : index
    %4 = vector.load %arg3[%c0_2, %c0_3] : memref<8x2048xf32, #tpu.memory_space<vmem>>, vector<8x2048xf32>
    %c0_4 = arith.constant 0 : index
    %c0_5 = arith.constant 0 : index
    %5 = vector.load %arg4[%c0_4, %c0_5] : memref<512x2048xf32, #tpu.memory_space<vmem>>, vector<512x2048xf32>
    %cst = arith.constant dense<0.000000e+00> : vector<8x512xf32>
    %6 = tpu.matmul %4, %5, %cst {dimension_numbers = #tpu.dot_dimension_numbers<[1], [1], [0], [0], [0, 0, 1, 0], [], []>} : vector<8x2048xf32>, vector<512x2048xf32>, vector<8x512xf32> -> vector<8x512xf32>
    %7 = arith.addf %3, %6 : vector<8x512xf32>
    %c0_6 = arith.constant 0 : index
    %c0_7 = arith.constant 0 : index
    %8 = vector.load %arg7[%c0_6, %c0_7] : memref<8x512xf32, #tpu.memory_space<vmem>>, vector<8x512xf32>
    tpu.vector_store %arg7[%c0_6, %c0_7], %7 {strides = array<i32>} : memref<8x512xf32, #tpu.memory_space<vmem>>, vector<8x512xf32>,
    %c1_i32 = arith.constant 1 : i32
    %9 = arith.cmpi eq, %arg2, %c1_i32 : i32
    %10 = arith.extui %9 : i1 to i32
    %c0_i32_8 = arith.constant 0 : i32
    %11 = arith.cmpi ne, %10, %c0_i32_8 : i32
    scf.if %11 {
      %c0_9 = arith.constant 0 : index
      %c0_10 = arith.constant 0 : index
      %12 = vector.load %arg7[%c0_9, %c0_10] : memref<8x512xf32, #tpu.memory_space<vmem>>, vector<8x512xf32>
      %c0_11 = arith.constant 0 : index
      %c0_12 = arith.constant 0 : index
      %13 = vector.load %arg5[%c0_11, %c0_12] : memref<1x512xf32, #tpu.memory_space<vmem>>, vector<1x512xf32>
      %14 = vector.broadcast %13 : vector<1x512xf32> to vector<8x512xf32>
      %15 = arith.addf %12, %14 : vector<8x512xf32>
      %c0_13 = arith.constant 0 : index
      %c0_14 = arith.constant 0 : index
      %16 = vector.load %arg6[%c0_13, %c0_14] : memref<8x512xf32, #tpu.memory_space<vmem>>, vector<8x512xf32>
      tpu.vector_store %arg6[%c0_13, %c0_14], %15 {strides = array<i32>} : memref<8x512xf32, #tpu.memory_space<vmem>>, vector<8x512xf32>,
    } else {
    }
    return
  }
  func.func @transform_0(%arg0: i32, %arg1: i32, %arg2: i32) -> (i32, i32) {
    %c0_i32 = arith.constant 0 : i32
    return %arg0, %arg2 : i32, i32
  }
  func.func @transform_1(%arg0: i32, %arg1: i32, %arg2: i32) -> (i32, i32) {
    %c0_i32 = arith.constant 0 : i32
    return %arg1, %arg2 : i32, i32
  }
  func.func @transform_2(%arg0: i32, %arg1: i32, %arg2: i32) -> (i32, i32) {
    %c0_i32 = arith.constant 0 : i32
    %c0_i32_0 = arith.constant 0 : i32
    return %c0_i32, %arg1 : i32, i32
  }
  func.func @transform_3(%arg0: i32, %arg1: i32, %arg2: i32) -> (i32, i32) {
    %c0_i32 = arith.constant 0 : i32
    return %arg0, %arg1 : i32, i32
  }
}

module attributes {stable_mosaic.version = 11 : i64} {
  func.func @_linear_kernel_single_k(%arg0: i32, %arg1: i32, %arg2: i32, %arg3: memref<8x256xf32, #tpu.memory_space<vmem>>, %arg4: memref<128x256xf32, #tpu.memory_space<vmem>>, %arg5: memref<1x128xf32, #tpu.memory_space<vmem>>, %arg6: memref<8x128xf32, #tpu.memory_space<vmem>>) attributes {dimension_semantics = [#tpu.dimension_semantics<parallel>, #tpu.dimension_semantics<parallel>, #tpu.dimension_semantics<arbitrary>], iteration_bounds = array<i64: 1, 1, 1>, scalar_prefetch = 0 : i64, scratch_operands = 0 : i64, tpu.core_type = #tpu.core_type<tc>, window_params = [{transform_indices = @transform_0, window_bounds = array<i64: 8, 256>}, {transform_indices = @transform_1, window_bounds = array<i64: 128, 256>}, {transform_indices = @transform_2, window_bounds = array<i64: 1, 128>}, {transform_indices = @transform_3, window_bounds = array<i64: 8, 128>}]} {
    %c0 = arith.constant 0 : index
    %c0_0 = arith.constant 0 : index
    %0 = vector.load %arg3[%c0, %c0_0] : memref<8x256xf32, #tpu.memory_space<vmem>>, vector<8x256xf32>
    %c0_1 = arith.constant 0 : index
    %c0_2 = arith.constant 0 : index
    %1 = vector.load %arg4[%c0_1, %c0_2] : memref<128x256xf32, #tpu.memory_space<vmem>>, vector<128x256xf32>
    %cst = arith.constant dense<0.000000e+00> : vector<8x128xf32>
    %2 = tpu.matmul %0, %1, %cst {dimension_numbers = #tpu.dot_dimension_numbers<[1], [1], [0], [0], [0, 0, 1, 0], [], []>} : vector<8x256xf32>, vector<128x256xf32>, vector<8x128xf32> -> vector<8x128xf32>
    %c0_3 = arith.constant 0 : index
    %c0_4 = arith.constant 0 : index
    %3 = vector.load %arg5[%c0_3, %c0_4] : memref<1x128xf32, #tpu.memory_space<vmem>>, vector<1x128xf32>
    %4 = vector.broadcast %3 : vector<1x128xf32> to vector<8x128xf32>
    %5 = arith.addf %2, %4 : vector<8x128xf32>
    %c0_5 = arith.constant 0 : index
    %c0_6 = arith.constant 0 : index
    %6 = vector.load %arg6[%c0_5, %c0_6] : memref<8x128xf32, #tpu.memory_space<vmem>>, vector<8x128xf32>
    tpu.vector_store %arg6[%c0_5, %c0_6], %5 {strides = array<i32>} : memref<8x128xf32, #tpu.memory_space<vmem>>, vector<8x128xf32>,
    return
  }
  func.func @transform_0(%arg0: i32, %arg1: i32, %arg2: i32) -> (i32, i32) {
    %c0_i32 = arith.constant 0 : i32
    return %arg0, %arg2 : i32, i32
  }
  func.func @transform_1(%arg0: i32, %arg1: i32, %arg2: i32) -> (i32, i32) {
    %c0_i32 = arith.constant 0 : i32
    return %arg1, %arg2 : i32, i32
  }
  func.func @transform_2(%arg0: i32, %arg1: i32, %arg2: i32) -> (i32, i32) {
    %c0_i32 = arith.constant 0 : i32
    %c0_i32_0 = arith.constant 0 : i32
    return %c0_i32, %arg1 : i32, i32
  }
  func.func @transform_3(%arg0: i32, %arg1: i32, %arg2: i32) -> (i32, i32) {
    %c0_i32 = arith.constant 0 : i32
    return %arg0, %arg1 : i32, i32
  }
}

</mosaic_0001>

<llo_original>
// kernel: simple_feed_forward.5
$region0: #{simple_feed_forward.5}
  #allocation0 [shape = 'u32[]', space=smem, size = 0x4, offset = 0x4, fixed_abs, tag = 'smem constant byte address 0x4 - core index']
  #allocation1 [shape = 'u32[144,128]{1,0:T(1,128)}', space=vmem, size = 0x12000, scoped, tag = 'internal scratch']
  %s0 = inlined_call_operand.vmem [shape: f32[8,256], index: 0, kind: input, shape index: {}]
  %s1 = inlined_call_operand.vmem [shape: f32[128,256], index: 1, kind: input, shape index: {}]
  %s2 = inlined_call_operand.vmem [shape: f32[1,128], index: 2, kind: input, shape index: {}]
  %s3 = inlined_call_operand.hbm [shape: f32[8,128], index: 3, kind: output, shape index: {}]
  %s4 = sld [smem:[#allocation0]]
  $region22: #{simple_feed_forward.5} parent=0
    _
  %s6 = ssub.s32 1, %s4
  %s7 = scalar_select 0, %s6, %s4
  $region1: #{simple_feed_forward.5} parent=0
    #allocation2 [shape = 'u8[4096]{0}', space=vmem, size = 0x1000, scoped, tag = 'output window, operand 0, single buffered']
    #allocation3 [shape = 's32[1]{0}', space=sflag, size = 0x4, scoped, tag = 'scoped memory for simple_feed_forward.5']
    %8 = vsyncpa [#allocation3], 0
    // Predicated region
    $region2: #{simple_feed_forward.5} parent=1 // pred_check
      _
    $region3: #{simple_feed_forward.5} parent=1 // pred_check_branch
      %10 = sbr.rel (0) target = $region5
    $region4: #{simple_feed_forward.5} parent=1 // pred_region
      _
    $region5: #{simple_feed_forward.5} parent=1 // pred_fallthru
      _
    // Predicated region
    $region6: #{simple_feed_forward.5} parent=1 // pred_check
      _
    $region7: #{simple_feed_forward.5} parent=1 // pred_check_branch
      %12 = sbr.rel (0) target = $region9
    $region8: #{simple_feed_forward.5} parent=1 // pred_region
      _
    $region9: #{simple_feed_forward.5} parent=1 // pred_fallthru
      _
    // Predicated region
    $region10: #{simple_feed_forward.5} parent=1 // pred_check
      _
    $region11: #{simple_feed_forward.5} parent=1 // pred_check_branch
      %14 = sbr.rel (0) target = $region13
    $region12: #{simple_feed_forward.5} parent=1 // pred_region
      _
    $region13: #{simple_feed_forward.5} parent=1 // pred_fallthru
      _
    %v15 = vld [vmem:[%s0] sm:$0xff]
    %v16 = vld [vmem:[%s0 + $0x8] sm:$0xff]
    %v17 = vld [vmem:[%s1] sm:$0xff]
    %v18 = vld [vmem:[%s1 + $0x8] sm:$0xff]
    %v19 = vld [vmem:[%s1 + $0x10] sm:$0xff]
    %v20 = vld [vmem:[%s1 + $0x18] sm:$0xff]
    %v21 = vld [vmem:[%s1 + $0x20] sm:$0xff]
    %v22 = vld [vmem:[%s1 + $0x28] sm:$0xff]
    %v23 = vld [vmem:[%s1 + $0x30] sm:$0xff]
    %v24 = vld [vmem:[%s1 + $0x38] sm:$0xff]
    %v25 = vld [vmem:[%s1 + $0x40] sm:$0xff]
    %v26 = vld [vmem:[%s1 + $0x48] sm:$0xff]
    %v27 = vld [vmem:[%s1 + $0x50] sm:$0xff]
    %v28 = vld [vmem:[%s1 + $0x58] sm:$0xff]
    %v29 = vld [vmem:[%s1 + $0x60] sm:$0xff]
    %v30 = vld [vmem:[%s1 + $0x68] sm:$0xff]
    %v31 = vld [vmem:[%s1 + $0x70] sm:$0xff]
    %v32 = vld [vmem:[%s1 + $0x78] sm:$0xff]
    %v33 = vld [vmem:[%s1 + $0x80] sm:$0xff]
    %v34 = vld [vmem:[%s1 + $0x88] sm:$0xff]
    %v35 = vld [vmem:[%s1 + $0x90] sm:$0xff]
    %v36 = vld [vmem:[%s1 + $0x98] sm:$0xff]
    %v37 = vld [vmem:[%s1 + $0xa0] sm:$0xff]
    %v38 = vld [vmem:[%s1 + $0xa8] sm:$0xff]
    %v39 = vld [vmem:[%s1 + $0xb0] sm:$0xff]
    %v40 = vld [vmem:[%s1 + $0xb8] sm:$0xff]
    %v41 = vld [vmem:[%s1 + $0xc0] sm:$0xff]
    %v42 = vld [vmem:[%s1 + $0xc8] sm:$0xff]
    %v43 = vld [vmem:[%s1 + $0xd0] sm:$0xff]
    %v44 = vld [vmem:[%s1 + $0xd8] sm:$0xff]
    %v45 = vld [vmem:[%s1 + $0xe0] sm:$0xff]
    %v46 = vld [vmem:[%s1 + $0xe8] sm:$0xff]
    %v47 = vld [vmem:[%s1 + $0xf0] sm:$0xff]
    %v48 = vld [vmem:[%s1 + $0xf8] sm:$0xff]
    %v49 = vld [vmem:[%s2] sm:$0x1]
    %v51 = vlaneseq
    %v52 = vshrl.u32 %v51, 7
    %v53 = vsub.s32 0, %v52
    %v54 = vrot.slane %v49, %v53
    %56 = vmatprep.subr.mxu0 %v18
    %57 = vmatpush1.xpose.msra.mxu0 %v17
    %58 = vmatprep.subr.mxu0 %v20
    %59 = vmatpush1.xpose.msra.mxu0 %v19
    %60 = vmatprep.subr.mxu0 %v22
    %61 = vmatpush1.xpose.msra.mxu0 %v21
    %62 = vmatprep.subr.mxu0 %v24
    %63 = vmatpush1.xpose.msra.mxu0 %v23
    %64 = vmatprep.subr.mxu0 %v26
    %65 = vmatpush1.xpose.msra.mxu0 %v25
    %66 = vmatprep.subr.mxu0 %v28
    %67 = vmatpush1.xpose.msra.mxu0 %v27
    %68 = vmatprep.subr.mxu0 %v30
    %69 = vmatpush1.xpose.msra.mxu0 %v29
    %70 = vmatprep.subr.mxu0 %v32
    %71 = vmatpush1.xpose.msra.mxu0 %v31
    %72 = vmatprep.subr.mxu0 %v34
    %73 = vmatpush1.xpose.msra.mxu0 %v33
    %74 = vmatprep.subr.mxu0 %v36
    %75 = vmatpush1.xpose.msra.mxu0 %v35
    %76 = vmatprep.subr.mxu0 %v38
    %77 = vmatpush1.xpose.msra.mxu0 %v37
    %78 = vmatprep.subr.mxu0 %v40
    %79 = vmatpush1.xpose.msra.mxu0 %v39
    %80 = vmatprep.subr.mxu0 %v42
    %81 = vmatpush1.xpose.msra.mxu0 %v41
    %82 = vmatprep.subr.mxu0 %v44
    %83 = vmatpush1.xpose.msra.mxu0 %v43
    %84 = vmatprep.subr.mxu0 %v46
    %85 = vmatpush1.xpose.msra.mxu0 %v45
    %86 = vmatprep.subr.mxu0 %v48
    %87 = vmatpush1.xpose.msra.mxu0 %v47
    %88 = vmatprep.subr.mxu0 0.0
    %89 = vmatpush1.xpose.msra.mxu0 0.0
    %90 = vmatprep.subr.mxu0 0.0
    %91 = vmatpush1.xpose.msra.mxu0 0.0
    %92 = vmatprep.subr.mxu0 0.0
    %93 = vmatpush1.xpose.msra.mxu0 0.0
    %94 = vmatprep.subr.mxu0 0.0
    %95 = vmatpush1.xpose.msra.mxu0 0.0
    %96 = vmatprep.subr.mxu0 0.0
    %97 = vmatpush1.xpose.msra.mxu0 0.0
    %98 = vmatprep.subr.mxu0 0.0
    %99 = vmatpush1.xpose.msra.mxu0 0.0
    %100 = vmatprep.subr.mxu0 0.0
    %101 = vmatpush1.xpose.msra.mxu0 0.0
    %102 = vmatprep.subr.mxu0 0.0
    %103 = vmatpush1.xpose.msra.mxu0 0.0
    %104 = vmatprep.subr.mxu0 0.0
    %105 = vmatpush1.xpose.msra.mxu0 0.0
    %106 = vmatprep.subr.mxu0 0.0
    %107 = vmatpush1.xpose.msra.mxu0 0.0
    %108 = vmatprep.subr.mxu0 0.0
    %109 = vmatpush1.xpose.msra.mxu0 0.0
    %110 = vmatprep.subr.mxu0 0.0
    %111 = vmatpush1.xpose.msra.mxu0 0.0
    %112 = vmatprep.subr.mxu0 0.0
    %113 = vmatpush1.xpose.msra.mxu0 0.0
    %114 = vmatprep.subr.mxu0 0.0
    %115 = vmatpush1.xpose.msra.mxu0 0.0
    %116 = vmatprep.subr.mxu0 0.0
    %117 = vmatpush1.xpose.msra.mxu0 0.0
    %118 = vmatprep.subr.mxu0 0.0
    %119 = vmatpush1.xpose.msra.mxu0 0.0
    %120 = vmatprep.mubr.f32.mxu0 %v16
    %121 = vmatmul.mubr.f32.gmra.mrb[0].mxu0 %v15
    %v122 = vpop.f32.mrb[0].mxu0
    %v123 = vadd.f32 %v54, %v122
    %v124 = vpop.f32.mrb[0].mxu0
    %125 = vdwg.mxu0
    %126 = vst [vmem:[#allocation2] sm:$0xff] %v123
    // Predicated region
    $region14: #{simple_feed_forward.5} parent=1 // pred_check
      _
    $region15: #{simple_feed_forward.5} parent=1 // pred_check_branch
      %128 = sbr.rel (0) target = $region17
    $region16: #{simple_feed_forward.5} parent=1 // pred_region
      %s130 = ssub.s32 128, 128
      %131 = vsyncadd [#allocation3], %s130
      %s133 = sshll.u32 [#allocation2], 4
      %s134 = int_to_ptr.vmem [resolvable:$true] %s133
      %136 = dma.vmem_to_hbm [thread:$0]  %s134, 128, %s3, [#allocation3]
    $region17: #{simple_feed_forward.5} parent=1 // pred_fallthru
      _
    // Predicated region
    $region18: #{simple_feed_forward.5} parent=1 // pred_check
      _
    $region19: #{simple_feed_forward.5} parent=1 // pred_check_branch
      %138 = sbr.rel (0) target = $region21
    $region20: #{simple_feed_forward.5} parent=1 // pred_region
      %139 = dma.done [#allocation3], 128
    $region21: #{simple_feed_forward.5} parent=1 // pred_fallthru
      _
    %140 = vsyncpa [#allocation3], 1

// kernel: simple_feed_forward.4
$region0: #{simple_feed_forward.4}
  #allocation0 [shape = 'u32[]', space=smem, size = 0x4, offset = 0x4, fixed_abs, tag = 'smem constant byte address 0x4 - core index']
  #allocation1 [shape = 'u32[144,128]{1,0:T(1,128)}', space=vmem, size = 0x12000, scoped, tag = 'internal scratch']
  %s0 = inlined_call_operand.vmem [shape: f32[8,1024], index: 0, kind: input, shape index: {}]
  %s1 = inlined_call_operand.vmem [shape: f32[256,1024], index: 1, kind: input, shape index: {}]
  %s2 = inlined_call_operand.vmem [shape: f32[1,256], index: 2, kind: input, shape index: {}]
  %s3 = inlined_call_operand.vmem [shape: f32[8,256], index: 3, kind: output, shape index: {}]
  %s4 = sld [smem:[#allocation0]]
  $region22: #{simple_feed_forward.4} parent=0
    _
  %s6 = ssub.s32 1, %s4
  %s7 = scalar_select 0, %s6, %s4
  // Predicated region
  $region2: #{simple_feed_forward.4} parent=0 // pred_check
    _
  $region3: #{simple_feed_forward.4} parent=0 // pred_check_branch
    %9 = sbr.rel (0) target = $region5
  $region4: #{simple_feed_forward.4} parent=0 // pred_region
    _
  $region5: #{simple_feed_forward.4} parent=0 // pred_fallthru
    _
  // Predicated region
  $region6: #{simple_feed_forward.4} parent=0 // pred_check
    _
  $region7: #{simple_feed_forward.4} parent=0 // pred_check_branch
    %11 = sbr.rel (0) target = $region9
  $region8: #{simple_feed_forward.4} parent=0 // pred_region
    _
  $region9: #{simple_feed_forward.4} parent=0 // pred_fallthru
    _
  // Predicated region
  $region10: #{simple_feed_forward.4} parent=0 // pred_check
    _
  $region11: #{simple_feed_forward.4} parent=0 // pred_check_branch
    %13 = sbr.rel (0) target = $region13
  $region12: #{simple_feed_forward.4} parent=0 // pred_region
    _
  $region13: #{simple_feed_forward.4} parent=0 // pred_fallthru
    _
  %v14 = vld [vmem:[%s0] sm:$0xff]
  %v15 = vld [vmem:[%s0 + $0x8] sm:$0xff]
  %v16 = vld [vmem:[%s0 + $0x10] sm:$0xff]
  %v17 = vld [vmem:[%s0 + $0x18] sm:$0xff]
  %v18 = vld [vmem:[%s0 + $0x20] sm:$0xff]
  %v19 = vld [vmem:[%s0 + $0x28] sm:$0xff]
  %v20 = vld [vmem:[%s0 + $0x30] sm:$0xff]
  %v21 = vld [vmem:[%s0 + $0x38] sm:$0xff]
  %v22 = vld [vmem:[%s1] sm:$0xff]
  %v23 = vld [vmem:[%s1 + $0x8] sm:$0xff]
  %v24 = vld [vmem:[%s1 + $0x10] sm:$0xff]
  %v25 = vld [vmem:[%s1 + $0x18] sm:$0xff]
  %v26 = vld [vmem:[%s1 + $0x20] sm:$0xff]
  %v27 = vld [vmem:[%s1 + $0x28] sm:$0xff]
  %v28 = vld [vmem:[%s1 + $0x30] sm:$0xff]
  %v29 = vld [vmem:[%s1 + $0x38] sm:$0xff]
  %v30 = vld [vmem:[%s1 + $0x40] sm:$0xff]
  %v31 = vld [vmem:[%s1 + $0x48] sm:$0xff]
  %v32 = vld [vmem:[%s1 + $0x50] sm:$0xff]
  %v33 = vld [vmem:[%s1 + $0x58] sm:$0xff]
  %v34 = vld [vmem:[%s1 + $0x60] sm:$0xff]
  %v35 = vld [vmem:[%s1 + $0x68] sm:$0xff]
  %v36 = vld [vmem:[%s1 + $0x70] sm:$0xff]
  %v37 = vld [vmem:[%s1 + $0x78] sm:$0xff]
  %v38 = vld [vmem:[%s1 + $0x80] sm:$0xff]
  %v39 = vld [vmem:[%s1 + $0x88] sm:$0xff]
  %v40 = vld [vmem:[%s1 + $0x90] sm:$0xff]
  %v41 = vld [vmem:[%s1 + $0x98] sm:$0xff]
  %v42 = vld [vmem:[%s1 + $0xa0] sm:$0xff]
  %v43 = vld [vmem:[%s1 + $0xa8] sm:$0xff]
  %v44 = vld [vmem:[%s1 + $0xb0] sm:$0xff]
  %v45 = vld [vmem:[%s1 + $0xb8] sm:$0xff]
  %v46 = vld [vmem:[%s1 + $0xc0] sm:$0xff]
  %v47 = vld [vmem:[%s1 + $0xc8] sm:$0xff]
  %v48 = vld [vmem:[%s1 + $0xd0] sm:$0xff]
  %v49 = vld [vmem:[%s1 + $0xd8] sm:$0xff]
  %v50 = vld [vmem:[%s1 + $0xe0] sm:$0xff]
  %v51 = vld [vmem:[%s1 + $0xe8] sm:$0xff]
  %v52 = vld [vmem:[%s1 + $0xf0] sm:$0xff]
  %v53 = vld [vmem:[%s1 + $0xf8] sm:$0xff]
  %v54 = vld [vmem:[%s1 + $0x100] sm:$0xff]
  %v55 = vld [vmem:[%s1 + $0x108] sm:$0xff]
  %v56 = vld [vmem:[%s1 + $0x110] sm:$0xff]
  %v57 = vld [vmem:[%s1 + $0x118] sm:$0xff]
  %v58 = vld [vmem:[%s1 + $0x120] sm:$0xff]
  %v59 = vld [vmem:[%s1 + $0x128] sm:$0xff]
  %v60 = vld [vmem:[%s1 + $0x130] sm:$0xff]
  %v61 = vld [vmem:[%s1 + $0x138] sm:$0xff]
  %v62 = vld [vmem:[%s1 + $0x140] sm:$0xff]
  %v63 = vld [vmem:[%s1 + $0x148] sm:$0xff]
  %v64 = vld [vmem:[%s1 + $0x150] sm:$0xff]
  %v65 = vld [vmem:[%s1 + $0x158] sm:$0xff]
  %v66 = vld [vmem:[%s1 + $0x160] sm:$0xff]
  %v67 = vld [vmem:[%s1 + $0x168] sm:$0xff]
  %v68 = vld [vmem:[%s1 + $0x170] sm:$0xff]
  %v69 = vld [vmem:[%s1 + $0x178] sm:$0xff]
  %v70 = vld [vmem:[%s1 + $0x180] sm:$0xff]
  %v71 = vld [vmem:[%s1 + $0x188] sm:$0xff]
  %v72 = vld [vmem:[%s1 + $0x190] sm:$0xff]
  %v73 = vld [vmem:[%s1 + $0x198] sm:$0xff]
  %v74 = vld [vmem:[%s1 + $0x1a0] sm:$0xff]
  %v75 = vld [vmem:[%s1 + $0x1a8] sm:$0xff]
  %v76 = vld [vmem:[%s1 + $0x1b0] sm:$0xff]
  %v77 = vld [vmem:[%s1 + $0x1b8] sm:$0xff]
  %v78 = vld [vmem:[%s1 + $0x1c0] sm:$0xff]
  %v79 = vld [vmem:[%s1 + $0x1c8] sm:$0xff]
  %v80 = vld [vmem:[%s1 + $0x1d0] sm:$0xff]
  %v81 = vld [vmem:[%s1 + $0x1d8] sm:$0xff]
  %v82 = vld [vmem:[%s1 + $0x1e0] sm:$0xff]
  %v83 = vld [vmem:[%s1 + $0x1e8] sm:$0xff]
  %v84 = vld [vmem:[%s1 + $0x1f0] sm:$0xff]
  %v85 = vld [vmem:[%s1 + $0x1f8] sm:$0xff]
  %v86 = vld [vmem:[%s1 + $0x200] sm:$0xff]
  %v87 = vld [vmem:[%s1 + $0x208] sm:$0xff]
  %v88 = vld [vmem:[%s1 + $0x210] sm:$0xff]
  %v89 = vld [vmem:[%s1 + $0x218] sm:$0xff]
  %v90 = vld [vmem:[%s1 + $0x220] sm:$0xff]
  %v91 = vld [vmem:[%s1 + $0x228] sm:$0xff]
  %v92 = vld [vmem:[%s1 + $0x230] sm:$0xff]
  %v93 = vld [vmem:[%s1 + $0x238] sm:$0xff]
  %v94 = vld [vmem:[%s1 + $0x240] sm:$0xff]
  %v95 = vld [vmem:[%s1 + $0x248] sm:$0xff]
  %v96 = vld [vmem:[%s1 + $0x250] sm:$0xff]
  %v97 = vld [vmem:[%s1 + $0x258] sm:$0xff]
  %v98 = vld [vmem:[%s1 + $0x260] sm:$0xff]
  %v99 = vld [vmem:[%s1 + $0x268] sm:$0xff]
  %v100 = vld [vmem:[%s1 + $0x270] sm:$0xff]
  %v101 = vld [vmem:[%s1 + $0x278] sm:$0xff]
  %v102 = vld [vmem:[%s1 + $0x280] sm:$0xff]
  %v103 = vld [vmem:[%s1 + $0x288] sm:$0xff]
  %v104 = vld [vmem:[%s1 + $0x290] sm:$0xff]
  %v105 = vld [vmem:[%s1 + $0x298] sm:$0xff]
  %v106 = vld [vmem:[%s1 + $0x2a0] sm:$0xff]
  %v107 = vld [vmem:[%s1 + $0x2a8] sm:$0xff]
  %v108 = vld [vmem:[%s1 + $0x2b0] sm:$0xff]
  %v109 = vld [vmem:[%s1 + $0x2b8] sm:$0xff]
  %v110 = vld [vmem:[%s1 + $0x2c0] sm:$0xff]
  %v111 = vld [vmem:[%s1 + $0x2c8] sm:$0xff]
  %v112 = vld [vmem:[%s1 + $0x2d0] sm:$0xff]
  %v113 = vld [vmem:[%s1 + $0x2d8] sm:$0xff]
  %v114 = vld [vmem:[%s1 + $0x2e0] sm:$0xff]
  %v115 = vld [vmem:[%s1 + $0x2e8] sm:$0xff]
  %v116 = vld [vmem:[%s1 + $0x2f0] sm:$0xff]
  %v117 = vld [vmem:[%s1 + $0x2f8] sm:$0xff]
  %v118 = vld [vmem:[%s1 + $0x300] sm:$0xff]
  %v119 = vld [vmem:[%s1 + $0x308] sm:$0xff]
  %v120 = vld [vmem:[%s1 + $0x310] sm:$0xff]
  %v121 = vld [vmem:[%s1 + $0x318] sm:$0xff]
  %v122 = vld [vmem:[%s1 + $0x320] sm:$0xff]
  %v123 = vld [vmem:[%s1 + $0x328] sm:$0xff]
  %v124 = vld [vmem:[%s1 + $0x330] sm:$0xff]
  %v125 = vld [vmem:[%s1 + $0x338] sm:$0xff]
  %v126 = vld [vmem:[%s1 + $0x340] sm:$0xff]
  %v127 = vld [vmem:[%s1 + $0x348] sm:$0xff]
  %v128 = vld [vmem:[%s1 + $0x350] sm:$0xff]
  %v129 = vld [vmem:[%s1 + $0x358] sm:$0xff]
  %v130 = vld [vmem:[%s1 + $0x360] sm:$0xff]
  %v131 = vld [vmem:[%s1 + $0x368] sm:$0xff]
  %v132 = vld [vmem:[%s1 + $0x370] sm:$0xff]
  %v133 = vld [vmem:[%s1 + $0x378] sm:$0xff]
  %v134 = vld [vmem:[%s1 + $0x380] sm:$0xff]
  %v135 = vld [vmem:[%s1 + $0x388] sm:$0xff]
  %v136 = vld [vmem:[%s1 + $0x390] sm:$0xff]
  %v137 = vld [vmem:[%s1 + $0x398] sm:$0xff]
  %v138 = vld [vmem:[%s1 + $0x3a0] sm:$0xff]
  %v139 = vld [vmem:[%s1 + $0x3a8] sm:$0xff]
  %v140 = vld [vmem:[%s1 + $0x3b0] sm:$0xff]
  %v141 = vld [vmem:[%s1 + $0x3b8] sm:$0xff]
  %v142 = vld [vmem:[%s1 + $0x3c0] sm:$0xff]
  %v143 = vld [vmem:[%s1 + $0x3c8] sm:$0xff]
  %v144 = vld [vmem:[%s1 + $0x3d0] sm:$0xff]
  %v145 = vld [vmem:[%s1 + $0x3d8] sm:$0xff]
  %v146 = vld [vmem:[%s1 + $0x3e0] sm:$0xff]
  %v147 = vld [vmem:[%s1 + $0x3e8] sm:$0xff]
  %v148 = vld [vmem:[%s1 + $0x3f0] sm:$0xff]
  %v149 = vld [vmem:[%s1 + $0x3f8] sm:$0xff]
  %v150 = vld [vmem:[%s1 + $0x400] sm:$0xff]
  %v151 = vld [vmem:[%s1 + $0x408] sm:$0xff]
  %v152 = vld [vmem:[%s1 + $0x410] sm:$0xff]
  %v153 = vld [vmem:[%s1 + $0x418] sm:$0xff]
  %v154 = vld [vmem:[%s1 + $0x420] sm:$0xff]
  %v155 = vld [vmem:[%s1 + $0x428] sm:$0xff]
  %v156 = vld [vmem:[%s1 + $0x430] sm:$0xff]
  %v157 = vld [vmem:[%s1 + $0x438] sm:$0xff]
  %v158 = vld [vmem:[%s1 + $0x440] sm:$0xff]
  %v159 = vld [vmem:[%s1 + $0x448] sm:$0xff]
  %v160 = vld [vmem:[%s1 + $0x450] sm:$0xff]
  %v161 = vld [vmem:[%s1 + $0x458] sm:$0xff]
  %v162 = vld [vmem:[%s1 + $0x460] sm:$0xff]
  %v163 = vld [vmem:[%s1 + $0x468] sm:$0xff]
  %v164 = vld [vmem:[%s1 + $0x470] sm:$0xff]
  %v165 = vld [vmem:[%s1 + $0x478] sm:$0xff]
  %v166 = vld [vmem:[%s1 + $0x480] sm:$0xff]
  %v167 = vld [vmem:[%s1 + $0x488] sm:$0xff]
  %v168 = vld [vmem:[%s1 + $0x490] sm:$0xff]
  %v169 = vld [vmem:[%s1 + $0x498] sm:$0xff]
  %v170 = vld [vmem:[%s1 + $0x4a0] sm:$0xff]
  %v171 = vld [vmem:[%s1 + $0x4a8] sm:$0xff]
  %v172 = vld [vmem:[%s1 + $0x4b0] sm:$0xff]
  %v173 = vld [vmem:[%s1 + $0x4b8] sm:$0xff]
  %v174 = vld [vmem:[%s1 + $0x4c0] sm:$0xff]
  %v175 = vld [vmem:[%s1 + $0x4c8] sm:$0xff]
  %v176 = vld [vmem:[%s1 + $0x4d0] sm:$0xff]
  %v177 = vld [vmem:[%s1 + $0x4d8] sm:$0xff]
  %v178 = vld [vmem:[%s1 + $0x4e0] sm:$0xff]
  %v179 = vld [vmem:[%s1 + $0x4e8] sm:$0xff]
  %v180 = vld [vmem:[%s1 + $0x4f0] sm:$0xff]
  %v181 = vld [vmem:[%s1 + $0x4f8] sm:$0xff]
  %v182 = vld [vmem:[%s1 + $0x500] sm:$0xff]
  %v183 = vld [vmem:[%s1 + $0x508] sm:$0xff]
  %v184 = vld [vmem:[%s1 + $0x510] sm:$0xff]
  %v185 = vld [vmem:[%s1 + $0x518] sm:$0xff]
  %v186 = vld [vmem:[%s1 + $0x520] sm:$0xff]
  %v187 = vld [vmem:[%s1 + $0x528] sm:$0xff]
  %v188 = vld [vmem:[%s1 + $0x530] sm:$0xff]
  %v189 = vld [vmem:[%s1 + $0x538] sm:$0xff]
  %v190 = vld [vmem:[%s1 + $0x540] sm:$0xff]
  %v191 = vld [vmem:[%s1 + $0x548] sm:$0xff]
  %v192 = vld [vmem:[%s1 + $0x550] sm:$0xff]
  %v193 = vld [vmem:[%s1 + $0x558] sm:$0xff]
  %v194 = vld [vmem:[%s1 + $0x560] sm:$0xff]
  %v195 = vld [vmem:[%s1 + $0x568] sm:$0xff]
  %v196 = vld [vmem:[%s1 + $0x570] sm:$0xff]
  %v197 = vld [vmem:[%s1 + $0x578] sm:$0xff]
  %v198 = vld [vmem:[%s1 + $0x580] sm:$0xff]
  %v199 = vld [vmem:[%s1 + $0x588] sm:$0xff]
  %v200 = vld [vmem:[%s1 + $0x590] sm:$0xff]
  %v201 = vld [vmem:[%s1 + $0x598] sm:$0xff]
  %v202 = vld [vmem:[%s1 + $0x5a0] sm:$0xff]
  %v203 = vld [vmem:[%s1 + $0x5a8] sm:$0xff]
  %v204 = vld [vmem:[%s1 + $0x5b0] sm:$0xff]
  %v205 = vld [vmem:[%s1 + $0x5b8] sm:$0xff]
  %v206 = vld [vmem:[%s1 + $0x5c0] sm:$0xff]
  %v207 = vld [vmem:[%s1 + $0x5c8] sm:$0xff]
  %v208 = vld [vmem:[%s1 + $0x5d0] sm:$0xff]
  %v209 = vld [vmem:[%s1 + $0x5d8] sm:$0xff]
  %v210 = vld [vmem:[%s1 + $0x5e0] sm:$0xff]
  %v211 = vld [vmem:[%s1 + $0x5e8] sm:$0xff]
  %v212 = vld [vmem:[%s1 + $0x5f0] sm:$0xff]
  %v213 = vld [vmem:[%s1 + $0x5f8] sm:$0xff]
  %v214 = vld [vmem:[%s1 + $0x600] sm:$0xff]
  %v215 = vld [vmem:[%s1 + $0x608] sm:$0xff]
  %v216 = vld [vmem:[%s1 + $0x610] sm:$0xff]
  %v217 = vld [vmem:[%s1 + $0x618] sm:$0xff]
  %v218 = vld [vmem:[%s1 + $0x620] sm:$0xff]
  %v219 = vld [vmem:[%s1 + $0x628] sm:$0xff]
  %v220 = vld [vmem:[%s1 + $0x630] sm:$0xff]
  %v221 = vld [vmem:[%s1 + $0x638] sm:$0xff]
  %v222 = vld [vmem:[%s1 + $0x640] sm:$0xff]
  %v223 = vld [vmem:[%s1 + $0x648] sm:$0xff]
  %v224 = vld [vmem:[%s1 + $0x650] sm:$0xff]
  %v225 = vld [vmem:[%s1 + $0x658] sm:$0xff]
  %v226 = vld [vmem:[%s1 + $0x660] sm:$0xff]
  %v227 = vld [vmem:[%s1 + $0x668] sm:$0xff]
  %v228 = vld [vmem:[%s1 + $0x670] sm:$0xff]
  %v229 = vld [vmem:[%s1 + $0x678] sm:$0xff]
  %v230 = vld [vmem:[%s1 + $0x680] sm:$0xff]
  %v231 = vld [vmem:[%s1 + $0x688] sm:$0xff]
  %v232 = vld [vmem:[%s1 + $0x690] sm:$0xff]
  %v233 = vld [vmem:[%s1 + $0x698] sm:$0xff]
  %v234 = vld [vmem:[%s1 + $0x6a0] sm:$0xff]
  %v235 = vld [vmem:[%s1 + $0x6a8] sm:$0xff]
  %v236 = vld [vmem:[%s1 + $0x6b0] sm:$0xff]
  %v237 = vld [vmem:[%s1 + $0x6b8] sm:$0xff]
  %v238 = vld [vmem:[%s1 + $0x6c0] sm:$0xff]
  %v239 = vld [vmem:[%s1 + $0x6c8] sm:$0xff]
  %v240 = vld [vmem:[%s1 + $0x6d0] sm:$0xff]
  %v241 = vld [vmem:[%s1 + $0x6d8] sm:$0xff]
  %v242 = vld [vmem:[%s1 + $0x6e0] sm:$0xff]
  %v243 = vld [vmem:[%s1 + $0x6e8] sm:$0xff]
  %v244 = vld [vmem:[%s1 + $0x6f0] sm:$0xff]
  %v245 = vld [vmem:[%s1 + $0x6f8] sm:$0xff]
  %v246 = vld [vmem:[%s1 + $0x700] sm:$0xff]
  %v247 = vld [vmem:[%s1 + $0x708] sm:$0xff]
  %v248 = vld [vmem:[%s1 + $0x710] sm:$0xff]
  %v249 = vld [vmem:[%s1 + $0x718] sm:$0xff]
  %v250 = vld [vmem:[%s1 + $0x720] sm:$0xff]
  %v251 = vld [vmem:[%s1 + $0x728] sm:$0xff]
  %v252 = vld [vmem:[%s1 + $0x730] sm:$0xff]
  %v253 = vld [vmem:[%s1 + $0x738] sm:$0xff]
  %v254 = vld [vmem:[%s1 + $0x740] sm:$0xff]
  %v255 = vld [vmem:[%s1 + $0x748] sm:$0xff]
  %v256 = vld [vmem:[%s1 + $0x750] sm:$0xff]
  %v257 = vld [vmem:[%s1 + $0x758] sm:$0xff]
  %v258 = vld [vmem:[%s1 + $0x760] sm:$0xff]
  %v259 = vld [vmem:[%s1 + $0x768] sm:$0xff]
  %v260 = vld [vmem:[%s1 + $0x770] sm:$0xff]
  %v261 = vld [vmem:[%s1 + $0x778] sm:$0xff]
  %v262 = vld [vmem:[%s1 + $0x780] sm:$0xff]
  %v263 = vld [vmem:[%s1 + $0x788] sm:$0xff]
  %v264 = vld [vmem:[%s1 + $0x790] sm:$0xff]
  %v265 = vld [vmem:[%s1 + $0x798] sm:$0xff]
  %v266 = vld [vmem:[%s1 + $0x7a0] sm:$0xff]
  %v267 = vld [vmem:[%s1 + $0x7a8] sm:$0xff]
  %v268 = vld [vmem:[%s1 + $0x7b0] sm:$0xff]
  %v269 = vld [vmem:[%s1 + $0x7b8] sm:$0xff]
  %v270 = vld [vmem:[%s1 + $0x7c0] sm:$0xff]
  %v271 = vld [vmem:[%s1 + $0x7c8] sm:$0xff]
  %v272 = vld [vmem:[%s1 + $0x7d0] sm:$0xff]
  %v273 = vld [vmem:[%s1 + $0x7d8] sm:$0xff]
  %v274 = vld [vmem:[%s1 + $0x7e0] sm:$0xff]
  %v275 = vld [vmem:[%s1 + $0x7e8] sm:$0xff]
  %v276 = vld [vmem:[%s1 + $0x7f0] sm:$0xff]
  %v277 = vld [vmem:[%s1 + $0x7f8] sm:$0xff]
  %v278 = vld [vmem:[%s2] sm:$0x3]
  %v280 = vlaneseq
  %v281 = vshrl.u32 %v280, 7
  %v282 = vsub.s32 0, %v281
  %v283 = vrot.slane %v278, %v282
  %v284 = vlaneseq
  %v285 = vshrl.u32 %v284, 7
  %v286 = vsub.s32 1, %v285
  %v287 = vrot.slane %v278, %v286
  %290 = vmatprep.subr.mxu0 %v23
  %291 = vmatpush1.xpose.msra.mxu0 %v22
  %292 = vmatprep.subr.mxu0 %v31
  %293 = vmatpush1.xpose.msra.mxu0 %v30
  %294 = vmatprep.subr.mxu0 %v39
  %295 = vmatpush1.xpose.msra.mxu0 %v38
  %296 = vmatprep.subr.mxu0 %v47
  %297 = vmatpush1.xpose.msra.mxu0 %v46
  %298 = vmatprep.subr.mxu0 %v55
  %299 = vmatpush1.xpose.msra.mxu0 %v54
  %300 = vmatprep.subr.mxu0 %v63
  %301 = vmatpush1.xpose.msra.mxu0 %v62
  %302 = vmatprep.subr.mxu0 %v71
  %303 = vmatpush1.xpose.msra.mxu0 %v70
  %304 = vmatprep.subr.mxu0 %v79
  %305 = vmatpush1.xpose.msra.mxu0 %v78
  %306 = vmatprep.subr.mxu0 %v87
  %307 = vmatpush1.xpose.msra.mxu0 %v86
  %308 = vmatprep.subr.mxu0 %v95
  %309 = vmatpush1.xpose.msra.mxu0 %v94
  %310 = vmatprep.subr.mxu0 %v103
  %311 = vmatpush1.xpose.msra.mxu0 %v102
  %312 = vmatprep.subr.mxu0 %v111
  %313 = vmatpush1.xpose.msra.mxu0 %v110
  %314 = vmatprep.subr.mxu0 %v119
  %315 = vmatpush1.xpose.msra.mxu0 %v118
  %316 = vmatprep.subr.mxu0 %v127
  %317 = vmatpush1.xpose.msra.mxu0 %v126
  %318 = vmatprep.subr.mxu0 %v135
  %319 = vmatpush1.xpose.msra.mxu0 %v134
  %320 = vmatprep.subr.mxu0 %v143
  %321 = vmatpush1.xpose.msra.mxu0 %v142
  %322 = vmatprep.subr.mxu0 %v151
  %323 = vmatpush1.xpose.msra.mxu0 %v150
  %324 = vmatprep.subr.mxu0 %v159
  %325 = vmatpush1.xpose.msra.mxu0 %v158
  %326 = vmatprep.subr.mxu0 %v167
  %327 = vmatpush1.xpose.msra.mxu0 %v166
  %328 = vmatprep.subr.mxu0 %v175
  %329 = vmatpush1.xpose.msra.mxu0 %v174
  %330 = vmatprep.subr.mxu0 %v183
  %331 = vmatpush1.xpose.msra.mxu0 %v182
  %332 = vmatprep.subr.mxu0 %v191
  %333 = vmatpush1.xpose.msra.mxu0 %v190
  %334 = vmatprep.subr.mxu0 %v199
  %335 = vmatpush1.xpose.msra.mxu0 %v198
  %336 = vmatprep.subr.mxu0 %v207
  %337 = vmatpush1.xpose.msra.mxu0 %v206
  %338 = vmatprep.subr.mxu0 %v215
  %339 = vmatpush1.xpose.msra.mxu0 %v214
  %340 = vmatprep.subr.mxu0 %v223
  %341 = vmatpush1.xpose.msra.mxu0 %v222
  %342 = vmatprep.subr.mxu0 %v231
  %343 = vmatpush1.xpose.msra.mxu0 %v230
  %344 = vmatprep.subr.mxu0 %v239
  %345 = vmatpush1.xpose.msra.mxu0 %v238
  %346 = vmatprep.subr.mxu0 %v247
  %347 = vmatpush1.xpose.msra.mxu0 %v246
  %348 = vmatprep.subr.mxu0 %v255
  %349 = vmatpush1.xpose.msra.mxu0 %v254
  %350 = vmatprep.subr.mxu0 %v263
  %351 = vmatpush1.xpose.msra.mxu0 %v262
  %352 = vmatprep.subr.mxu0 %v271
  %353 = vmatpush1.xpose.msra.mxu0 %v270
  %354 = vmatprep.mubr.f32.mxu0 %v15
  %355 = vmatmul.mubr.f32.gmra.mrb[0].mxu0 %v14
  %v356 = vpop.f32.mrb[0].mxu0
  %v357 = vadd.f32 %v283, %v356
  %v358 = vpop.f32.mrb[0].mxu0
  %v359 = vadd.f32 %v287, %v358
  %360 = vdwg.mxu0
  %361 = vmatprep.subr.mxu0 %v25
  %362 = vmatpush1.xpose.msra.mxu0 %v24
  %363 = vmatprep.subr.mxu0 %v33
  %364 = vmatpush1.xpose.msra.mxu0 %v32
  %365 = vmatprep.subr.mxu0 %v41
  %366 = vmatpush1.xpose.msra.mxu0 %v40
  %367 = vmatprep.subr.mxu0 %v49
  %368 = vmatpush1.xpose.msra.mxu0 %v48
  %369 = vmatprep.subr.mxu0 %v57
  %370 = vmatpush1.xpose.msra.mxu0 %v56
  %371 = vmatprep.subr.mxu0 %v65
  %372 = vmatpush1.xpose.msra.mxu0 %v64
  %373 = vmatprep.subr.mxu0 %v73
  %374 = vmatpush1.xpose.msra.mxu0 %v72
  %375 = vmatprep.subr.mxu0 %v81
  %376 = vmatpush1.xpose.msra.mxu0 %v80
  %377 = vmatprep.subr.mxu0 %v89
  %378 = vmatpush1.xpose.msra.mxu0 %v88
  %379 = vmatprep.subr.mxu0 %v97
  %380 = vmatpush1.xpose.msra.mxu0 %v96
  %381 = vmatprep.subr.mxu0 %v105
  %382 = vmatpush1.xpose.msra.mxu0 %v104
  %383 = vmatprep.subr.mxu0 %v113
  %384 = vmatpush1.xpose.msra.mxu0 %v112
  %385 = vmatprep.subr.mxu0 %v121
  %386 = vmatpush1.xpose.msra.mxu0 %v120
  %387 = vmatprep.subr.mxu0 %v129
  %388 = vmatpush1.xpose.msra.mxu0 %v128
  %389 = vmatprep.subr.mxu0 %v137
  %390 = vmatpush1.xpose.msra.mxu0 %v136
  %391 = vmatprep.subr.mxu0 %v145
  %392 = vmatpush1.xpose.msra.mxu0 %v144
  %393 = vmatprep.subr.mxu0 %v153
  %394 = vmatpush1.xpose.msra.mxu0 %v152
  %395 = vmatprep.subr.mxu0 %v161
  %396 = vmatpush1.xpose.msra.mxu0 %v160
  %397 = vmatprep.subr.mxu0 %v169
  %398 = vmatpush1.xpose.msra.mxu0 %v168
  %399 = vmatprep.subr.mxu0 %v177
  %400 = vmatpush1.xpose.msra.mxu0 %v176
  %401 = vmatprep.subr.mxu0 %v185
  %402 = vmatpush1.xpose.msra.mxu0 %v184
  %403 = vmatprep.subr.mxu0 %v193
  %404 = vmatpush1.xpose.msra.mxu0 %v192
  %405 = vmatprep.subr.mxu0 %v201
  %406 = vmatpush1.xpose.msra.mxu0 %v200
  %407 = vmatprep.subr.mxu0 %v209
  %408 = vmatpush1.xpose.msra.mxu0 %v208
  %409 = vmatprep.subr.mxu0 %v217
  %410 = vmatpush1.xpose.msra.mxu0 %v216
  %411 = vmatprep.subr.mxu0 %v225
  %412 = vmatpush1.xpose.msra.mxu0 %v224
  %413 = vmatprep.subr.mxu0 %v233
  %414 = vmatpush1.xpose.msra.mxu0 %v232
  %415 = vmatprep.subr.mxu0 %v241
  %416 = vmatpush1.xpose.msra.mxu0 %v240
  %417 = vmatprep.subr.mxu0 %v249
  %418 = vmatpush1.xpose.msra.mxu0 %v248
  %419 = vmatprep.subr.mxu0 %v257
  %420 = vmatpush1.xpose.msra.mxu0 %v256
  %421 = vmatprep.subr.mxu0 %v265
  %422 = vmatpush1.xpose.msra.mxu0 %v264
  %423 = vmatprep.subr.mxu0 %v273
  %424 = vmatpush1.xpose.msra.mxu0 %v272
  %425 = vmatprep.mubr.f32.mxu0 %v17
  %426 = vmatmul.mubr.f32.gmra.mrb[0].mxu0 %v16
  %v427 = vpop.f32.mrb[0].mxu0
  %v428 = vadd.f32 %v357, %v427
  %v429 = vpop.f32.mrb[0].mxu0
  %v430 = vadd.f32 %v359, %v429
  %431 = vdwg.mxu0
  %432 = vmatprep.subr.mxu0 %v27
  %433 = vmatpush1.xpose.msra.mxu0 %v26
  %434 = vmatprep.subr.mxu0 %v35
  %435 = vmatpush1.xpose.msra.mxu0 %v34
  %436 = vmatprep.subr.mxu0 %v43
  %437 = vmatpush1.xpose.msra.mxu0 %v42
  %438 = vmatprep.subr.mxu0 %v51
  %439 = vmatpush1.xpose.msra.mxu0 %v50
  %440 = vmatprep.subr.mxu0 %v59
  %441 = vmatpush1.xpose.msra.mxu0 %v58
  %442 = vmatprep.subr.mxu0 %v67
  %443 = vmatpush1.xpose.msra.mxu0 %v66
  %444 = vmatprep.subr.mxu0 %v75
  %445 = vmatpush1.xpose.msra.mxu0 %v74
  %446 = vmatprep.subr.mxu0 %v83
  %447 = vmatpush1.xpose.msra.mxu0 %v82
  %448 = vmatprep.subr.mxu0 %v91
  %449 = vmatpush1.xpose.msra.mxu0 %v90
  %450 = vmatprep.subr.mxu0 %v99
  %451 = vmatpush1.xpose.msra.mxu0 %v98
  %452 = vmatprep.subr.mxu0 %v107
  %453 = vmatpush1.xpose.msra.mxu0 %v106
  %454 = vmatprep.subr.mxu0 %v115
  %455 = vmatpush1.xpose.msra.mxu0 %v114
  %456 = vmatprep.subr.mxu0 %v123
  %457 = vmatpush1.xpose.msra.mxu0 %v122
  %458 = vmatprep.subr.mxu0 %v131
  %459 = vmatpush1.xpose.msra.mxu0 %v130
  %460 = vmatprep.subr.mxu0 %v139
  %461 = vmatpush1.xpose.msra.mxu0 %v138
  %462 = vmatprep.subr.mxu0 %v147
  %463 = vmatpush1.xpose.msra.mxu0 %v146
  %464 = vmatprep.subr.mxu0 %v155
  %465 = vmatpush1.xpose.msra.mxu0 %v154
  %466 = vmatprep.subr.mxu0 %v163
  %467 = vmatpush1.xpose.msra.mxu0 %v162
  %468 = vmatprep.subr.mxu0 %v171
  %469 = vmatpush1.xpose.msra.mxu0 %v170
  %470 = vmatprep.subr.mxu0 %v179
  %471 = vmatpush1.xpose.msra.mxu0 %v178
  %472 = vmatprep.subr.mxu0 %v187
  %473 = vmatpush1.xpose.msra.mxu0 %v186
  %474 = vmatprep.subr.mxu0 %v195
  %475 = vmatpush1.xpose.msra.mxu0 %v194
  %476 = vmatprep.subr.mxu0 %v203
  %477 = vmatpush1.xpose.msra.mxu0 %v202
  %478 = vmatprep.subr.mxu0 %v211
  %479 = vmatpush1.xpose.msra.mxu0 %v210
  %480 = vmatprep.subr.mxu0 %v219
  %481 = vmatpush1.xpose.msra.mxu0 %v218
  %482 = vmatprep.subr.mxu0 %v227
  %483 = vmatpush1.xpose.msra.mxu0 %v226
  %484 = vmatprep.subr.mxu0 %v235
  %485 = vmatpush1.xpose.msra.mxu0 %v234
  %486 = vmatprep.subr.mxu0 %v243
  %487 = vmatpush1.xpose.msra.mxu0 %v242
  %488 = vmatprep.subr.mxu0 %v251
  %489 = vmatpush1.xpose.msra.mxu0 %v250
  %490 = vmatprep.subr.mxu0 %v259
  %491 = vmatpush1.xpose.msra.mxu0 %v258
  %492 = vmatprep.subr.mxu0 %v267
  %493 = vmatpush1.xpose.msra.mxu0 %v266
  %494 = vmatprep.subr.mxu0 %v275
  %495 = vmatpush1.xpose.msra.mxu0 %v274
  %496 = vmatprep.mubr.f32.mxu0 %v19
  %497 = vmatmul.mubr.f32.gmra.mrb[0].mxu0 %v18
  %v498 = vpop.f32.mrb[0].mxu0
  %v499 = vadd.f32 %v428, %v498
  %v500 = vpop.f32.mrb[0].mxu0
  %v501 = vadd.f32 %v430, %v500
  %502 = vdwg.mxu0
  %503 = vmatprep.subr.mxu0 %v29
  %504 = vmatpush1.xpose.msra.mxu0 %v28
  %505 = vmatprep.subr.mxu0 %v37
  %506 = vmatpush1.xpose.msra.mxu0 %v36
  %507 = vmatprep.subr.mxu0 %v45
  %508 = vmatpush1.xpose.msra.mxu0 %v44
  %509 = vmatprep.subr.mxu0 %v53
  %510 = vmatpush1.xpose.msra.mxu0 %v52
  %511 = vmatprep.subr.mxu0 %v61
  %512 = vmatpush1.xpose.msra.mxu0 %v60
  %513 = vmatprep.subr.mxu0 %v69
  %514 = vmatpush1.xpose.msra.mxu0 %v68
  %515 = vmatprep.subr.mxu0 %v77
  %516 = vmatpush1.xpose.msra.mxu0 %v76
  %517 = vmatprep.subr.mxu0 %v85
  %518 = vmatpush1.xpose.msra.mxu0 %v84
  %519 = vmatprep.subr.mxu0 %v93
  %520 = vmatpush1.xpose.msra.mxu0 %v92
  %521 = vmatprep.subr.mxu0 %v101
  %522 = vmatpush1.xpose.msra.mxu0 %v100
  %523 = vmatprep.subr.mxu0 %v109
  %524 = vmatpush1.xpose.msra.mxu0 %v108
  %525 = vmatprep.subr.mxu0 %v117
  %526 = vmatpush1.xpose.msra.mxu0 %v116
  %527 = vmatprep.subr.mxu0 %v125
  %528 = vmatpush1.xpose.msra.mxu0 %v124
  %529 = vmatprep.subr.mxu0 %v133
  %530 = vmatpush1.xpose.msra.mxu0 %v132
  %531 = vmatprep.subr.mxu0 %v141
  %532 = vmatpush1.xpose.msra.mxu0 %v140
  %533 = vmatprep.subr.mxu0 %v149
  %534 = vmatpush1.xpose.msra.mxu0 %v148
  %535 = vmatprep.subr.mxu0 %v157
  %536 = vmatpush1.xpose.msra.mxu0 %v156
  %537 = vmatprep.subr.mxu0 %v165
  %538 = vmatpush1.xpose.msra.mxu0 %v164
  %539 = vmatprep.subr.mxu0 %v173
  %540 = vmatpush1.xpose.msra.mxu0 %v172
  %541 = vmatprep.subr.mxu0 %v181
  %542 = vmatpush1.xpose.msra.mxu0 %v180
  %543 = vmatprep.subr.mxu0 %v189
  %544 = vmatpush1.xpose.msra.mxu0 %v188
  %545 = vmatprep.subr.mxu0 %v197
  %546 = vmatpush1.xpose.msra.mxu0 %v196
  %547 = vmatprep.subr.mxu0 %v205
  %548 = vmatpush1.xpose.msra.mxu0 %v204
  %549 = vmatprep.subr.mxu0 %v213
  %550 = vmatpush1.xpose.msra.mxu0 %v212
  %551 = vmatprep.subr.mxu0 %v221
  %552 = vmatpush1.xpose.msra.mxu0 %v220
  %553 = vmatprep.subr.mxu0 %v229
  %554 = vmatpush1.xpose.msra.mxu0 %v228
  %555 = vmatprep.subr.mxu0 %v237
  %556 = vmatpush1.xpose.msra.mxu0 %v236
  %557 = vmatprep.subr.mxu0 %v245
  %558 = vmatpush1.xpose.msra.mxu0 %v244
  %559 = vmatprep.subr.mxu0 %v253
  %560 = vmatpush1.xpose.msra.mxu0 %v252
  %561 = vmatprep.subr.mxu0 %v261
  %562 = vmatpush1.xpose.msra.mxu0 %v260
  %563 = vmatprep.subr.mxu0 %v269
  %564 = vmatpush1.xpose.msra.mxu0 %v268
  %565 = vmatprep.subr.mxu0 %v277
  %566 = vmatpush1.xpose.msra.mxu0 %v276
  %567 = vmatprep.mubr.f32.mxu0 %v21
  %568 = vmatmul.mubr.f32.gmra.mrb[0].mxu0 %v20
  %v569 = vpop.f32.mrb[0].mxu0
  %v570 = vadd.f32 %v499, %v569
  %v571 = vpop.f32.mrb[0].mxu0
  %v572 = vadd.f32 %v501, %v571
  %573 = vdwg.mxu0
  %574 = vst [vmem:[%s3] sm:$0xff] %v570
  %575 = vst [vmem:[%s3 + $0x8] sm:$0xff] %v572
  // Predicated region
  $region14: #{simple_feed_forward.4} parent=0 // pred_check
    _
  $region15: #{simple_feed_forward.4} parent=0 // pred_check_branch
    %577 = sbr.rel (0) target = $region17
  $region16: #{simple_feed_forward.4} parent=0 // pred_region
    _
  $region17: #{simple_feed_forward.4} parent=0 // pred_fallthru
    _
  // Predicated region
  $region18: #{simple_feed_forward.4} parent=0 // pred_check
    _
  $region19: #{simple_feed_forward.4} parent=0 // pred_check_branch
    %579 = sbr.rel (0) target = $region21
  $region20: #{simple_feed_forward.4} parent=0 // pred_region
    _
  $region21: #{simple_feed_forward.4} parent=0 // pred_fallthru
    _

// kernel: simple_feed_forward.3
$region0: #{simple_feed_forward.3}
  #allocation0 [shape = 'u32[]', space=smem, size = 0x4, offset = 0x4, fixed_abs, tag = 'smem constant byte address 0x4 - core index']
  #allocation1 [shape = 'u32[144,128]{1,0:T(1,128)}', space=vmem, size = 0x12000, scoped, tag = 'internal scratch']
  #allocation2 [shape = 'f32[8,512]{1,0:T(8,128)}', space=vmem, size = 0x4000, scoped, tag = 'scratch operand']
  %s0 = inlined_call_operand.hbm [shape: f32[8,4096], index: 0, kind: input, shape index: {}]
  %s1 = inlined_call_operand.hbm [shape: f32[1024,4096], index: 1, kind: input, shape index: {}]
  %s2 = inlined_call_operand.hbm [shape: f32[1,1024], index: 2, kind: input, shape index: {}]
  %s3 = inlined_call_operand.vmem [shape: f32[8,1024], index: 3, kind: output, shape index: {}]
  %s4 = sld [smem:[#allocation0]]
  $region65: #{simple_feed_forward.3} parent=0
    _
  %s6 = ssub.s32 1, %s4
  %s7 = scalar_select 0, %s6, %s4
  $region1: #{simple_feed_forward.3} parent=0
    #allocation3 [shape = 'u8[131072]{0}', space=vmem, size = 0x20000, scoped, tag = 'input window, operand 0']
    #allocation4 [shape = 's32[2]{0}', space=sflag, size = 0x8, scoped, tag = 'scoped memory for simple_feed_forward.3']
    #allocation5 [shape = 'u8[8388608]{0}', space=vmem, size = 0x800000, scoped, tag = 'input window, operand 1']
    #allocation6 [shape = 's32[2]{0}', space=sflag, size = 0x8, scoped, tag = 'scoped memory for simple_feed_forward.3']
    #allocation7 [shape = 'u8[4096]{0}', space=vmem, size = 0x1000, scoped, tag = 'input window, operand 2']
    %8 = vsyncpa [#allocation4], 0
    %s9 = scalar_lea.sflag [#allocation4], 1
    %10 = vsyncpa %s9, 0
    %11 = vsyncpa [#allocation6], 0
    %s12 = scalar_lea.sflag [#allocation6], 1
    %13 = vsyncpa %s12, 0
    loop: start=0, step=1, limit=6
    $region2: #{simple_feed_forward.3} parent=1 // loop_pre_header
      _
    $region3: #{simple_feed_forward.3} parent=1 // loop_header
      %s15 = sphi 0, %s19
      %p16 = scmp.ge.s32.totalorder %s15, 6
      %s22 = sphi 0, %s41
      %s23 = sphi 0, %s37
      %s24 = sphi 0, %s33
      %s25 = sphi 0, %s22
      %s26 = sphi 0, %s23
      %s27 = sphi 0, %s24
      %s28 = sphi 0, %s25
      %s29 = sphi 0, %s26
      %s30 = sphi 0, %s27
      %s46 = sphi 0, %s48
      %s49 = sphi 0, %s46
      %s50 = sphi 0, %s49
      %s66 = sphi 0, %s50
      %s74 = sphi 0, %s76
      %s77 = sphi 0, %s74
      %s78 = sphi 0, %s77
      %s94 = sphi 0, %s78
      %s100 = sphi 0, %s102
      %s103 = sphi 0, %s100
      %s104 = sphi 0, %s103
      %s120 = sphi 0, %s104
      %s128 = sphi 0, %s130
      %s131 = sphi 0, %s128
      %s132 = sphi 0, %s131
      %s148 = sphi 0, %s132
    $region4: #{simple_feed_forward.3} parent=1 // loop_header_branch
      %18 = sbr.rel (%p16) target = $region8
    $region5: #{simple_feed_forward.3} parent=1 // loop_body
      %s20 = ssub.s32 %s15, 1
      %s21 = ssub.s32 %s15, 2
      %s31 = sadd.s32 1, %s24
      %p32 = scmp.ge.s32.totalorder %s31, 2
      %s33 = scalar_select %p32, 0, %s31
      %s34 = sadd.s32 1, %s23
      %s35 = scalar_select %p32, %s34, %s23
      %p36 = scmp.ge.s32.totalorder %s35, 2
      %s37 = scalar_select %p36, 0, %s35
      %s38 = sadd.s32 1, %s22
      %s39 = scalar_select %p36, %s38, %s22
      %p40 = scmp.ge.s32.totalorder %s39, 1
      %s41 = scalar_select %p40, 0, %s39
      %s42 = ssub.s32 %s22, %s41
      %s43 = ssub.s32 %s24, %s33
      %s44 = sor.u32 %s42, %s43
      %p45 = scmp.eq.s32.totalorder %s44, 0
      %s47 = sadd.s32 %s46, 1
      %s48 = scalar_select %p45, %s46, %s47
      %p51 = pneg %p45
      %p52 = scmp.eq.s32.totalorder %s15, 3
      %p53 = por %p51, %p52
      %p54 = scmp.ne.s32.totalorder %s46, %s49
      %p55 = scmp.eq.s32.totalorder %s15, 0
      %p56 = por %p54, %p55
      %p57 = scmp.ne.s32.totalorder %s46, %s49
      %p58 = scmp.eq.s32.totalorder %s20, 3
      %p59 = por %p57, %p58
      %p60 = scmp.ne.s32.totalorder %s49, %s50
      %p61 = scmp.eq.s32.totalorder %s20, 0
      %p62 = por %p60, %p61
      %p63 = scmp.ne.s32.totalorder %s49, %s50
      %p64 = scmp.eq.s32.totalorder %s21, 3
      %p65 = por %p63, %p64
      %p67 = scmp.ne.s32.totalorder %s50, %s66
      %p68 = scmp.eq.s32.totalorder %s21, 0
      %p69 = por %p67, %p68
      %s70 = ssub.s32 %s23, %s37
      %s71 = ssub.s32 %s24, %s33
      %s72 = sor.u32 %s70, %s71
      %p73 = scmp.eq.s32.totalorder %s72, 0
      %s75 = sadd.s32 %s74, 1
      %s76 = scalar_select %p73, %s74, %s75
      %p79 = pneg %p73
      %p80 = scmp.eq.s32.totalorder %s15, 3
      %p81 = por %p79, %p80
      %p82 = scmp.ne.s32.totalorder %s74, %s77
      %p83 = scmp.eq.s32.totalorder %s15, 0
      %p84 = por %p82, %p83
      %p85 = scmp.ne.s32.totalorder %s74, %s77
      %p86 = scmp.eq.s32.totalorder %s20, 3
      %p87 = por %p85, %p86
      %p88 = scmp.ne.s32.totalorder %s77, %s78
      %p89 = scmp.eq.s32.totalorder %s20, 0
      %p90 = por %p88, %p89
      %p91 = scmp.ne.s32.totalorder %s77, %s78
      %p92 = scmp.eq.s32.totalorder %s21, 3
      %p93 = por %p91, %p92
      %p95 = scmp.ne.s32.totalorder %s78, %s94
      %p96 = scmp.eq.s32.totalorder %s21, 0
      %p97 = por %p95, %p96
      %s98 = ssub.s32 %s23, %s37
      %p99 = scmp.eq.s32.totalorder %s98, 0
      %s101 = sadd.s32 %s100, 1
      %s102 = scalar_select %p99, %s100, %s101
      %p105 = pneg %p99
      %p106 = scmp.eq.s32.totalorder %s15, 3
      %p107 = por %p105, %p106
      %p108 = scmp.ne.s32.totalorder %s100, %s103
      %p109 = scmp.eq.s32.totalorder %s15, 0
      %p110 = por %p108, %p109
      %p111 = scmp.ne.s32.totalorder %s100, %s103
      %p112 = scmp.eq.s32.totalorder %s20, 3
      %p113 = por %p111, %p112
      %p114 = scmp.ne.s32.totalorder %s103, %s104
      %p115 = scmp.eq.s32.totalorder %s20, 0
      %p116 = por %p114, %p115
      %p117 = scmp.ne.s32.totalorder %s103, %s104
      %p118 = scmp.eq.s32.totalorder %s21, 3
      %p119 = por %p117, %p118
      %p121 = scmp.ne.s32.totalorder %s104, %s120
      %p122 = scmp.eq.s32.totalorder %s21, 0
      %p123 = por %p121, %p122
      %s124 = ssub.s32 %s22, %s41
      %s125 = ssub.s32 %s23, %s37
      %s126 = sor.u32 %s124, %s125
      %p127 = scmp.eq.s32.totalorder %s126, 0
      %s129 = sadd.s32 %s128, 1
      %s130 = scalar_select %p127, %s128, %s129
      %p133 = pneg %p127
      %p134 = scmp.eq.s32.totalorder %s15, 3
      %p135 = por %p133, %p134
      %p136 = scmp.ne.s32.totalorder %s128, %s131
      %p137 = scmp.eq.s32.totalorder %s15, 0
      %p138 = por %p136, %p137
      %p139 = scmp.ne.s32.totalorder %s128, %s131
      %p140 = scmp.eq.s32.totalorder %s20, 3
      %p141 = por %p139, %p140
      %p142 = scmp.ne.s32.totalorder %s131, %s132
      %p143 = scmp.eq.s32.totalorder %s20, 0
      %p144 = por %p142, %p143
      %p145 = scmp.ne.s32.totalorder %s131, %s132
      %p146 = scmp.eq.s32.totalorder %s21, 3
      %p147 = por %p145, %p146
      %p149 = scmp.ne.s32.totalorder %s132, %s148
      %p150 = scmp.eq.s32.totalorder %s21, 0
      %p151 = por %p149, %p150
      %p152 = scmp.le.s32.totalorder 1, %s15
      %p153 = scmp.lt.s32.totalorder %s15, 5
      %p154 = pnand %p152, %p153
      %p155 = pneg %p154
      // Predicated region
      $region9: #{simple_feed_forward.3} parent=5 // pred_check
        _
      $region10: #{simple_feed_forward.3} parent=5 // pred_check_branch
        %157 = sbr.rel (%p154) target = $region12
      $region11: #{simple_feed_forward.3} parent=5 // pred_region
        %s158 = ssub.s32 %s15, 1
      $region12: #{simple_feed_forward.3} parent=5 // pred_fallthru
        _
      %p159 = scmp.lt.s32.totalorder %s15, 4
      // Predicated region
      $region13: #{simple_feed_forward.3} parent=5 // pred_check
        %p160 = pneg %p159
      $region14: #{simple_feed_forward.3} parent=5 // pred_check_branch
        %162 = sbr.rel (%p160) target = $region16
      $region15: #{simple_feed_forward.3} parent=5 // pred_region
        // Predicated region
        $region17: #{simple_feed_forward.3} parent=15 // pred_check
          %p163 = pneg %p56
        $region18: #{simple_feed_forward.3} parent=15 // pred_check_branch
          %165 = sbr.rel (%p163) target = $region20
        $region19: #{simple_feed_forward.3} parent=15 // pred_region
          %s166 = sand.u32 %s46, 1
          %s167 = scalar_lea.sflag [#allocation4], %s166
          %s168 = sand.u32 %s46, 1
          %s169 = smul.addr %s168, 128
          %s170 = scalar_lea.vmem [#allocation3], %s169
          %s171 = smul.u32 16, %s24
          %s173 = ssub.s32 2048, 2048
          %174 = vsyncadd %s167, %s173
          %s175 = smul.addr %s22, 32
          %s176 = sadd.s32 %s171, %s175
          %s177 = smul.addr %s176, 128
          %s178 = scalar_lea.hbm %s0, %s177
          %s180 = sshll.u32 %s170, 4
          %s181 = int_to_ptr.vmem [resolvable:$true] %s180
          %183 = dma.hbm_to_vmem [thread:$0]  %s178, 2048, %s181, %s167
        $region20: #{simple_feed_forward.3} parent=15 // pred_fallthru
          _
        // Predicated region
        $region21: #{simple_feed_forward.3} parent=15 // pred_check
          %p184 = pneg %p84
        $region22: #{simple_feed_forward.3} parent=15 // pred_check_branch
          %186 = sbr.rel (%p184) target = $region24
        $region23: #{simple_feed_forward.3} parent=15 // pred_region
          %s187 = sand.u32 %s15, 1
          %s188 = scalar_lea.sflag [#allocation6], %s187
          %s189 = sand.u32 %s74, 1
          %s190 = smul.addr %s189, 8192
          %s191 = scalar_lea.vmem [#allocation5], %s190
          %s192 = smul.u32 64, %s23
          %s193 = smul.u32 16, %s24
          %s195 = ssub.s32 131072, 131072
          %196 = vsyncadd %s188, %s195
          %s197 = smul.addr %s192, 32
          %s198 = sadd.s32 %s193, %s197
          %s199 = smul.addr %s198, 128
          %s200 = scalar_lea.hbm %s1, %s199
          %s201 = sshll.u32 %s191, 4
          %s202 = int_to_ptr.vmem [resolvable:$true] %s201
          %207 = dma.hbm_to_vmem [thread:$0]  %s200, 131072, %s202, %s188, 4096, 2048, 128
        $region24: #{simple_feed_forward.3} parent=15 // pred_fallthru
          _
        // Predicated region
        $region25: #{simple_feed_forward.3} parent=15 // pred_check
          %p208 = pneg %p110
        $region26: #{simple_feed_forward.3} parent=15 // pred_check_branch
          %210 = sbr.rel (%p208) target = $region28
        $region27: #{simple_feed_forward.3} parent=15 // pred_region
          %s211 = sand.u32 %s15, 1
          %s212 = scalar_lea.sflag [#allocation6], %s211
          %s213 = sand.u32 %s100, 1
          %s214 = smul.addr %s213, 4
          %s215 = scalar_lea.vmem [#allocation7], %s214
          %s216 = smul.u32 4, %s23
          %s218 = ssub.s32 64, 64
          %219 = vsyncadd %s212, %s218
          %s220 = smul.addr %s216, 16
          %s221 = scalar_lea.hbm %s2, %s220
          %s223 = sshll.u32 %s215, 4
          %s224 = int_to_ptr.vmem [resolvable:$true] %s223
          %226 = dma.hbm_to_vmem [thread:$0]  %s221, 64, %s224, %s212
        $region28: #{simple_feed_forward.3} parent=15 // pred_fallthru
          _
      $region16: #{simple_feed_forward.3} parent=5 // pred_fallthru
        _
      %p227 = scmp.le.s32.totalorder 1, %s15
      %p228 = scmp.lt.s32.totalorder %s15, 5
      %p229 = pnand %p227, %p228
      %p230 = pneg %p229
      // Predicated region
      $region29: #{simple_feed_forward.3} parent=5 // pred_check
        _
      $region30: #{simple_feed_forward.3} parent=5 // pred_check_branch
        %232 = sbr.rel (%p229) target = $region32
      $region31: #{simple_feed_forward.3} parent=5 // pred_region
        %s233 = ssub.s32 %s15, 1
        %s234 = sand.u32 %s49, 1
        %s235 = scalar_lea.sflag [#allocation4], %s234
        %s236 = sand.u32 %s49, 1
        %s237 = smul.addr %s236, 128
        %s238 = scalar_lea.vmem [#allocation3], %s237
        // Predicated region
        $region33: #{simple_feed_forward.3} parent=31 // pred_check
          %p239 = pneg %p62
        $region34: #{simple_feed_forward.3} parent=31 // pred_check_branch
          %241 = sbr.rel (%p239) target = $region36
        $region35: #{simple_feed_forward.3} parent=31 // pred_region
          %242 = dma.done %s235, 2048
        $region36: #{simple_feed_forward.3} parent=31 // pred_fallthru
          _
        %s243 = sand.u32 %s20, 1
        %s244 = scalar_lea.sflag [#allocation6], %s243
        %s245 = sand.u32 %s77, 1
        %s246 = smul.addr %s245, 8192
        %s247 = scalar_lea.vmem [#allocation5], %s246
        // Predicated region
        $region37: #{simple_feed_forward.3} parent=31 // pred_check
          %p248 = pneg %p90
        $region38: #{simple_feed_forward.3} parent=31 // pred_check_branch
          %250 = sbr.rel (%p248) target = $region40
        $region39: #{simple_feed_forward.3} parent=31 // pred_region
          %251 = dma.done %s244, 131072
        $region40: #{simple_feed_forward.3} parent=31 // pred_fallthru
          _
        %s252 = sand.u32 %s20, 1
        %s253 = scalar_lea.sflag [#allocation6], %s252
        %s254 = sand.u32 %s103, 1
        %s255 = smul.addr %s254, 4
        %s256 = scalar_lea.vmem [#allocation7], %s255
        // Predicated region
        $region41: #{simple_feed_forward.3} parent=31 // pred_check
          %p257 = pneg %p116
        $region42: #{simple_feed_forward.3} parent=31 // pred_check_branch
          %259 = sbr.rel (%p257) target = $region44
        $region43: #{simple_feed_forward.3} parent=31 // pred_region
          %260 = dma.done %s253, 64
        $region44: #{simple_feed_forward.3} parent=31 // pred_fallthru
          _
        %s261 = sand.u32 %s49, 1
        %s262 = scalar_lea.sflag [#allocation4], %s261
        %s263 = sand.u32 %s49, 1
        %s264 = smul.addr %s263, 128
        %s265 = scalar_lea.vmem [#allocation3], %s264
        %p266 = pneg %p62
        %p267 = pneg %p59
        %s268 = sand.u32 %s20, 1
        %s269 = scalar_lea.sflag [#allocation6], %s268
        %s270 = sand.u32 %s77, 1
        %s271 = smul.addr %s270, 8192
        %s272 = scalar_lea.vmem [#allocation5], %s271
        %p273 = pneg %p90
        %p274 = pneg %p87
        %s275 = sand.u32 %s20, 1
        %s276 = scalar_lea.sflag [#allocation6], %s275
        %s277 = sand.u32 %s103, 1
        %s278 = smul.addr %s277, 4
        %s279 = scalar_lea.vmem [#allocation7], %s278
        %p280 = pneg %p116
        %p281 = pneg %p113
        %p282 = pneg %p144
        %p283 = pneg %p141
        %s284 = smul.u32 4, %s26
        %p285 = scmp.lt.s32.totalorder %s25, 0
        %s286 = scalar_select %p285, %s25, 0
        %p287 = scmp.lt.s32.totalorder %s284, 7
        %s288 = scalar_select %p287, %s284, 7
        %s289 = smul.addr %s286, 8
        %s290 = sadd.s32 %s288, %s289
        %s291 = smul.addr %s290, 8
        %s292 = scalar_lea.vmem %s3, %s291
        %s293 = smul.u32 16, %s27
        %s294 = smul.u32 64, %s26
        %s295 = smul.u32 16, %s27
        %s296 = smul.u32 4, %s26
        %s297 = smul.u32 4, %s26
        %p298 = scmp.lt.s32.totalorder %s25, 0
        %s299 = scalar_select %p298, %s25, 0
        %p300 = scmp.lt.s32.totalorder %s297, 7
        %s301 = scalar_select %p300, %s297, 7
        %s302 = smul.addr %s299, 8
        %s303 = sadd.s32 %s301, %s302
        %s304 = smul.addr %s303, 8
        %s305 = scalar_lea.vmem %s3, %s304
        %s306 = smul.u32 4, %s26
        %p307 = scmp.eq.s32.totalorder %s27, 0
        // Predicated region
        $region45: #{simple_feed_forward.3} parent=31 // pred_check
          %p308 = pneg %p307
        $region46: #{simple_feed_forward.3} parent=31 // pred_check_branch
          %310 = sbr.rel (%p308) target = $region48
        $region47: #{simple_feed_forward.3} parent=31 // pred_region
          %311 = vst [vmem:[#allocation2] sm:$0xff] 0.0
          %312 = vst [vmem:[#allocation2 + $0x8] sm:$0xff] 0.0
          %313 = vst [vmem:[#allocation2 + $0x10] sm:$0xff] 0.0
          %314 = vst [vmem:[#allocation2 + $0x18] sm:$0xff] 0.0
        $region48: #{simple_feed_forward.3} parent=31 // pred_fallthru
          _
        %v315 = vld [vmem:[#allocation2] sm:$0xff]
        %v316 = vld [vmem:[#allocation2 + $0x8] sm:$0xff]
        %v317 = vld [vmem:[#allocation2 + $0x10] sm:$0xff]
        %v318 = vld [vmem:[#allocation2 + $0x18] sm:$0xff]
        %v319 = vld [vmem:[%s238] sm:$0xff]
        %v320 = vld [vmem:[%s238 + $0x8] sm:$0xff]
        %v321 = vld [vmem:[%s238 + $0x10] sm:$0xff]
        %v322 = vld [vmem:[%s238 + $0x18] sm:$0xff]
        %v323 = vld [vmem:[%s238 + $0x20] sm:$0xff]
        %v324 = vld [vmem:[%s238 + $0x28] sm:$0xff]
        %v325 = vld [vmem:[%s238 + $0x30] sm:$0xff]
        %v326 = vld [vmem:[%s238 + $0x38] sm:$0xff]
        %v327 = vld [vmem:[%s238 + $0x40] sm:$0xff]
        %v328 = vld [vmem:[%s238 + $0x48] sm:$0xff]
        %v329 = vld [vmem:[%s238 + $0x50] sm:$0xff]
        %v330 = vld [vmem:[%s238 + $0x58] sm:$0xff]
        %v331 = vld [vmem:[%s238 + $0x60] sm:$0xff]
        %v332 = vld [vmem:[%s238 + $0x68] sm:$0xff]
        %v333 = vld [vmem:[%s238 + $0x70] sm:$0xff]
        %v334 = vld [vmem:[%s238 + $0x78] sm:$0xff]
        %v335 = vld [vmem:[%s247] sm:$0xff]
        %v336 = vld [vmem:[%s247 + $0x8] sm:$0xff]
        %v337 = vld [vmem:[%s247 + $0x10] sm:$0xff]
        %v338 = vld [vmem:[%s247 + $0x18] sm:$0xff]
        %v339 = vld [vmem:[%s247 + $0x20] sm:$0xff]
        %v340 = vld [vmem:[%s247 + $0x28] sm:$0xff]
        %v341 = vld [vmem:[%s247 + $0x30] sm:$0xff]
        %v342 = vld [vmem:[%s247 + $0x38] sm:$0xff]
        %v343 = vld [vmem:[%s247 + $0x40] sm:$0xff]
        %v344 = vld [vmem:[%s247 + $0x48] sm:$0xff]
        %v345 = vld [vmem:[%s247 + $0x50] sm:$0xff]
        %v346 = vld [vmem:[%s247 + $0x58] sm:$0xff]
        %v347 = vld [vmem:[%s247 + $0x60] sm:$0xff]
        %v348 = vld [vmem:[%s247 + $0x68] sm:$0xff]
        %v349 = vld [vmem:[%s247 + $0x70] sm:$0xff]
        %v350 = vld [vmem:[%s247 + $0x78] sm:$0xff]
        %v351 = vld [vmem:[%s247 + $0x80] sm:$0xff]
        %v352 = vld [vmem:[%s247 + $0x88] sm:$0xff]
        %v353 = vld [vmem:[%s247 + $0x90] sm:$0xff]
        %v354 = vld [vmem:[%s247 + $0x98] sm:$0xff]
        %v355 = vld [vmem:[%s247 + $0xa0] sm:$0xff]
        %v356 = vld [vmem:[%s247 + $0xa8] sm:$0xff]
        %v357 = vld [vmem:[%s247 + $0xb0] sm:$0xff]
        %v358 = vld [vmem:[%s247 + $0xb8] sm:$0xff]
        %v359 = vld [vmem:[%s247 + $0xc0] sm:$0xff]
        %v360 = vld [vmem:[%s247 + $0xc8] sm:$0xff]
        %v361 = vld [vmem:[%s247 + $0xd0] sm:$0xff]
        %v362 = vld [vmem:[%s247 + $0xd8] sm:$0xff]
        %v363 = vld [vmem:[%s247 + $0xe0] sm:$0xff]
        %v364 = vld [vmem:[%s247 + $0xe8] sm:$0xff]
        %v365 = vld [vmem:[%s247 + $0xf0] sm:$0xff]
        %v366 = vld [vmem:[%s247 + $0xf8] sm:$0xff]
        %v367 = vld [vmem:[%s247 + $0x100] sm:$0xff]
        %v368 = vld [vmem:[%s247 + $0x108] sm:$0xff]
        %v369 = vld [vmem:[%s247 + $0x110] sm:$0xff]
        %v370 = vld [vmem:[%s247 + $0x118] sm:$0xff]
        %v371 = vld [vmem:[%s247 + $0x120] sm:$0xff]
        %v372 = vld [vmem:[%s247 + $0x128] sm:$0xff]
        %v373 = vld [vmem:[%s247 + $0x130] sm:$0xff]
        %v374 = vld [vmem:[%s247 + $0x138] sm:$0xff]
        %v375 = vld [vmem:[%s247 + $0x140] sm:$0xff]
        %v376 = vld [vmem:[%s247 + $0x148] sm:$0xff]
        %v377 = vld [vmem:[%s247 + $0x150] sm:$0xff]
        %v378 = vld [vmem:[%s247 + $0x158] sm:$0xff]
        %v379 = vld [vmem:[%s247 + $0x160] sm:$0xff]
        %v380 = vld [vmem:[%s247 + $0x168] sm:$0xff]
        %v381 = vld [vmem:[%s247 + $0x170] sm:$0xff]
        %v382 = vld [vmem:[%s247 + $0x178] sm:$0xff]
        %v383 = vld [vmem:[%s247 + $0x180] sm:$0xff]
        %v384 = vld [vmem:[%s247 + $0x188] sm:$0xff]
        %v385 = vld [vmem:[%s247 + $0x190] sm:$0xff]
        %v386 = vld [vmem:[%s247 + $0x198] sm:$0xff]
        %v387 = vld [vmem:[%s247 + $0x1a0] sm:$0xff]
        %v388 = vld [vmem:[%s247 + $0x1a8] sm:$0xff]
        %v389 = vld [vmem:[%s247 + $0x1b0] sm:$0xff]
        %v390 = vld [vmem:[%s247 + $0x1b8] sm:$0xff]
        %v391 = vld [vmem:[%s247 + $0x1c0] sm:$0xff]
        %v392 = vld [vmem:[%s247 + $0x1c8] sm:$0xff]
        %v393 = vld [vmem:[%s247 + $0x1d0] sm:$0xff]
        %v394 = vld [vmem:[%s247 + $0x1d8] sm:$0xff]
        %v395 = vld [vmem:[%s247 + $0x1e0] sm:$0xff]
        %v396 = vld [vmem:[%s247 + $0x1e8] sm:$0xff]
        %v397 = vld [vmem:[%s247 + $0x1f0] sm:$0xff]
        %v398 = vld [vmem:[%s247 + $0x1f8] sm:$0xff]
        %v399 = vld [vmem:[%s247 + $0x200] sm:$0xff]
        %v400 = vld [vmem:[%s247 + $0x208] sm:$0xff]
        %v401 = vld [vmem:[%s247 + $0x210] sm:$0xff]
        %v402 = vld [vmem:[%s247 + $0x218] sm:$0xff]
        %v403 = vld [vmem:[%s247 + $0x220] sm:$0xff]
        %v404 = vld [vmem:[%s247 + $0x228] sm:$0xff]
        %v405 = vld [vmem:[%s247 + $0x230] sm:$0xff]
        %v406 = vld [vmem:[%s247 + $0x238] sm:$0xff]
        %v407 = vld [vmem:[%s247 + $0x240] sm:$0xff]
        %v408 = vld [vmem:[%s247 + $0x248] sm:$0xff]
        %v409 = vld [vmem:[%s247 + $0x250] sm:$0xff]
        %v410 = vld [vmem:[%s247 + $0x258] sm:$0xff]
        %v411 = vld [vmem:[%s247 + $0x260] sm:$0xff]
        %v412 = vld [vmem:[%s247 + $0x268] sm:$0xff]
        %v413 = vld [vmem:[%s247 + $0x270] sm:$0xff]
        %v414 = vld [vmem:[%s247 + $0x278] sm:$0xff]
        %v415 = vld [vmem:[%s247 + $0x280] sm:$0xff]
        %v416 = vld [vmem:[%s247 + $0x288] sm:$0xff]
        %v417 = vld [vmem:[%s247 + $0x290] sm:$0xff]
        %v418 = vld [vmem:[%s247 + $0x298] sm:$0xff]
        %v419 = vld [vmem:[%s247 + $0x2a0] sm:$0xff]
        %v420 = vld [vmem:[%s247 + $0x2a8] sm:$0xff]
        %v421 = vld [vmem:[%s247 + $0x2b0] sm:$0xff]
        %v422 = vld [vmem:[%s247 + $0x2b8] sm:$0xff]
        %v423 = vld [vmem:[%s247 + $0x2c0] sm:$0xff]
        %v424 = vld [vmem:[%s247 + $0x2c8] sm:$0xff]
        %v425 = vld [vmem:[%s247 + $0x2d0] sm:$0xff]
        %v426 = vld [vmem:[%s247 + $0x2d8] sm:$0xff]
        %v427 = vld [vmem:[%s247 + $0x2e0] sm:$0xff]
        %v428 = vld [vmem:[%s247 + $0x2e8] sm:$0xff]
        %v429 = vld [vmem:[%s247 + $0x2f0] sm:$0xff]
        %v430 = vld [vmem:[%s247 + $0x2f8] sm:$0xff]
        %v431 = vld [vmem:[%s247 + $0x300] sm:$0xff]
        %v432 = vld [vmem:[%s247 + $0x308] sm:$0xff]
        %v433 = vld [vmem:[%s247 + $0x310] sm:$0xff]
        %v434 = vld [vmem:[%s247 + $0x318] sm:$0xff]
        %v435 = vld [vmem:[%s247 + $0x320] sm:$0xff]
        %v436 = vld [vmem:[%s247 + $0x328] sm:$0xff]
        %v437 = vld [vmem:[%s247 + $0x330] sm:$0xff]
        %v438 = vld [vmem:[%s247 + $0x338] sm:$0xff]
        %v439 = vld [vmem:[%s247 + $0x340] sm:$0xff]
        %v440 = vld [vmem:[%s247 + $0x348] sm:$0xff]
        %v441 = vld [vmem:[%s247 + $0x350] sm:$0xff]
        %v442 = vld [vmem:[%s247 + $0x358] sm:$0xff]
        %v443 = vld [vmem:[%s247 + $0x360] sm:$0xff]
        %v444 = vld [vmem:[%s247 + $0x368] sm:$0xff]
        %v445 = vld [vmem:[%s247 + $0x370] sm:$0xff]
        %v446 = vld [vmem:[%s247 + $0x378] sm:$0xff]
        %v447 = vld [vmem:[%s247 + $0x380] sm:$0xff]
        %v448 = vld [vmem:[%s247 + $0x388] sm:$0xff]
        %v449 = vld [vmem:[%s247 + $0x390] sm:$0xff]
        %v450 = vld [vmem:[%s247 + $0x398] sm:$0xff]
        %v451 = vld [vmem:[%s247 + $0x3a0] sm:$0xff]
        %v452 = vld [vmem:[%s247 + $0x3a8] sm:$0xff]
        %v453 = vld [vmem:[%s247 + $0x3b0] sm:$0xff]
        %v454 = vld [vmem:[%s247 + $0x3b8] sm:$0xff]
        %v455 = vld [vmem:[%s247 + $0x3c0] sm:$0xff]
        %v456 = vld [vmem:[%s247 + $0x3c8] sm:$0xff]
        %v457 = vld [vmem:[%s247 + $0x3d0] sm:$0xff]
        %v458 = vld [vmem:[%s247 + $0x3d8] sm:$0xff]
        %v459 = vld [vmem:[%s247 + $0x3e0] sm:$0xff]
        %v460 = vld [vmem:[%s247 + $0x3e8] sm:$0xff]
        %v461 = vld [vmem:[%s247 + $0x3f0] sm:$0xff]
        %v462 = vld [vmem:[%s247 + $0x3f8] sm:$0xff]
        %v463 = vld [vmem:[%s247 + $0x400] sm:$0xff]
        %v464 = vld [vmem:[%s247 + $0x408] sm:$0xff]
        %v465 = vld [vmem:[%s247 + $0x410] sm:$0xff]
        %v466 = vld [vmem:[%s247 + $0x418] sm:$0xff]
        %v467 = vld [vmem:[%s247 + $0x420] sm:$0xff]
        %v468 = vld [vmem:[%s247 + $0x428] sm:$0xff]
        %v469 = vld [vmem:[%s247 + $0x430] sm:$0xff]
        %v470 = vld [vmem:[%s247 + $0x438] sm:$0xff]
        %v471 = vld [vmem:[%s247 + $0x440] sm:$0xff]
        %v472 = vld [vmem:[%s247 + $0x448] sm:$0xff]
        %v473 = vld [vmem:[%s247 + $0x450] sm:$0xff]
        %v474 = vld [vmem:[%s247 + $0x458] sm:$0xff]
        %v475 = vld [vmem:[%s247 + $0x460] sm:$0xff]
        %v476 = vld [vmem:[%s247 + $0x468] sm:$0xff]
        %v477 = vld [vmem:[%s247 + $0x470] sm:$0xff]
        %v478 = vld [vmem:[%s247 + $0x478] sm:$0xff]
        %v479 = vld [vmem:[%s247 + $0x480] sm:$0xff]
        %v480 = vld [vmem:[%s247 + $0x488] sm:$0xff]
        %v481 = vld [vmem:[%s247 + $0x490] sm:$0xff]
        %v482 = vld [vmem:[%s247 + $0x498] sm:$0xff]
        %v483 = vld [vmem:[%s247 + $0x4a0] sm:$0xff]
        %v484 = vld [vmem:[%s247 + $0x4a8] sm:$0xff]
        %v485 = vld [vmem:[%s247 + $0x4b0] sm:$0xff]
        %v486 = vld [vmem:[%s247 + $0x4b8] sm:$0xff]
        %v487 = vld [vmem:[%s247 + $0x4c0] sm:$0xff]
        %v488 = vld [vmem:[%s247 + $0x4c8] sm:$0xff]
        %v489 = vld [vmem:[%s247 + $0x4d0] sm:$0xff]
        %v490 = vld [vmem:[%s247 + $0x4d8] sm:$0xff]
        %v491 = vld [vmem:[%s247 + $0x4e0] sm:$0xff]
        %v492 = vld [vmem:[%s247 + $0x4e8] sm:$0xff]
        %v493 = vld [vmem:[%s247 + $0x4f0] sm:$0xff]
        %v494 = vld [vmem:[%s247 + $0x4f8] sm:$0xff]
        %v495 = vld [vmem:[%s247 + $0x500] sm:$0xff]
        %v496 = vld [vmem:[%s247 + $0x508] sm:$0xff]
        %v497 = vld [vmem:[%s247 + $0x510] sm:$0xff]
        %v498 = vld [vmem:[%s247 + $0x518] sm:$0xff]
        %v499 = vld [vmem:[%s247 + $0x520] sm:$0xff]
        %v500 = vld [vmem:[%s247 + $0x528] sm:$0xff]
        %v501 = vld [vmem:[%s247 + $0x530] sm:$0xff]
        %v502 = vld [vmem:[%s247 + $0x538] sm:$0xff]
        %v503 = vld [vmem:[%s247 + $0x540] sm:$0xff]
        %v504 = vld [vmem:[%s247 + $0x548] sm:$0xff]
        %v505 = vld [vmem:[%s247 + $0x550] sm:$0xff]
        %v506 = vld [vmem:[%s247 + $0x558] sm:$0xff]
        %v507 = vld [vmem:[%s247 + $0x560] sm:$0xff]
        %v508 = vld [vmem:[%s247 + $0x568] sm:$0xff]
        %v509 = vld [vmem:[%s247 + $0x570] sm:$0xff]
        %v510 = vld [vmem:[%s247 + $0x578] sm:$0xff]
        %v511 = vld [vmem:[%s247 + $0x580] sm:$0xff]
        %v512 = vld [vmem:[%s247 + $0x588] sm:$0xff]
        %v513 = vld [vmem:[%s247 + $0x590] sm:$0xff]
        %v514 = vld [vmem:[%s247 + $0x598] sm:$0xff]
        %v515 = vld [vmem:[%s247 + $0x5a0] sm:$0xff]
        %v516 = vld [vmem:[%s247 + $0x5a8] sm:$0xff]
        %v517 = vld [vmem:[%s247 + $0x5b0] sm:$0xff]
        %v518 = vld [vmem:[%s247 + $0x5b8] sm:$0xff]
        %v519 = vld [vmem:[%s247 + $0x5c0] sm:$0xff]
        %v520 = vld [vmem:[%s247 + $0x5c8] sm:$0xff]
        %v521 = vld [vmem:[%s247 + $0x5d0] sm:$0xff]
        %v522 = vld [vmem:[%s247 + $0x5d8] sm:$0xff]
        %v523 = vld [vmem:[%s247 + $0x5e0] sm:$0xff]
        %v524 = vld [vmem:[%s247 + $0x5e8] sm:$0xff]
        %v525 = vld [vmem:[%s247 + $0x5f0] sm:$0xff]
        %v526 = vld [vmem:[%s247 + $0x5f8] sm:$0xff]
        %v527 = vld [vmem:[%s247 + $0x600] sm:$0xff]
        %v528 = vld [vmem:[%s247 + $0x608] sm:$0xff]
        %v529 = vld [vmem:[%s247 + $0x610] sm:$0xff]
        %v530 = vld [vmem:[%s247 + $0x618] sm:$0xff]
        %v531 = vld [vmem:[%s247 + $0x620] sm:$0xff]
        %v532 = vld [vmem:[%s247 + $0x628] sm:$0xff]
        %v533 = vld [vmem:[%s247 + $0x630] sm:$0xff]
        %v534 = vld [vmem:[%s247 + $0x638] sm:$0xff]
        %v535 = vld [vmem:[%s247 + $0x640] sm:$0xff]
        %v536 = vld [vmem:[%s247 + $0x648] sm:$0xff]
        %v537 = vld [vmem:[%s247 + $0x650] sm:$0xff]
        %v538 = vld [vmem:[%s247 + $0x658] sm:$0xff]
        %v539 = vld [vmem:[%s247 + $0x660] sm:$0xff]
        %v540 = vld [vmem:[%s247 + $0x668] sm:$0xff]
        %v541 = vld [vmem:[%s247 + $0x670] sm:$0xff]
        %v542 = vld [vmem:[%s247 + $0x678] sm:$0xff]
        %v543 = vld [vmem:[%s247 + $0x680] sm:$0xff]
        %v544 = vld [vmem:[%s247 + $0x688] sm:$0xff]
        %v545 = vld [vmem:[%s247 + $0x690] sm:$0xff]
        %v546 = vld [vmem:[%s247 + $0x698] sm:$0xff]
        %v547 = vld [vmem:[%s247 + $0x6a0] sm:$0xff]
        %v548 = vld [vmem:[%s247 + $0x6a8] sm:$0xff]
        %v549 = vld [vmem:[%s247 + $0x6b0] sm:$0xff]
        %v550 = vld [vmem:[%s247 + $0x6b8] sm:$0xff]
        %v551 = vld [vmem:[%s247 + $0x6c0] sm:$0xff]
        %v552 = vld [vmem:[%s247 + $0x6c8] sm:$0xff]
        %v553 = vld [vmem:[%s247 + $0x6d0] sm:$0xff]
        %v554 = vld [vmem:[%s247 + $0x6d8] sm:$0xff]
        %v555 = vld [vmem:[%s247 + $0x6e0] sm:$0xff]
        %v556 = vld [vmem:[%s247 + $0x6e8] sm:$0xff]
        %v557 = vld [vmem:[%s247 + $0x6f0] sm:$0xff]
        %v558 = vld [vmem:[%s247 + $0x6f8] sm:$0xff]
        %v559 = vld [vmem:[%s247 + $0x700] sm:$0xff]
        %v560 = vld [vmem:[%s247 + $0x708] sm:$0xff]
        %v561 = vld [vmem:[%s247 + $0x710] sm:$0xff]
        %v562 = vld [vmem:[%s247 + $0x718] sm:$0xff]
        %v563 = vld [vmem:[%s247 + $0x720] sm:$0xff]
        %v564 = vld [vmem:[%s247 + $0x728] sm:$0xff]
        %v565 = vld [vmem:[%s247 + $0x730] sm:$0xff]
        %v566 = vld [vmem:[%s247 + $0x738] sm:$0xff]
        %v567 = vld [vmem:[%s247 + $0x740] sm:$0xff]
        %v568 = vld [vmem:[%s247 + $0x748] sm:$0xff]
        %v569 = vld [vmem:[%s247 + $0x750] sm:$0xff]
        %v570 = vld [vmem:[%s247 + $0x758] sm:$0xff]
        %v571 = vld [vmem:[%s247 + $0x760] sm:$0xff]
        %v572 = vld [vmem:[%s247 + $0x768] sm:$0xff]
        %v573 = vld [vmem:[%s247 + $0x770] sm:$0xff]
        %v574 = vld [vmem:[%s247 + $0x778] sm:$0xff]
        %v575 = vld [vmem:[%s247 + $0x780] sm:$0xff]
        %v576 = vld [vmem:[%s247 + $0x788] sm:$0xff]
        %v577 = vld [vmem:[%s247 + $0x790] sm:$0xff]
        %v578 = vld [vmem:[%s247 + $0x798] sm:$0xff]
        %v579 = vld [vmem:[%s247 + $0x7a0] sm:$0xff]
        %v580 = vld [vmem:[%s247 + $0x7a8] sm:$0xff]
        %v581 = vld [vmem:[%s247 + $0x7b0] sm:$0xff]
        %v582 = vld [vmem:[%s247 + $0x7b8] sm:$0xff]
        %v583 = vld [vmem:[%s247 + $0x7c0] sm:$0xff]
        %v584 = vld [vmem:[%s247 + $0x7c8] sm:$0xff]
        %v585 = vld [vmem:[%s247 + $0x7d0] sm:$0xff]
        %v586 = vld [vmem:[%s247 + $0x7d8] sm:$0xff]
        %v587 = vld [vmem:[%s247 + $0x7e0] sm:$0xff]
        %v588 = vld [vmem:[%s247 + $0x7e8] sm:$0xff]
        %v589 = vld [vmem:[%s247 + $0x7f0] sm:$0xff]
        %v590 = vld [vmem:[%s247 + $0x7f8] sm:$0xff]
        %v591 = vld [vmem:[%s247 + $0x800] sm:$0xff]
        %v592 = vld [vmem:[%s247 + $0x808] sm:$0xff]
        %v593 = vld [vmem:[%s247 + $0x810] sm:$0xff]
        %v594 = vld [vmem:[%s247 + $0x818] sm:$0xff]
        %v595 = vld [vmem:[%s247 + $0x820] sm:$0xff]
        %v596 = vld [vmem:[%s247 + $0x828] sm:$0xff]
        %v597 = vld [vmem:[%s247 + $0x830] sm:$0xff]
        %v598 = vld [vmem:[%s247 + $0x838] sm:$0xff]
        %v599 = vld [vmem:[%s247 + $0x840] sm:$0xff]
        %v600 = vld [vmem:[%s247 + $0x848] sm:$0xff]
        %v601 = vld [vmem:[%s247 + $0x850] sm:$0xff]
        %v602 = vld [vmem:[%s247 + $0x858] sm:$0xff]
        %v603 = vld [vmem:[%s247 + $0x860] sm:$0xff]
        %v604 = vld [vmem:[%s247 + $0x868] sm:$0xff]
        %v605 = vld [vmem:[%s247 + $0x870] sm:$0xff]
        %v606 = vld [vmem:[%s247 + $0x878] sm:$0xff]
        %v607 = vld [vmem:[%s247 + $0x880] sm:$0xff]
        %v608 = vld [vmem:[%s247 + $0x888] sm:$0xff]
        %v609 = vld [vmem:[%s247 + $0x890] sm:$0xff]
        %v610 = vld [vmem:[%s247 + $0x898] sm:$0xff]
        %v611 = vld [vmem:[%s247 + $0x8a0] sm:$0xff]
        %v612 = vld [vmem:[%s247 + $0x8a8] sm:$0xff]
        %v613 = vld [vmem:[%s247 + $0x8b0] sm:$0xff]
        %v614 = vld [vmem:[%s247 + $0x8b8] sm:$0xff]
        %v615 = vld [vmem:[%s247 + $0x8c0] sm:$0xff]
        %v616 = vld [vmem:[%s247 + $0x8c8] sm:$0xff]
        %v617 = vld [vmem:[%s247 + $0x8d0] sm:$0xff]
        %v618 = vld [vmem:[%s247 + $0x8d8] sm:$0xff]
        %v619 = vld [vmem:[%s247 + $0x8e0] sm:$0xff]
        %v620 = vld [vmem:[%s247 + $0x8e8] sm:$0xff]
        %v621 = vld [vmem:[%s247 + $0x8f0] sm:$0xff]
        %v622 = vld [vmem:[%s247 + $0x8f8] sm:$0xff]
        %v623 = vld [vmem:[%s247 + $0x900] sm:$0xff]
        %v624 = vld [vmem:[%s247 + $0x908] sm:$0xff]
        %v625 = vld [vmem:[%s247 + $0x910] sm:$0xff]
        %v626 = vld [vmem:[%s247 + $0x918] sm:$0xff]
        %v627 = vld [vmem:[%s247 + $0x920] sm:$0xff]
        %v628 = vld [vmem:[%s247 + $0x928] sm:$0xff]
        %v629 = vld [vmem:[%s247 + $0x930] sm:$0xff]
        %v630 = vld [vmem:[%s247 + $0x938] sm:$0xff]
        %v631 = vld [vmem:[%s247 + $0x940] sm:$0xff]
        %v632 = vld [vmem:[%s247 + $0x948] sm:$0xff]
        %v633 = vld [vmem:[%s247 + $0x950] sm:$0xff]
        %v634 = vld [vmem:[%s247 + $0x958] sm:$0xff]
        %v635 = vld [vmem:[%s247 + $0x960] sm:$0xff]
        %v636 = vld [vmem:[%s247 + $0x968] sm:$0xff]
        %v637 = vld [vmem:[%s247 + $0x970] sm:$0xff]
        %v638 = vld [vmem:[%s247 + $0x978] sm:$0xff]
        %v639 = vld [vmem:[%s247 + $0x980] sm:$0xff]
        %v640 = vld [vmem:[%s247 + $0x988] sm:$0xff]
        %v641 = vld [vmem:[%s247 + $0x990] sm:$0xff]
        %v642 = vld [vmem:[%s247 + $0x998] sm:$0xff]
        %v643 = vld [vmem:[%s247 + $0x9a0] sm:$0xff]
        %v644 = vld [vmem:[%s247 + $0x9a8] sm:$0xff]
        %v645 = vld [vmem:[%s247 + $0x9b0] sm:$0xff]
        %v646 = vld [vmem:[%s247 + $0x9b8] sm:$0xff]
        %v647 = vld [vmem:[%s247 + $0x9c0] sm:$0xff]
        %v648 = vld [vmem:[%s247 + $0x9c8] sm:$0xff]
        %v649 = vld [vmem:[%s247 + $0x9d0] sm:$0xff]
        %v650 = vld [vmem:[%s247 + $0x9d8] sm:$0xff]
        %v651 = vld [vmem:[%s247 + $0x9e0] sm:$0xff]
        %v652 = vld [vmem:[%s247 + $0x9e8] sm:$0xff]
        %v653 = vld [vmem:[%s247 + $0x9f0] sm:$0xff]
        %v654 = vld [vmem:[%s247 + $0x9f8] sm:$0xff]
        %v655 = vld [vmem:[%s247 + $0xa00] sm:$0xff]
        %v656 = vld [vmem:[%s247 + $0xa08] sm:$0xff]
        %v657 = vld [vmem:[%s247 + $0xa10] sm:$0xff]
        %v658 = vld [vmem:[%s247 + $0xa18] sm:$0xff]
        %v659 = vld [vmem:[%s247 + $0xa20] sm:$0xff]
        %v660 = vld [vmem:[%s247 + $0xa28] sm:$0xff]
        %v661 = vld [vmem:[%s247 + $0xa30] sm:$0xff]
        %v662 = vld [vmem:[%s247 + $0xa38] sm:$0xff]
        %v663 = vld [vmem:[%s247 + $0xa40] sm:$0xff]
        %v664 = vld [vmem:[%s247 + $0xa48] sm:$0xff]
        %v665 = vld [vmem:[%s247 + $0xa50] sm:$0xff]
        %v666 = vld [vmem:[%s247 + $0xa58] sm:$0xff]
        %v667 = vld [vmem:[%s247 + $0xa60] sm:$0xff]
        %v668 = vld [vmem:[%s247 + $0xa68] sm:$0xff]
        %v669 = vld [vmem:[%s247 + $0xa70] sm:$0xff]
        %v670 = vld [vmem:[%s247 + $0xa78] sm:$0xff]
        %v671 = vld [vmem:[%s247 + $0xa80] sm:$0xff]
        %v672 = vld [vmem:[%s247 + $0xa88] sm:$0xff]
        %v673 = vld [vmem:[%s247 + $0xa90] sm:$0xff]
        %v674 = vld [vmem:[%s247 + $0xa98] sm:$0xff]
        %v675 = vld [vmem:[%s247 + $0xaa0] sm:$0xff]
        %v676 = vld [vmem:[%s247 + $0xaa8] sm:$0xff]
        %v677 = vld [vmem:[%s247 + $0xab0] sm:$0xff]
        %v678 = vld [vmem:[%s247 + $0xab8] sm:$0xff]
        %v679 = vld [vmem:[%s247 + $0xac0] sm:$0xff]
        %v680 = vld [vmem:[%s247 + $0xac8] sm:$0xff]
        %v681 = vld [vmem:[%s247 + $0xad0] sm:$0xff]
        %v682 = vld [vmem:[%s247 + $0xad8] sm:$0xff]
        %v683 = vld [vmem:[%s247 + $0xae0] sm:$0xff]
        %v684 = vld [vmem:[%s247 + $0xae8] sm:$0xff]
        %v685 = vld [vmem:[%s247 + $0xaf0] sm:$0xff]
        %v686 = vld [vmem:[%s247 + $0xaf8] sm:$0xff]
        %v687 = vld [vmem:[%s247 + $0xb00] sm:$0xff]
        %v688 = vld [vmem:[%s247 + $0xb08] sm:$0xff]
        %v689 = vld [vmem:[%s247 + $0xb10] sm:$0xff]
        %v690 = vld [vmem:[%s247 + $0xb18] sm:$0xff]
        %v691 = vld [vmem:[%s247 + $0xb20] sm:$0xff]
        %v692 = vld [vmem:[%s247 + $0xb28] sm:$0xff]
        %v693 = vld [vmem:[%s247 + $0xb30] sm:$0xff]
        %v694 = vld [vmem:[%s247 + $0xb38] sm:$0xff]
        %v695 = vld [vmem:[%s247 + $0xb40] sm:$0xff]
        %v696 = vld [vmem:[%s247 + $0xb48] sm:$0xff]
        %v697 = vld [vmem:[%s247 + $0xb50] sm:$0xff]
        %v698 = vld [vmem:[%s247 + $0xb58] sm:$0xff]
        %v699 = vld [vmem:[%s247 + $0xb60] sm:$0xff]
        %v700 = vld [vmem:[%s247 + $0xb68] sm:$0xff]
        %v701 = vld [vmem:[%s247 + $0xb70] sm:$0xff]
        %v702 = vld [vmem:[%s247 + $0xb78] sm:$0xff]
        %v703 = vld [vmem:[%s247 + $0xb80] sm:$0xff]
        %v704 = vld [vmem:[%s247 + $0xb88] sm:$0xff]
        %v705 = vld [vmem:[%s247 + $0xb90] sm:$0xff]
        %v706 = vld [vmem:[%s247 + $0xb98] sm:$0xff]
        %v707 = vld [vmem:[%s247 + $0xba0] sm:$0xff]
        %v708 = vld [vmem:[%s247 + $0xba8] sm:$0xff]
        %v709 = vld [vmem:[%s247 + $0xbb0] sm:$0xff]
        %v710 = vld [vmem:[%s247 + $0xbb8] sm:$0xff]
        %v711 = vld [vmem:[%s247 + $0xbc0] sm:$0xff]
        %v712 = vld [vmem:[%s247 + $0xbc8] sm:$0xff]
        %v713 = vld [vmem:[%s247 + $0xbd0] sm:$0xff]
        %v714 = vld [vmem:[%s247 + $0xbd8] sm:$0xff]
        %v715 = vld [vmem:[%s247 + $0xbe0] sm:$0xff]
        %v716 = vld [vmem:[%s247 + $0xbe8] sm:$0xff]
        %v717 = vld [vmem:[%s247 + $0xbf0] sm:$0xff]
        %v718 = vld [vmem:[%s247 + $0xbf8] sm:$0xff]
        %v719 = vld [vmem:[%s247 + $0xc00] sm:$0xff]
        %v720 = vld [vmem:[%s247 + $0xc08] sm:$0xff]
        %v721 = vld [vmem:[%s247 + $0xc10] sm:$0xff]
        %v722 = vld [vmem:[%s247 + $0xc18] sm:$0xff]
        %v723 = vld [vmem:[%s247 + $0xc20] sm:$0xff]
        %v724 = vld [vmem:[%s247 + $0xc28] sm:$0xff]
        %v725 = vld [vmem:[%s247 + $0xc30] sm:$0xff]
        %v726 = vld [vmem:[%s247 + $0xc38] sm:$0xff]
        %v727 = vld [vmem:[%s247 + $0xc40] sm:$0xff]
        %v728 = vld [vmem:[%s247 + $0xc48] sm:$0xff]
        %v729 = vld [vmem:[%s247 + $0xc50] sm:$0xff]
        %v730 = vld [vmem:[%s247 + $0xc58] sm:$0xff]
        %v731 = vld [vmem:[%s247 + $0xc60] sm:$0xff]
        %v732 = vld [vmem:[%s247 + $0xc68] sm:$0xff]
        %v733 = vld [vmem:[%s247 + $0xc70] sm:$0xff]
        %v734 = vld [vmem:[%s247 + $0xc78] sm:$0xff]
        %v735 = vld [vmem:[%s247 + $0xc80] sm:$0xff]
        %v736 = vld [vmem:[%s247 + $0xc88] sm:$0xff]
        %v737 = vld [vmem:[%s247 + $0xc90] sm:$0xff]
        %v738 = vld [vmem:[%s247 + $0xc98] sm:$0xff]
        %v739 = vld [vmem:[%s247 + $0xca0] sm:$0xff]
        %v740 = vld [vmem:[%s247 + $0xca8] sm:$0xff]
        %v741 = vld [vmem:[%s247 + $0xcb0] sm:$0xff]
        %v742 = vld [vmem:[%s247 + $0xcb8] sm:$0xff]
        %v743 = vld [vmem:[%s247 + $0xcc0] sm:$0xff]
        %v744 = vld [vmem:[%s247 + $0xcc8] sm:$0xff]
        %v745 = vld [vmem:[%s247 + $0xcd0] sm:$0xff]
        %v746 = vld [vmem:[%s247 + $0xcd8] sm:$0xff]
        %v747 = vld [vmem:[%s247 + $0xce0] sm:$0xff]
        %v748 = vld [vmem:[%s247 + $0xce8] sm:$0xff]
        %v749 = vld [vmem:[%s247 + $0xcf0] sm:$0xff]
        %v750 = vld [vmem:[%s247 + $0xcf8] sm:$0xff]
        %v751 = vld [vmem:[%s247 + $0xd00] sm:$0xff]
        %v752 = vld [vmem:[%s247 + $0xd08] sm:$0xff]
        %v753 = vld [vmem:[%s247 + $0xd10] sm:$0xff]
        %v754 = vld [vmem:[%s247 + $0xd18] sm:$0xff]
        %v755 = vld [vmem:[%s247 + $0xd20] sm:$0xff]
        %v756 = vld [vmem:[%s247 + $0xd28] sm:$0xff]
        %v757 = vld [vmem:[%s247 + $0xd30] sm:$0xff]
        %v758 = vld [vmem:[%s247 + $0xd38] sm:$0xff]
        %v759 = vld [vmem:[%s247 + $0xd40] sm:$0xff]
        %v760 = vld [vmem:[%s247 + $0xd48] sm:$0xff]
        %v761 = vld [vmem:[%s247 + $0xd50] sm:$0xff]
        %v762 = vld [vmem:[%s247 + $0xd58] sm:$0xff]
        %v763 = vld [vmem:[%s247 + $0xd60] sm:$0xff]
        %v764 = vld [vmem:[%s247 + $0xd68] sm:$0xff]
        %v765 = vld [vmem:[%s247 + $0xd70] sm:$0xff]
        %v766 = vld [vmem:[%s247 + $0xd78] sm:$0xff]
        %v767 = vld [vmem:[%s247 + $0xd80] sm:$0xff]
        %v768 = vld [vmem:[%s247 + $0xd88] sm:$0xff]
        %v769 = vld [vmem:[%s247 + $0xd90] sm:$0xff]
        %v770 = vld [vmem:[%s247 + $0xd98] sm:$0xff]
        %v771 = vld [vmem:[%s247 + $0xda0] sm:$0xff]
        %v772 = vld [vmem:[%s247 + $0xda8] sm:$0xff]
        %v773 = vld [vmem:[%s247 + $0xdb0] sm:$0xff]
        %v774 = vld [vmem:[%s247 + $0xdb8] sm:$0xff]
        %v775 = vld [vmem:[%s247 + $0xdc0] sm:$0xff]
        %v776 = vld [vmem:[%s247 + $0xdc8] sm:$0xff]
        %v777 = vld [vmem:[%s247 + $0xdd0] sm:$0xff]
        %v778 = vld [vmem:[%s247 + $0xdd8] sm:$0xff]
        %v779 = vld [vmem:[%s247 + $0xde0] sm:$0xff]
        %v780 = vld [vmem:[%s247 + $0xde8] sm:$0xff]
        %v781 = vld [vmem:[%s247 + $0xdf0] sm:$0xff]
        %v782 = vld [vmem:[%s247 + $0xdf8] sm:$0xff]
        %v783 = vld [vmem:[%s247 + $0xe00] sm:$0xff]
        %v784 = vld [vmem:[%s247 + $0xe08] sm:$0xff]
        %v785 = vld [vmem:[%s247 + $0xe10] sm:$0xff]
        %v786 = vld [vmem:[%s247 + $0xe18] sm:$0xff]
        %v787 = vld [vmem:[%s247 + $0xe20] sm:$0xff]
        %v788 = vld [vmem:[%s247 + $0xe28] sm:$0xff]
        %v789 = vld [vmem:[%s247 + $0xe30] sm:$0xff]
        %v790 = vld [vmem:[%s247 + $0xe38] sm:$0xff]
        %v791 = vld [vmem:[%s247 + $0xe40] sm:$0xff]
        %v792 = vld [vmem:[%s247 + $0xe48] sm:$0xff]
        %v793 = vld [vmem:[%s247 + $0xe50] sm:$0xff]
        %v794 = vld [vmem:[%s247 + $0xe58] sm:$0xff]
        %v795 = vld [vmem:[%s247 + $0xe60] sm:$0xff]
        %v796 = vld [vmem:[%s247 + $0xe68] sm:$0xff]
        %v797 = vld [vmem:[%s247 + $0xe70] sm:$0xff]
        %v798 = vld [vmem:[%s247 + $0xe78] sm:$0xff]
        %v799 = vld [vmem:[%s247 + $0xe80] sm:$0xff]
        %v800 = vld [vmem:[%s247 + $0xe88] sm:$0xff]
        %v801 = vld [vmem:[%s247 + $0xe90] sm:$0xff]
        %v802 = vld [vmem:[%s247 + $0xe98] sm:$0xff]
        %v803 = vld [vmem:[%s247 + $0xea0] sm:$0xff]
        %v804 = vld [vmem:[%s247 + $0xea8] sm:$0xff]
        %v805 = vld [vmem:[%s247 + $0xeb0] sm:$0xff]
        %v806 = vld [vmem:[%s247 + $0xeb8] sm:$0xff]
        %v807 = vld [vmem:[%s247 + $0xec0] sm:$0xff]
        %v808 = vld [vmem:[%s247 + $0xec8] sm:$0xff]
        %v809 = vld [vmem:[%s247 + $0xed0] sm:$0xff]
        %v810 = vld [vmem:[%s247 + $0xed8] sm:$0xff]
        %v811 = vld [vmem:[%s247 + $0xee0] sm:$0xff]
        %v812 = vld [vmem:[%s247 + $0xee8] sm:$0xff]
        %v813 = vld [vmem:[%s247 + $0xef0] sm:$0xff]
        %v814 = vld [vmem:[%s247 + $0xef8] sm:$0xff]
        %v815 = vld [vmem:[%s247 + $0xf00] sm:$0xff]
        %v816 = vld [vmem:[%s247 + $0xf08] sm:$0xff]
        %v817 = vld [vmem:[%s247 + $0xf10] sm:$0xff]
        %v818 = vld [vmem:[%s247 + $0xf18] sm:$0xff]
        %v819 = vld [vmem:[%s247 + $0xf20] sm:$0xff]
        %v820 = vld [vmem:[%s247 + $0xf28] sm:$0xff]
        %v821 = vld [vmem:[%s247 + $0xf30] sm:$0xff]
        %v822 = vld [vmem:[%s247 + $0xf38] sm:$0xff]
        %v823 = vld [vmem:[%s247 + $0xf40] sm:$0xff]
        %v824 = vld [vmem:[%s247 + $0xf48] sm:$0xff]
        %v825 = vld [vmem:[%s247 + $0xf50] sm:$0xff]
        %v826 = vld [vmem:[%s247 + $0xf58] sm:$0xff]
        %v827 = vld [vmem:[%s247 + $0xf60] sm:$0xff]
        %v828 = vld [vmem:[%s247 + $0xf68] sm:$0xff]
        %v829 = vld [vmem:[%s247 + $0xf70] sm:$0xff]
        %v830 = vld [vmem:[%s247 + $0xf78] sm:$0xff]
        %v831 = vld [vmem:[%s247 + $0xf80] sm:$0xff]
        %v832 = vld [vmem:[%s247 + $0xf88] sm:$0xff]
        %v833 = vld [vmem:[%s247 + $0xf90] sm:$0xff]
        %v834 = vld [vmem:[%s247 + $0xf98] sm:$0xff]
        %v835 = vld [vmem:[%s247 + $0xfa0] sm:$0xff]
        %v836 = vld [vmem:[%s247 + $0xfa8] sm:$0xff]
        %v837 = vld [vmem:[%s247 + $0xfb0] sm:$0xff]
        %v838 = vld [vmem:[%s247 + $0xfb8] sm:$0xff]
        %v839 = vld [vmem:[%s247 + $0xfc0] sm:$0xff]
        %v840 = vld [vmem:[%s247 + $0xfc8] sm:$0xff]
        %v841 = vld [vmem:[%s247 + $0xfd0] sm:$0xff]
        %v842 = vld [vmem:[%s247 + $0xfd8] sm:$0xff]
        %v843 = vld [vmem:[%s247 + $0xfe0] sm:$0xff]
        %v844 = vld [vmem:[%s247 + $0xfe8] sm:$0xff]
        %v845 = vld [vmem:[%s247 + $0xff0] sm:$0xff]
        %v846 = vld [vmem:[%s247 + $0xff8] sm:$0xff]
        %v847 = vld [vmem:[%s247 + $0x1000] sm:$0xff]
        %v848 = vld [vmem:[%s247 + $0x1008] sm:$0xff]
        %v849 = vld [vmem:[%s247 + $0x1010] sm:$0xff]
        %v850 = vld [vmem:[%s247 + $0x1018] sm:$0xff]
        %v851 = vld [vmem:[%s247 + $0x1020] sm:$0xff]
        %v852 = vld [vmem:[%s247 + $0x1028] sm:$0xff]
        %v853 = vld [vmem:[%s247 + $0x1030] sm:$0xff]
        %v854 = vld [vmem:[%s247 + $0x1038] sm:$0xff]
        %v855 = vld [vmem:[%s247 + $0x1040] sm:$0xff]
        %v856 = vld [vmem:[%s247 + $0x1048] sm:$0xff]
        %v857 = vld [vmem:[%s247 + $0x1050] sm:$0xff]
        %v858 = vld [vmem:[%s247 + $0x1058] sm:$0xff]
        %v859 = vld [vmem:[%s247 + $0x1060] sm:$0xff]
        %v860 = vld [vmem:[%s247 + $0x1068] sm:$0xff]
        %v861 = vld [vmem:[%s247 + $0x1070] sm:$0xff]
        %v862 = vld [vmem:[%s247 + $0x1078] sm:$0xff]
        %v863 = vld [vmem:[%s247 + $0x1080] sm:$0xff]
        %v864 = vld [vmem:[%s247 + $0x1088] sm:$0xff]
        %v865 = vld [vmem:[%s247 + $0x1090] sm:$0xff]
        %v866 = vld [vmem:[%s247 + $0x1098] sm:$0xff]
        %v867 = vld [vmem:[%s247 + $0x10a0] sm:$0xff]
        %v868 = vld [vmem:[%s247 + $0x10a8] sm:$0xff]
        %v869 = vld [vmem:[%s247 + $0x10b0] sm:$0xff]
        %v870 = vld [vmem:[%s247 + $0x10b8] sm:$0xff]
        %v871 = vld [vmem:[%s247 + $0x10c0] sm:$0xff]
        %v872 = vld [vmem:[%s247 + $0x10c8] sm:$0xff]
        %v873 = vld [vmem:[%s247 + $0x10d0] sm:$0xff]
        %v874 = vld [vmem:[%s247 + $0x10d8] sm:$0xff]
        %v875 = vld [vmem:[%s247 + $0x10e0] sm:$0xff]
        %v876 = vld [vmem:[%s247 + $0x10e8] sm:$0xff]
        %v877 = vld [vmem:[%s247 + $0x10f0] sm:$0xff]
        %v878 = vld [vmem:[%s247 + $0x10f8] sm:$0xff]
        %v879 = vld [vmem:[%s247 + $0x1100] sm:$0xff]
        %v880 = vld [vmem:[%s247 + $0x1108] sm:$0xff]
        %v881 = vld [vmem:[%s247 + $0x1110] sm:$0xff]
        %v882 = vld [vmem:[%s247 + $0x1118] sm:$0xff]
        %v883 = vld [vmem:[%s247 + $0x1120] sm:$0xff]
        %v884 = vld [vmem:[%s247 + $0x1128] sm:$0xff]
        %v885 = vld [vmem:[%s247 + $0x1130] sm:$0xff]
        %v886 = vld [vmem:[%s247 + $0x1138] sm:$0xff]
        %v887 = vld [vmem:[%s247 + $0x1140] sm:$0xff]
        %v888 = vld [vmem:[%s247 + $0x1148] sm:$0xff]
        %v889 = vld [vmem:[%s247 + $0x1150] sm:$0xff]
        %v890 = vld [vmem:[%s247 + $0x1158] sm:$0xff]
        %v891 = vld [vmem:[%s247 + $0x1160] sm:$0xff]
        %v892 = vld [vmem:[%s247 + $0x1168] sm:$0xff]
        %v893 = vld [vmem:[%s247 + $0x1170] sm:$0xff]
        %v894 = vld [vmem:[%s247 + $0x1178] sm:$0xff]
        %v895 = vld [vmem:[%s247 + $0x1180] sm:$0xff]
        %v896 = vld [vmem:[%s247 + $0x1188] sm:$0xff]
        %v897 = vld [vmem:[%s247 + $0x1190] sm:$0xff]
        %v898 = vld [vmem:[%s247 + $0x1198] sm:$0xff]
        %v899 = vld [vmem:[%s247 + $0x11a0] sm:$0xff]
        %v900 = vld [vmem:[%s247 + $0x11a8] sm:$0xff]
        %v901 = vld [vmem:[%s247 + $0x11b0] sm:$0xff]
        %v902 = vld [vmem:[%s247 + $0x11b8] sm:$0xff]
        %v903 = vld [vmem:[%s247 + $0x11c0] sm:$0xff]
        %v904 = vld [vmem:[%s247 + $0x11c8] sm:$0xff]
        %v905 = vld [vmem:[%s247 + $0x11d0] sm:$0xff]
        %v906 = vld [vmem:[%s247 + $0x11d8] sm:$0xff]
        %v907 = vld [vmem:[%s247 + $0x11e0] sm:$0xff]
        %v908 = vld [vmem:[%s247 + $0x11e8] sm:$0xff]
        %v909 = vld [vmem:[%s247 + $0x11f0] sm:$0xff]
        %v910 = vld [vmem:[%s247 + $0x11f8] sm:$0xff]
        %v911 = vld [vmem:[%s247 + $0x1200] sm:$0xff]
        %v912 = vld [vmem:[%s247 + $0x1208] sm:$0xff]
        %v913 = vld [vmem:[%s247 + $0x1210] sm:$0xff]
        %v914 = vld [vmem:[%s247 + $0x1218] sm:$0xff]
        %v915 = vld [vmem:[%s247 + $0x1220] sm:$0xff]
        %v916 = vld [vmem:[%s247 + $0x1228] sm:$0xff]
        %v917 = vld [vmem:[%s247 + $0x1230] sm:$0xff]
        %v918 = vld [vmem:[%s247 + $0x1238] sm:$0xff]
        %v919 = vld [vmem:[%s247 + $0x1240] sm:$0xff]
        %v920 = vld [vmem:[%s247 + $0x1248] sm:$0xff]
        %v921 = vld [vmem:[%s247 + $0x1250] sm:$0xff]
        %v922 = vld [vmem:[%s247 + $0x1258] sm:$0xff]
        %v923 = vld [vmem:[%s247 + $0x1260] sm:$0xff]
        %v924 = vld [vmem:[%s247 + $0x1268] sm:$0xff]
        %v925 = vld [vmem:[%s247 + $0x1270] sm:$0xff]
        %v926 = vld [vmem:[%s247 + $0x1278] sm:$0xff]
        %v927 = vld [vmem:[%s247 + $0x1280] sm:$0xff]
        %v928 = vld [vmem:[%s247 + $0x1288] sm:$0xff]
        %v929 = vld [vmem:[%s247 + $0x1290] sm:$0xff]
        %v930 = vld [vmem:[%s247 + $0x1298] sm:$0xff]
        %v931 = vld [vmem:[%s247 + $0x12a0] sm:$0xff]
        %v932 = vld [vmem:[%s247 + $0x12a8] sm:$0xff]
        %v933 = vld [vmem:[%s247 + $0x12b0] sm:$0xff]
        %v934 = vld [vmem:[%s247 + $0x12b8] sm:$0xff]
        %v935 = vld [vmem:[%s247 + $0x12c0] sm:$0xff]
        %v936 = vld [vmem:[%s247 + $0x12c8] sm:$0xff]
        %v937 = vld [vmem:[%s247 + $0x12d0] sm:$0xff]
        %v938 = vld [vmem:[%s247 + $0x12d8] sm:$0xff]
        %v939 = vld [vmem:[%s247 + $0x12e0] sm:$0xff]
        %v940 = vld [vmem:[%s247 + $0x12e8] sm:$0xff]
        %v941 = vld [vmem:[%s247 + $0x12f0] sm:$0xff]
        %v942 = vld [vmem:[%s247 + $0x12f8] sm:$0xff]
        %v943 = vld [vmem:[%s247 + $0x1300] sm:$0xff]
        %v944 = vld [vmem:[%s247 + $0x1308] sm:$0xff]
        %v945 = vld [vmem:[%s247 + $0x1310] sm:$0xff]
        %v946 = vld [vmem:[%s247 + $0x1318] sm:$0xff]
        %v947 = vld [vmem:[%s247 + $0x1320] sm:$0xff]
        %v948 = vld [vmem:[%s247 + $0x1328] sm:$0xff]
        %v949 = vld [vmem:[%s247 + $0x1330] sm:$0xff]
        %v950 = vld [vmem:[%s247 + $0x1338] sm:$0xff]
        %v951 = vld [vmem:[%s247 + $0x1340] sm:$0xff]
        %v952 = vld [vmem:[%s247 + $0x1348] sm:$0xff]
        %v953 = vld [vmem:[%s247 + $0x1350] sm:$0xff]
        %v954 = vld [vmem:[%s247 + $0x1358] sm:$0xff]
        %v955 = vld [vmem:[%s247 + $0x1360] sm:$0xff]
        %v956 = vld [vmem:[%s247 + $0x1368] sm:$0xff]
        %v957 = vld [vmem:[%s247 + $0x1370] sm:$0xff]
        %v958 = vld [vmem:[%s247 + $0x1378] sm:$0xff]
        %v959 = vld [vmem:[%s247 + $0x1380] sm:$0xff]
        %v960 = vld [vmem:[%s247 + $0x1388] sm:$0xff]
        %v961 = vld [vmem:[%s247 + $0x1390] sm:$0xff]
        %v962 = vld [vmem:[%s247 + $0x1398] sm:$0xff]
        %v963 = vld [vmem:[%s247 + $0x13a0] sm:$0xff]
        %v964 = vld [vmem:[%s247 + $0x13a8] sm:$0xff]
        %v965 = vld [vmem:[%s247 + $0x13b0] sm:$0xff]
        %v966 = vld [vmem:[%s247 + $0x13b8] sm:$0xff]
        %v967 = vld [vmem:[%s247 + $0x13c0] sm:$0xff]
        %v968 = vld [vmem:[%s247 + $0x13c8] sm:$0xff]
        %v969 = vld [vmem:[%s247 + $0x13d0] sm:$0xff]
        %v970 = vld [vmem:[%s247 + $0x13d8] sm:$0xff]
        %v971 = vld [vmem:[%s247 + $0x13e0] sm:$0xff]
        %v972 = vld [vmem:[%s247 + $0x13e8] sm:$0xff]
        %v973 = vld [vmem:[%s247 + $0x13f0] sm:$0xff]
        %v974 = vld [vmem:[%s247 + $0x13f8] sm:$0xff]
        %v975 = vld [vmem:[%s247 + $0x1400] sm:$0xff]
        %v976 = vld [vmem:[%s247 + $0x1408] sm:$0xff]
        %v977 = vld [vmem:[%s247 + $0x1410] sm:$0xff]
        %v978 = vld [vmem:[%s247 + $0x1418] sm:$0xff]
        %v979 = vld [vmem:[%s247 + $0x1420] sm:$0xff]
        %v980 = vld [vmem:[%s247 + $0x1428] sm:$0xff]
        %v981 = vld [vmem:[%s247 + $0x1430] sm:$0xff]
        %v982 = vld [vmem:[%s247 + $0x1438] sm:$0xff]
        %v983 = vld [vmem:[%s247 + $0x1440] sm:$0xff]
        %v984 = vld [vmem:[%s247 + $0x1448] sm:$0xff]
        %v985 = vld [vmem:[%s247 + $0x1450] sm:$0xff]
        %v986 = vld [vmem:[%s247 + $0x1458] sm:$0xff]
        %v987 = vld [vmem:[%s247 + $0x1460] sm:$0xff]
        %v988 = vld [vmem:[%s247 + $0x1468] sm:$0xff]
        %v989 = vld [vmem:[%s247 + $0x1470] sm:$0xff]
        %v990 = vld [vmem:[%s247 + $0x1478] sm:$0xff]
        %v991 = vld [vmem:[%s247 + $0x1480] sm:$0xff]
        %v992 = vld [vmem:[%s247 + $0x1488] sm:$0xff]
        %v993 = vld [vmem:[%s247 + $0x1490] sm:$0xff]
        %v994 = vld [vmem:[%s247 + $0x1498] sm:$0xff]
        %v995 = vld [vmem:[%s247 + $0x14a0] sm:$0xff]
        %v996 = vld [vmem:[%s247 + $0x14a8] sm:$0xff]
        %v997 = vld [vmem:[%s247 + $0x14b0] sm:$0xff]
        %v998 = vld [vmem:[%s247 + $0x14b8] sm:$0xff]
        %v999 = vld [vmem:[%s247 + $0x14c0] sm:$0xff]
        %v1000 = vld [vmem:[%s247 + $0x14c8] sm:$0xff]
        %v1001 = vld [vmem:[%s247 + $0x14d0] sm:$0xff]
        %v1002 = vld [vmem:[%s247 + $0x14d8] sm:$0xff]
        %v1003 = vld [vmem:[%s247 + $0x14e0] sm:$0xff]
        %v1004 = vld [vmem:[%s247 + $0x14e8] sm:$0xff]
        %v1005 = vld [vmem:[%s247 + $0x14f0] sm:$0xff]
        %v1006 = vld [vmem:[%s247 + $0x14f8] sm:$0xff]
        %v1007 = vld [vmem:[%s247 + $0x1500] sm:$0xff]
        %v1008 = vld [vmem:[%s247 + $0x1508] sm:$0xff]
        %v1009 = vld [vmem:[%s247 + $0x1510] sm:$0xff]
        %v1010 = vld [vmem:[%s247 + $0x1518] sm:$0xff]
        %v1011 = vld [vmem:[%s247 + $0x1520] sm:$0xff]
        %v1012 = vld [vmem:[%s247 + $0x1528] sm:$0xff]
        %v1013 = vld [vmem:[%s247 + $0x1530] sm:$0xff]
        %v1014 = vld [vmem:[%s247 + $0x1538] sm:$0xff]
        %v1015 = vld [vmem:[%s247 + $0x1540] sm:$0xff]
        %v1016 = vld [vmem:[%s247 + $0x1548] sm:$0xff]
        %v1017 = vld [vmem:[%s247 + $0x1550] sm:$0xff]
        %v1018 = vld [vmem:[%s247 + $0x1558] sm:$0xff]
        %v1019 = vld [vmem:[%s247 + $0x1560] sm:$0xff]
        %v1020 = vld [vmem:[%s247 + $0x1568] sm:$0xff]
        %v1021 = vld [vmem:[%s247 + $0x1570] sm:$0xff]
        %v1022 = vld [vmem:[%s247 + $0x1578] sm:$0xff]
        %v1023 = vld [vmem:[%s247 + $0x1580] sm:$0xff]
        %v1024 = vld [vmem:[%s247 + $0x1588] sm:$0xff]
        %v1025 = vld [vmem:[%s247 + $0x1590] sm:$0xff]
        %v1026 = vld [vmem:[%s247 + $0x1598] sm:$0xff]
        %v1027 = vld [vmem:[%s247 + $0x15a0] sm:$0xff]
        %v1028 = vld [vmem:[%s247 + $0x15a8] sm:$0xff]
        %v1029 = vld [vmem:[%s247 + $0x15b0] sm:$0xff]
        %v1030 = vld [vmem:[%s247 + $0x15b8] sm:$0xff]
        %v1031 = vld [vmem:[%s247 + $0x15c0] sm:$0xff]
        %v1032 = vld [vmem:[%s247 + $0x15c8] sm:$0xff]
        %v1033 = vld [vmem:[%s247 + $0x15d0] sm:$0xff]
        %v1034 = vld [vmem:[%s247 + $0x15d8] sm:$0xff]
        %v1035 = vld [vmem:[%s247 + $0x15e0] sm:$0xff]
        %v1036 = vld [vmem:[%s247 + $0x15e8] sm:$0xff]
        %v1037 = vld [vmem:[%s247 + $0x15f0] sm:$0xff]
        %v1038 = vld [vmem:[%s247 + $0x15f8] sm:$0xff]
        %v1039 = vld [vmem:[%s247 + $0x1600] sm:$0xff]
        %v1040 = vld [vmem:[%s247 + $0x1608] sm:$0xff]
        %v1041 = vld [vmem:[%s247 + $0x1610] sm:$0xff]
        %v1042 = vld [vmem:[%s247 + $0x1618] sm:$0xff]
        %v1043 = vld [vmem:[%s247 + $0x1620] sm:$0xff]
        %v1044 = vld [vmem:[%s247 + $0x1628] sm:$0xff]
        %v1045 = vld [vmem:[%s247 + $0x1630] sm:$0xff]
        %v1046 = vld [vmem:[%s247 + $0x1638] sm:$0xff]
        %v1047 = vld [vmem:[%s247 + $0x1640] sm:$0xff]
        %v1048 = vld [vmem:[%s247 + $0x1648] sm:$0xff]
        %v1049 = vld [vmem:[%s247 + $0x1650] sm:$0xff]
        %v1050 = vld [vmem:[%s247 + $0x1658] sm:$0xff]
        %v1051 = vld [vmem:[%s247 + $0x1660] sm:$0xff]
        %v1052 = vld [vmem:[%s247 + $0x1668] sm:$0xff]
        %v1053 = vld [vmem:[%s247 + $0x1670] sm:$0xff]
        %v1054 = vld [vmem:[%s247 + $0x1678] sm:$0xff]
        %v1055 = vld [vmem:[%s247 + $0x1680] sm:$0xff]
        %v1056 = vld [vmem:[%s247 + $0x1688] sm:$0xff]
        %v1057 = vld [vmem:[%s247 + $0x1690] sm:$0xff]
        %v1058 = vld [vmem:[%s247 + $0x1698] sm:$0xff]
        %v1059 = vld [vmem:[%s247 + $0x16a0] sm:$0xff]
        %v1060 = vld [vmem:[%s247 + $0x16a8] sm:$0xff]
        %v1061 = vld [vmem:[%s247 + $0x16b0] sm:$0xff]
        %v1062 = vld [vmem:[%s247 + $0x16b8] sm:$0xff]
        %v1063 = vld [vmem:[%s247 + $0x16c0] sm:$0xff]
        %v1064 = vld [vmem:[%s247 + $0x16c8] sm:$0xff]
        %v1065 = vld [vmem:[%s247 + $0x16d0] sm:$0xff]
        %v1066 = vld [vmem:[%s247 + $0x16d8] sm:$0xff]
        %v1067 = vld [vmem:[%s247 + $0x16e0] sm:$0xff]
        %v1068 = vld [vmem:[%s247 + $0x16e8] sm:$0xff]
        %v1069 = vld [vmem:[%s247 + $0x16f0] sm:$0xff]
        %v1070 = vld [vmem:[%s247 + $0x16f8] sm:$0xff]
        %v1071 = vld [vmem:[%s247 + $0x1700] sm:$0xff]
        %v1072 = vld [vmem:[%s247 + $0x1708] sm:$0xff]
        %v1073 = vld [vmem:[%s247 + $0x1710] sm:$0xff]
        %v1074 = vld [vmem:[%s247 + $0x1718] sm:$0xff]
        %v1075 = vld [vmem:[%s247 + $0x1720] sm:$0xff]
        %v1076 = vld [vmem:[%s247 + $0x1728] sm:$0xff]
        %v1077 = vld [vmem:[%s247 + $0x1730] sm:$0xff]
        %v1078 = vld [vmem:[%s247 + $0x1738] sm:$0xff]
        %v1079 = vld [vmem:[%s247 + $0x1740] sm:$0xff]
        %v1080 = vld [vmem:[%s247 + $0x1748] sm:$0xff]
        %v1081 = vld [vmem:[%s247 + $0x1750] sm:$0xff]
        %v1082 = vld [vmem:[%s247 + $0x1758] sm:$0xff]
        %v1083 = vld [vmem:[%s247 + $0x1760] sm:$0xff]
        %v1084 = vld [vmem:[%s247 + $0x1768] sm:$0xff]
        %v1085 = vld [vmem:[%s247 + $0x1770] sm:$0xff]
        %v1086 = vld [vmem:[%s247 + $0x1778] sm:$0xff]
        %v1087 = vld [vmem:[%s247 + $0x1780] sm:$0xff]
        %v1088 = vld [vmem:[%s247 + $0x1788] sm:$0xff]
        %v1089 = vld [vmem:[%s247 + $0x1790] sm:$0xff]
        %v1090 = vld [vmem:[%s247 + $0x1798] sm:$0xff]
        %v1091 = vld [vmem:[%s247 + $0x17a0] sm:$0xff]
        %v1092 = vld [vmem:[%s247 + $0x17a8] sm:$0xff]
        %v1093 = vld [vmem:[%s247 + $0x17b0] sm:$0xff]
        %v1094 = vld [vmem:[%s247 + $0x17b8] sm:$0xff]
        %v1095 = vld [vmem:[%s247 + $0x17c0] sm:$0xff]
        %v1096 = vld [vmem:[%s247 + $0x17c8] sm:$0xff]
        %v1097 = vld [vmem:[%s247 + $0x17d0] sm:$0xff]
        %v1098 = vld [vmem:[%s247 + $0x17d8] sm:$0xff]
        %v1099 = vld [vmem:[%s247 + $0x17e0] sm:$0xff]
        %v1100 = vld [vmem:[%s247 + $0x17e8] sm:$0xff]
        %v1101 = vld [vmem:[%s247 + $0x17f0] sm:$0xff]
        %v1102 = vld [vmem:[%s247 + $0x17f8] sm:$0xff]
        %v1103 = vld [vmem:[%s247 + $0x1800] sm:$0xff]
        %v1104 = vld [vmem:[%s247 + $0x1808] sm:$0xff]
        %v1105 = vld [vmem:[%s247 + $0x1810] sm:$0xff]
        %v1106 = vld [vmem:[%s247 + $0x1818] sm:$0xff]
        %v1107 = vld [vmem:[%s247 + $0x1820] sm:$0xff]
        %v1108 = vld [vmem:[%s247 + $0x1828] sm:$0xff]
        %v1109 = vld [vmem:[%s247 + $0x1830] sm:$0xff]
        %v1110 = vld [vmem:[%s247 + $0x1838] sm:$0xff]
        %v1111 = vld [vmem:[%s247 + $0x1840] sm:$0xff]
        %v1112 = vld [vmem:[%s247 + $0x1848] sm:$0xff]
        %v1113 = vld [vmem:[%s247 + $0x1850] sm:$0xff]
        %v1114 = vld [vmem:[%s247 + $0x1858] sm:$0xff]
        %v1115 = vld [vmem:[%s247 + $0x1860] sm:$0xff]
        %v1116 = vld [vmem:[%s247 + $0x1868] sm:$0xff]
        %v1117 = vld [vmem:[%s247 + $0x1870] sm:$0xff]
        %v1118 = vld [vmem:[%s247 + $0x1878] sm:$0xff]
        %v1119 = vld [vmem:[%s247 + $0x1880] sm:$0xff]
        %v1120 = vld [vmem:[%s247 + $0x1888] sm:$0xff]
        %v1121 = vld [vmem:[%s247 + $0x1890] sm:$0xff]
        %v1122 = vld [vmem:[%s247 + $0x1898] sm:$0xff]
        %v1123 = vld [vmem:[%s247 + $0x18a0] sm:$0xff]
        %v1124 = vld [vmem:[%s247 + $0x18a8] sm:$0xff]
        %v1125 = vld [vmem:[%s247 + $0x18b0] sm:$0xff]
        %v1126 = vld [vmem:[%s247 + $0x18b8] sm:$0xff]
        %v1127 = vld [vmem:[%s247 + $0x18c0] sm:$0xff]
        %v1128 = vld [vmem:[%s247 + $0x18c8] sm:$0xff]
        %v1129 = vld [vmem:[%s247 + $0x18d0] sm:$0xff]
        %v1130 = vld [vmem:[%s247 + $0x18d8] sm:$0xff]
        %v1131 = vld [vmem:[%s247 + $0x18e0] sm:$0xff]
        %v1132 = vld [vmem:[%s247 + $0x18e8] sm:$0xff]
        %v1133 = vld [vmem:[%s247 + $0x18f0] sm:$0xff]
        %v1134 = vld [vmem:[%s247 + $0x18f8] sm:$0xff]
        %v1135 = vld [vmem:[%s247 + $0x1900] sm:$0xff]
        %v1136 = vld [vmem:[%s247 + $0x1908] sm:$0xff]
        %v1137 = vld [vmem:[%s247 + $0x1910] sm:$0xff]
        %v1138 = vld [vmem:[%s247 + $0x1918] sm:$0xff]
        %v1139 = vld [vmem:[%s247 + $0x1920] sm:$0xff]
        %v1140 = vld [vmem:[%s247 + $0x1928] sm:$0xff]
        %v1141 = vld [vmem:[%s247 + $0x1930] sm:$0xff]
        %v1142 = vld [vmem:[%s247 + $0x1938] sm:$0xff]
        %v1143 = vld [vmem:[%s247 + $0x1940] sm:$0xff]
        %v1144 = vld [vmem:[%s247 + $0x1948] sm:$0xff]
        %v1145 = vld [vmem:[%s247 + $0x1950] sm:$0xff]
        %v1146 = vld [vmem:[%s247 + $0x1958] sm:$0xff]
        %v1147 = vld [vmem:[%s247 + $0x1960] sm:$0xff]
        %v1148 = vld [vmem:[%s247 + $0x1968] sm:$0xff]
        %v1149 = vld [vmem:[%s247 + $0x1970] sm:$0xff]
        %v1150 = vld [vmem:[%s247 + $0x1978] sm:$0xff]
        %v1151 = vld [vmem:[%s247 + $0x1980] sm:$0xff]
        %v1152 = vld [vmem:[%s247 + $0x1988] sm:$0xff]
        %v1153 = vld [vmem:[%s247 + $0x1990] sm:$0xff]
        %v1154 = vld [vmem:[%s247 + $0x1998] sm:$0xff]
        %v1155 = vld [vmem:[%s247 + $0x19a0] sm:$0xff]
        %v1156 = vld [vmem:[%s247 + $0x19a8] sm:$0xff]
        %v1157 = vld [vmem:[%s247 + $0x19b0] sm:$0xff]
        %v1158 = vld [vmem:[%s247 + $0x19b8] sm:$0xff]
        %v1159 = vld [vmem:[%s247 + $0x19c0] sm:$0xff]
        %v1160 = vld [vmem:[%s247 + $0x19c8] sm:$0xff]
        %v1161 = vld [vmem:[%s247 + $0x19d0] sm:$0xff]
        %v1162 = vld [vmem:[%s247 + $0x19d8] sm:$0xff]
        %v1163 = vld [vmem:[%s247 + $0x19e0] sm:$0xff]
        %v1164 = vld [vmem:[%s247 + $0x19e8] sm:$0xff]
        %v1165 = vld [vmem:[%s247 + $0x19f0] sm:$0xff]
        %v1166 = vld [vmem:[%s247 + $0x19f8] sm:$0xff]
        %v1167 = vld [vmem:[%s247 + $0x1a00] sm:$0xff]
        %v1168 = vld [vmem:[%s247 + $0x1a08] sm:$0xff]
        %v1169 = vld [vmem:[%s247 + $0x1a10] sm:$0xff]
        %v1170 = vld [vmem:[%s247 + $0x1a18] sm:$0xff]
        %v1171 = vld [vmem:[%s247 + $0x1a20] sm:$0xff]
        %v1172 = vld [vmem:[%s247 + $0x1a28] sm:$0xff]
        %v1173 = vld [vmem:[%s247 + $0x1a30] sm:$0xff]
        %v1174 = vld [vmem:[%s247 + $0x1a38] sm:$0xff]
        %v1175 = vld [vmem:[%s247 + $0x1a40] sm:$0xff]
        %v1176 = vld [vmem:[%s247 + $0x1a48] sm:$0xff]
        %v1177 = vld [vmem:[%s247 + $0x1a50] sm:$0xff]
        %v1178 = vld [vmem:[%s247 + $0x1a58] sm:$0xff]
        %v1179 = vld [vmem:[%s247 + $0x1a60] sm:$0xff]
        %v1180 = vld [vmem:[%s247 + $0x1a68] sm:$0xff]
        %v1181 = vld [vmem:[%s247 + $0x1a70] sm:$0xff]
        %v1182 = vld [vmem:[%s247 + $0x1a78] sm:$0xff]
        %v1183 = vld [vmem:[%s247 + $0x1a80] sm:$0xff]
        %v1184 = vld [vmem:[%s247 + $0x1a88] sm:$0xff]
        %v1185 = vld [vmem:[%s247 + $0x1a90] sm:$0xff]
        %v1186 = vld [vmem:[%s247 + $0x1a98] sm:$0xff]
        %v1187 = vld [vmem:[%s247 + $0x1aa0] sm:$0xff]
        %v1188 = vld [vmem:[%s247 + $0x1aa8] sm:$0xff]
        %v1189 = vld [vmem:[%s247 + $0x1ab0] sm:$0xff]
        %v1190 = vld [vmem:[%s247 + $0x1ab8] sm:$0xff]
        %v1191 = vld [vmem:[%s247 + $0x1ac0] sm:$0xff]
        %v1192 = vld [vmem:[%s247 + $0x1ac8] sm:$0xff]
        %v1193 = vld [vmem:[%s247 + $0x1ad0] sm:$0xff]
        %v1194 = vld [vmem:[%s247 + $0x1ad8] sm:$0xff]
        %v1195 = vld [vmem:[%s247 + $0x1ae0] sm:$0xff]
        %v1196 = vld [vmem:[%s247 + $0x1ae8] sm:$0xff]
        %v1197 = vld [vmem:[%s247 + $0x1af0] sm:$0xff]
        %v1198 = vld [vmem:[%s247 + $0x1af8] sm:$0xff]
        %v1199 = vld [vmem:[%s247 + $0x1b00] sm:$0xff]
        %v1200 = vld [vmem:[%s247 + $0x1b08] sm:$0xff]
        %v1201 = vld [vmem:[%s247 + $0x1b10] sm:$0xff]
        %v1202 = vld [vmem:[%s247 + $0x1b18] sm:$0xff]
        %v1203 = vld [vmem:[%s247 + $0x1b20] sm:$0xff]
        %v1204 = vld [vmem:[%s247 + $0x1b28] sm:$0xff]
        %v1205 = vld [vmem:[%s247 + $0x1b30] sm:$0xff]
        %v1206 = vld [vmem:[%s247 + $0x1b38] sm:$0xff]
        %v1207 = vld [vmem:[%s247 + $0x1b40] sm:$0xff]
        %v1208 = vld [vmem:[%s247 + $0x1b48] sm:$0xff]
        %v1209 = vld [vmem:[%s247 + $0x1b50] sm:$0xff]
        %v1210 = vld [vmem:[%s247 + $0x1b58] sm:$0xff]
        %v1211 = vld [vmem:[%s247 + $0x1b60] sm:$0xff]
        %v1212 = vld [vmem:[%s247 + $0x1b68] sm:$0xff]
        %v1213 = vld [vmem:[%s247 + $0x1b70] sm:$0xff]
        %v1214 = vld [vmem:[%s247 + $0x1b78] sm:$0xff]
        %v1215 = vld [vmem:[%s247 + $0x1b80] sm:$0xff]
        %v1216 = vld [vmem:[%s247 + $0x1b88] sm:$0xff]
        %v1217 = vld [vmem:[%s247 + $0x1b90] sm:$0xff]
        %v1218 = vld [vmem:[%s247 + $0x1b98] sm:$0xff]
        %v1219 = vld [vmem:[%s247 + $0x1ba0] sm:$0xff]
        %v1220 = vld [vmem:[%s247 + $0x1ba8] sm:$0xff]
        %v1221 = vld [vmem:[%s247 + $0x1bb0] sm:$0xff]
        %v1222 = vld [vmem:[%s247 + $0x1bb8] sm:$0xff]
        %v1223 = vld [vmem:[%s247 + $0x1bc0] sm:$0xff]
        %v1224 = vld [vmem:[%s247 + $0x1bc8] sm:$0xff]
        %v1225 = vld [vmem:[%s247 + $0x1bd0] sm:$0xff]
        %v1226 = vld [vmem:[%s247 + $0x1bd8] sm:$0xff]
        %v1227 = vld [vmem:[%s247 + $0x1be0] sm:$0xff]
        %v1228 = vld [vmem:[%s247 + $0x1be8] sm:$0xff]
        %v1229 = vld [vmem:[%s247 + $0x1bf0] sm:$0xff]
        %v1230 = vld [vmem:[%s247 + $0x1bf8] sm:$0xff]
        %v1231 = vld [vmem:[%s247 + $0x1c00] sm:$0xff]
        %v1232 = vld [vmem:[%s247 + $0x1c08] sm:$0xff]
        %v1233 = vld [vmem:[%s247 + $0x1c10] sm:$0xff]
        %v1234 = vld [vmem:[%s247 + $0x1c18] sm:$0xff]
        %v1235 = vld [vmem:[%s247 + $0x1c20] sm:$0xff]
        %v1236 = vld [vmem:[%s247 + $0x1c28] sm:$0xff]
        %v1237 = vld [vmem:[%s247 + $0x1c30] sm:$0xff]
        %v1238 = vld [vmem:[%s247 + $0x1c38] sm:$0xff]
        %v1239 = vld [vmem:[%s247 + $0x1c40] sm:$0xff]
        %v1240 = vld [vmem:[%s247 + $0x1c48] sm:$0xff]
        %v1241 = vld [vmem:[%s247 + $0x1c50] sm:$0xff]
        %v1242 = vld [vmem:[%s247 + $0x1c58] sm:$0xff]
        %v1243 = vld [vmem:[%s247 + $0x1c60] sm:$0xff]
        %v1244 = vld [vmem:[%s247 + $0x1c68] sm:$0xff]
        %v1245 = vld [vmem:[%s247 + $0x1c70] sm:$0xff]
        %v1246 = vld [vmem:[%s247 + $0x1c78] sm:$0xff]
        %v1247 = vld [vmem:[%s247 + $0x1c80] sm:$0xff]
        %v1248 = vld [vmem:[%s247 + $0x1c88] sm:$0xff]
        %v1249 = vld [vmem:[%s247 + $0x1c90] sm:$0xff]
        %v1250 = vld [vmem:[%s247 + $0x1c98] sm:$0xff]
        %v1251 = vld [vmem:[%s247 + $0x1ca0] sm:$0xff]
        %v1252 = vld [vmem:[%s247 + $0x1ca8] sm:$0xff]
        %v1253 = vld [vmem:[%s247 + $0x1cb0] sm:$0xff]
        %v1254 = vld [vmem:[%s247 + $0x1cb8] sm:$0xff]
        %v1255 = vld [vmem:[%s247 + $0x1cc0] sm:$0xff]
        %v1256 = vld [vmem:[%s247 + $0x1cc8] sm:$0xff]
        %v1257 = vld [vmem:[%s247 + $0x1cd0] sm:$0xff]
        %v1258 = vld [vmem:[%s247 + $0x1cd8] sm:$0xff]
        %v1259 = vld [vmem:[%s247 + $0x1ce0] sm:$0xff]
        %v1260 = vld [vmem:[%s247 + $0x1ce8] sm:$0xff]
        %v1261 = vld [vmem:[%s247 + $0x1cf0] sm:$0xff]
        %v1262 = vld [vmem:[%s247 + $0x1cf8] sm:$0xff]
        %v1263 = vld [vmem:[%s247 + $0x1d00] sm:$0xff]
        %v1264 = vld [vmem:[%s247 + $0x1d08] sm:$0xff]
        %v1265 = vld [vmem:[%s247 + $0x1d10] sm:$0xff]
        %v1266 = vld [vmem:[%s247 + $0x1d18] sm:$0xff]
        %v1267 = vld [vmem:[%s247 + $0x1d20] sm:$0xff]
        %v1268 = vld [vmem:[%s247 + $0x1d28] sm:$0xff]
        %v1269 = vld [vmem:[%s247 + $0x1d30] sm:$0xff]
        %v1270 = vld [vmem:[%s247 + $0x1d38] sm:$0xff]
        %v1271 = vld [vmem:[%s247 + $0x1d40] sm:$0xff]
        %v1272 = vld [vmem:[%s247 + $0x1d48] sm:$0xff]
        %v1273 = vld [vmem:[%s247 + $0x1d50] sm:$0xff]
        %v1274 = vld [vmem:[%s247 + $0x1d58] sm:$0xff]
        %v1275 = vld [vmem:[%s247 + $0x1d60] sm:$0xff]
        %v1276 = vld [vmem:[%s247 + $0x1d68] sm:$0xff]
        %v1277 = vld [vmem:[%s247 + $0x1d70] sm:$0xff]
        %v1278 = vld [vmem:[%s247 + $0x1d78] sm:$0xff]
        %v1279 = vld [vmem:[%s247 + $0x1d80] sm:$0xff]
        %v1280 = vld [vmem:[%s247 + $0x1d88] sm:$0xff]
        %v1281 = vld [vmem:[%s247 + $0x1d90] sm:$0xff]
        %v1282 = vld [vmem:[%s247 + $0x1d98] sm:$0xff]
        %v1283 = vld [vmem:[%s247 + $0x1da0] sm:$0xff]
        %v1284 = vld [vmem:[%s247 + $0x1da8] sm:$0xff]
        %v1285 = vld [vmem:[%s247 + $0x1db0] sm:$0xff]
        %v1286 = vld [vmem:[%s247 + $0x1db8] sm:$0xff]
        %v1287 = vld [vmem:[%s247 + $0x1dc0] sm:$0xff]
        %v1288 = vld [vmem:[%s247 + $0x1dc8] sm:$0xff]
        %v1289 = vld [vmem:[%s247 + $0x1dd0] sm:$0xff]
        %v1290 = vld [vmem:[%s247 + $0x1dd8] sm:$0xff]
        %v1291 = vld [vmem:[%s247 + $0x1de0] sm:$0xff]
        %v1292 = vld [vmem:[%s247 + $0x1de8] sm:$0xff]
        %v1293 = vld [vmem:[%s247 + $0x1df0] sm:$0xff]
        %v1294 = vld [vmem:[%s247 + $0x1df8] sm:$0xff]
        %v1295 = vld [vmem:[%s247 + $0x1e00] sm:$0xff]
        %v1296 = vld [vmem:[%s247 + $0x1e08] sm:$0xff]
        %v1297 = vld [vmem:[%s247 + $0x1e10] sm:$0xff]
        %v1298 = vld [vmem:[%s247 + $0x1e18] sm:$0xff]
        %v1299 = vld [vmem:[%s247 + $0x1e20] sm:$0xff]
        %v1300 = vld [vmem:[%s247 + $0x1e28] sm:$0xff]
        %v1301 = vld [vmem:[%s247 + $0x1e30] sm:$0xff]
        %v1302 = vld [vmem:[%s247 + $0x1e38] sm:$0xff]
        %v1303 = vld [vmem:[%s247 + $0x1e40] sm:$0xff]
        %v1304 = vld [vmem:[%s247 + $0x1e48] sm:$0xff]
        %v1305 = vld [vmem:[%s247 + $0x1e50] sm:$0xff]
        %v1306 = vld [vmem:[%s247 + $0x1e58] sm:$0xff]
        %v1307 = vld [vmem:[%s247 + $0x1e60] sm:$0xff]
        %v1308 = vld [vmem:[%s247 + $0x1e68] sm:$0xff]
        %v1309 = vld [vmem:[%s247 + $0x1e70] sm:$0xff]
        %v1310 = vld [vmem:[%s247 + $0x1e78] sm:$0xff]
        %v1311 = vld [vmem:[%s247 + $0x1e80] sm:$0xff]
        %v1312 = vld [vmem:[%s247 + $0x1e88] sm:$0xff]
        %v1313 = vld [vmem:[%s247 + $0x1e90] sm:$0xff]
        %v1314 = vld [vmem:[%s247 + $0x1e98] sm:$0xff]
        %v1315 = vld [vmem:[%s247 + $0x1ea0] sm:$0xff]
        %v1316 = vld [vmem:[%s247 + $0x1ea8] sm:$0xff]
        %v1317 = vld [vmem:[%s247 + $0x1eb0] sm:$0xff]
        %v1318 = vld [vmem:[%s247 + $0x1eb8] sm:$0xff]
        %v1319 = vld [vmem:[%s247 + $0x1ec0] sm:$0xff]
        %v1320 = vld [vmem:[%s247 + $0x1ec8] sm:$0xff]
        %v1321 = vld [vmem:[%s247 + $0x1ed0] sm:$0xff]
        %v1322 = vld [vmem:[%s247 + $0x1ed8] sm:$0xff]
        %v1323 = vld [vmem:[%s247 + $0x1ee0] sm:$0xff]
        %v1324 = vld [vmem:[%s247 + $0x1ee8] sm:$0xff]
        %v1325 = vld [vmem:[%s247 + $0x1ef0] sm:$0xff]
        %v1326 = vld [vmem:[%s247 + $0x1ef8] sm:$0xff]
        %v1327 = vld [vmem:[%s247 + $0x1f00] sm:$0xff]
        %v1328 = vld [vmem:[%s247 + $0x1f08] sm:$0xff]
        %v1329 = vld [vmem:[%s247 + $0x1f10] sm:$0xff]
        %v1330 = vld [vmem:[%s247 + $0x1f18] sm:$0xff]
        %v1331 = vld [vmem:[%s247 + $0x1f20] sm:$0xff]
        %v1332 = vld [vmem:[%s247 + $0x1f28] sm:$0xff]
        %v1333 = vld [vmem:[%s247 + $0x1f30] sm:$0xff]
        %v1334 = vld [vmem:[%s247 + $0x1f38] sm:$0xff]
        %v1335 = vld [vmem:[%s247 + $0x1f40] sm:$0xff]
        %v1336 = vld [vmem:[%s247 + $0x1f48] sm:$0xff]
        %v1337 = vld [vmem:[%s247 + $0x1f50] sm:$0xff]
        %v1338 = vld [vmem:[%s247 + $0x1f58] sm:$0xff]
        %v1339 = vld [vmem:[%s247 + $0x1f60] sm:$0xff]
        %v1340 = vld [vmem:[%s247 + $0x1f68] sm:$0xff]
        %v1341 = vld [vmem:[%s247 + $0x1f70] sm:$0xff]
        %v1342 = vld [vmem:[%s247 + $0x1f78] sm:$0xff]
        %v1343 = vld [vmem:[%s247 + $0x1f80] sm:$0xff]
        %v1344 = vld [vmem:[%s247 + $0x1f88] sm:$0xff]
        %v1345 = vld [vmem:[%s247 + $0x1f90] sm:$0xff]
        %v1346 = vld [vmem:[%s247 + $0x1f98] sm:$0xff]
        %v1347 = vld [vmem:[%s247 + $0x1fa0] sm:$0xff]
        %v1348 = vld [vmem:[%s247 + $0x1fa8] sm:$0xff]
        %v1349 = vld [vmem:[%s247 + $0x1fb0] sm:$0xff]
        %v1350 = vld [vmem:[%s247 + $0x1fb8] sm:$0xff]
        %v1351 = vld [vmem:[%s247 + $0x1fc0] sm:$0xff]
        %v1352 = vld [vmem:[%s247 + $0x1fc8] sm:$0xff]
        %v1353 = vld [vmem:[%s247 + $0x1fd0] sm:$0xff]
        %v1354 = vld [vmem:[%s247 + $0x1fd8] sm:$0xff]
        %v1355 = vld [vmem:[%s247 + $0x1fe0] sm:$0xff]
        %v1356 = vld [vmem:[%s247 + $0x1fe8] sm:$0xff]
        %v1357 = vld [vmem:[%s247 + $0x1ff0] sm:$0xff]
        %v1358 = vld [vmem:[%s247 + $0x1ff8] sm:$0xff]
        %1359 = vmatprep.subr.mxu0 %v336
        %1360 = vmatpush1.xpose.msra.mxu0 %v335
        %1361 = vmatprep.subr.mxu0 %v352
        %1362 = vmatpush1.xpose.msra.mxu0 %v351
        %1363 = vmatprep.subr.mxu0 %v368
        %1364 = vmatpush1.xpose.msra.mxu0 %v367
        %1365 = vmatprep.subr.mxu0 %v384
        %1366 = vmatpush1.xpose.msra.mxu0 %v383
        %1367 = vmatprep.subr.mxu0 %v400
        %1368 = vmatpush1.xpose.msra.mxu0 %v399
        %1369 = vmatprep.subr.mxu0 %v416
        %1370 = vmatpush1.xpose.msra.mxu0 %v415
        %1371 = vmatprep.subr.mxu0 %v432
        %1372 = vmatpush1.xpose.msra.mxu0 %v431
        %1373 = vmatprep.subr.mxu0 %v448
        %1374 = vmatpush1.xpose.msra.mxu0 %v447
        %1375 = vmatprep.subr.mxu0 %v464
        %1376 = vmatpush1.xpose.msra.mxu0 %v463
        %1377 = vmatprep.subr.mxu0 %v480
        %1378 = vmatpush1.xpose.msra.mxu0 %v479
        %1379 = vmatprep.subr.mxu0 %v496
        %1380 = vmatpush1.xpose.msra.mxu0 %v495
        %1381 = vmatprep.subr.mxu0 %v512
        %1382 = vmatpush1.xpose.msra.mxu0 %v511
        %1383 = vmatprep.subr.mxu0 %v528
        %1384 = vmatpush1.xpose.msra.mxu0 %v527
        %1385 = vmatprep.subr.mxu0 %v544
        %1386 = vmatpush1.xpose.msra.mxu0 %v543
        %1387 = vmatprep.subr.mxu0 %v560
        %1388 = vmatpush1.xpose.msra.mxu0 %v559
        %1389 = vmatprep.subr.mxu0 %v576
        %1390 = vmatpush1.xpose.msra.mxu0 %v575
        %1391 = vmatprep.subr.mxu0 %v592
        %1392 = vmatpush1.xpose.msra.mxu0 %v591
        %1393 = vmatprep.subr.mxu0 %v608
        %1394 = vmatpush1.xpose.msra.mxu0 %v607
        %1395 = vmatprep.subr.mxu0 %v624
        %1396 = vmatpush1.xpose.msra.mxu0 %v623
        %1397 = vmatprep.subr.mxu0 %v640
        %1398 = vmatpush1.xpose.msra.mxu0 %v639
        %1399 = vmatprep.subr.mxu0 %v656
        %1400 = vmatpush1.xpose.msra.mxu0 %v655
        %1401 = vmatprep.subr.mxu0 %v672
        %1402 = vmatpush1.xpose.msra.mxu0 %v671
        %1403 = vmatprep.subr.mxu0 %v688
        %1404 = vmatpush1.xpose.msra.mxu0 %v687
        %1405 = vmatprep.subr.mxu0 %v704
        %1406 = vmatpush1.xpose.msra.mxu0 %v703
        %1407 = vmatprep.subr.mxu0 %v720
        %1408 = vmatpush1.xpose.msra.mxu0 %v719
        %1409 = vmatprep.subr.mxu0 %v736
        %1410 = vmatpush1.xpose.msra.mxu0 %v735
        %1411 = vmatprep.subr.mxu0 %v752
        %1412 = vmatpush1.xpose.msra.mxu0 %v751
        %1413 = vmatprep.subr.mxu0 %v768
        %1414 = vmatpush1.xpose.msra.mxu0 %v767
        %1415 = vmatprep.subr.mxu0 %v784
        %1416 = vmatpush1.xpose.msra.mxu0 %v783
        %1417 = vmatprep.subr.mxu0 %v800
        %1418 = vmatpush1.xpose.msra.mxu0 %v799
        %1419 = vmatprep.subr.mxu0 %v816
        %1420 = vmatpush1.xpose.msra.mxu0 %v815
        %1421 = vmatprep.subr.mxu0 %v832
        %1422 = vmatpush1.xpose.msra.mxu0 %v831
        %1423 = vmatprep.mubr.f32.mxu0 %v320
        %1424 = vmatmul.mubr.f32.gmra.mrb[0].mxu0 %v319
        %v1425 = vpop.f32.mrb[0].mxu0
        %v1426 = vadd.f32 0.0, %v1425
        %v1427 = vpop.f32.mrb[0].mxu0
        %v1428 = vadd.f32 0.0, %v1427
        %1429 = vdwg.mxu0
        %1430 = vmatprep.subr.mxu0 %v338
        %1431 = vmatpush1.xpose.msra.mxu0 %v337
        %1432 = vmatprep.subr.mxu0 %v354
        %1433 = vmatpush1.xpose.msra.mxu0 %v353
        %1434 = vmatprep.subr.mxu0 %v370
        %1435 = vmatpush1.xpose.msra.mxu0 %v369
        %1436 = vmatprep.subr.mxu0 %v386
        %1437 = vmatpush1.xpose.msra.mxu0 %v385
        %1438 = vmatprep.subr.mxu0 %v402
        %1439 = vmatpush1.xpose.msra.mxu0 %v401
        %1440 = vmatprep.subr.mxu0 %v418
        %1441 = vmatpush1.xpose.msra.mxu0 %v417
        %1442 = vmatprep.subr.mxu0 %v434
        %1443 = vmatpush1.xpose.msra.mxu0 %v433
        %1444 = vmatprep.subr.mxu0 %v450
        %1445 = vmatpush1.xpose.msra.mxu0 %v449
        %1446 = vmatprep.subr.mxu0 %v466
        %1447 = vmatpush1.xpose.msra.mxu0 %v465
        %1448 = vmatprep.subr.mxu0 %v482
        %1449 = vmatpush1.xpose.msra.mxu0 %v481
        %1450 = vmatprep.subr.mxu0 %v498
        %1451 = vmatpush1.xpose.msra.mxu0 %v497
        %1452 = vmatprep.subr.mxu0 %v514
        %1453 = vmatpush1.xpose.msra.mxu0 %v513
        %1454 = vmatprep.subr.mxu0 %v530
        %1455 = vmatpush1.xpose.msra.mxu0 %v529
        %1456 = vmatprep.subr.mxu0 %v546
        %1457 = vmatpush1.xpose.msra.mxu0 %v545
        %1458 = vmatprep.subr.mxu0 %v562
        %1459 = vmatpush1.xpose.msra.mxu0 %v561
        %1460 = vmatprep.subr.mxu0 %v578
        %1461 = vmatpush1.xpose.msra.mxu0 %v577
        %1462 = vmatprep.subr.mxu0 %v594
        %1463 = vmatpush1.xpose.msra.mxu0 %v593
        %1464 = vmatprep.subr.mxu0 %v610
        %1465 = vmatpush1.xpose.msra.mxu0 %v609
        %1466 = vmatprep.subr.mxu0 %v626
        %1467 = vmatpush1.xpose.msra.mxu0 %v625
        %1468 = vmatprep.subr.mxu0 %v642
        %1469 = vmatpush1.xpose.msra.mxu0 %v641
        %1470 = vmatprep.subr.mxu0 %v658
        %1471 = vmatpush1.xpose.msra.mxu0 %v657
        %1472 = vmatprep.subr.mxu0 %v674
        %1473 = vmatpush1.xpose.msra.mxu0 %v673
        %1474 = vmatprep.subr.mxu0 %v690
        %1475 = vmatpush1.xpose.msra.mxu0 %v689
        %1476 = vmatprep.subr.mxu0 %v706
        %1477 = vmatpush1.xpose.msra.mxu0 %v705
        %1478 = vmatprep.subr.mxu0 %v722
        %1479 = vmatpush1.xpose.msra.mxu0 %v721
        %1480 = vmatprep.subr.mxu0 %v738
        %1481 = vmatpush1.xpose.msra.mxu0 %v737
        %1482 = vmatprep.subr.mxu0 %v754
        %1483 = vmatpush1.xpose.msra.mxu0 %v753
        %1484 = vmatprep.subr.mxu0 %v770
        %1485 = vmatpush1.xpose.msra.mxu0 %v769
        %1486 = vmatprep.subr.mxu0 %v786
        %1487 = vmatpush1.xpose.msra.mxu0 %v785
        %1488 = vmatprep.subr.mxu0 %v802
        %1489 = vmatpush1.xpose.msra.mxu0 %v801
        %1490 = vmatprep.subr.mxu0 %v818
        %1491 = vmatpush1.xpose.msra.mxu0 %v817
        %1492 = vmatprep.subr.mxu0 %v834
        %1493 = vmatpush1.xpose.msra.mxu0 %v833
        %1494 = vmatprep.mubr.f32.mxu0 %v322
        %1495 = vmatmul.mubr.f32.gmra.mrb[0].mxu0 %v321
        %v1496 = vpop.f32.mrb[0].mxu0
        %v1497 = vadd.f32 %v1426, %v1496
        %v1498 = vpop.f32.mrb[0].mxu0
        %v1499 = vadd.f32 %v1428, %v1498
        %1500 = vdwg.mxu0
        %1501 = vmatprep.subr.mxu0 %v340
        %1502 = vmatpush1.xpose.msra.mxu0 %v339
        %1503 = vmatprep.subr.mxu0 %v356
        %1504 = vmatpush1.xpose.msra.mxu0 %v355
        %1505 = vmatprep.subr.mxu0 %v372
        %1506 = vmatpush1.xpose.msra.mxu0 %v371
        %1507 = vmatprep.subr.mxu0 %v388
        %1508 = vmatpush1.xpose.msra.mxu0 %v387
        %1509 = vmatprep.subr.mxu0 %v404
        %1510 = vmatpush1.xpose.msra.mxu0 %v403
        %1511 = vmatprep.subr.mxu0 %v420
        %1512 = vmatpush1.xpose.msra.mxu0 %v419
        %1513 = vmatprep.subr.mxu0 %v436
        %1514 = vmatpush1.xpose.msra.mxu0 %v435
        %1515 = vmatprep.subr.mxu0 %v452
        %1516 = vmatpush1.xpose.msra.mxu0 %v451
        %1517 = vmatprep.subr.mxu0 %v468
        %1518 = vmatpush1.xpose.msra.mxu0 %v467
        %1519 = vmatprep.subr.mxu0 %v484
        %1520 = vmatpush1.xpose.msra.mxu0 %v483
        %1521 = vmatprep.subr.mxu0 %v500
        %1522 = vmatpush1.xpose.msra.mxu0 %v499
        %1523 = vmatprep.subr.mxu0 %v516
        %1524 = vmatpush1.xpose.msra.mxu0 %v515
        %1525 = vmatprep.subr.mxu0 %v532
        %1526 = vmatpush1.xpose.msra.mxu0 %v531
        %1527 = vmatprep.subr.mxu0 %v548
        %1528 = vmatpush1.xpose.msra.mxu0 %v547
        %1529 = vmatprep.subr.mxu0 %v564
        %1530 = vmatpush1.xpose.msra.mxu0 %v563
        %1531 = vmatprep.subr.mxu0 %v580
        %1532 = vmatpush1.xpose.msra.mxu0 %v579
        %1533 = vmatprep.subr.mxu0 %v596
        %1534 = vmatpush1.xpose.msra.mxu0 %v595
        %1535 = vmatprep.subr.mxu0 %v612
        %1536 = vmatpush1.xpose.msra.mxu0 %v611
        %1537 = vmatprep.subr.mxu0 %v628
        %1538 = vmatpush1.xpose.msra.mxu0 %v627
        %1539 = vmatprep.subr.mxu0 %v644
        %1540 = vmatpush1.xpose.msra.mxu0 %v643
        %1541 = vmatprep.subr.mxu0 %v660
        %1542 = vmatpush1.xpose.msra.mxu0 %v659
        %1543 = vmatprep.subr.mxu0 %v676
        %1544 = vmatpush1.xpose.msra.mxu0 %v675
        %1545 = vmatprep.subr.mxu0 %v692
        %1546 = vmatpush1.xpose.msra.mxu0 %v691
        %1547 = vmatprep.subr.mxu0 %v708
        %1548 = vmatpush1.xpose.msra.mxu0 %v707
        %1549 = vmatprep.subr.mxu0 %v724
        %1550 = vmatpush1.xpose.msra.mxu0 %v723
        %1551 = vmatprep.subr.mxu0 %v740
        %1552 = vmatpush1.xpose.msra.mxu0 %v739
        %1553 = vmatprep.subr.mxu0 %v756
        %1554 = vmatpush1.xpose.msra.mxu0 %v755
        %1555 = vmatprep.subr.mxu0 %v772
        %1556 = vmatpush1.xpose.msra.mxu0 %v771
        %1557 = vmatprep.subr.mxu0 %v788
        %1558 = vmatpush1.xpose.msra.mxu0 %v787
        %1559 = vmatprep.subr.mxu0 %v804
        %1560 = vmatpush1.xpose.msra.mxu0 %v803
        %1561 = vmatprep.subr.mxu0 %v820
        %1562 = vmatpush1.xpose.msra.mxu0 %v819
        %1563 = vmatprep.subr.mxu0 %v836
        %1564 = vmatpush1.xpose.msra.mxu0 %v835
        %1565 = vmatprep.mubr.f32.mxu0 %v324
        %1566 = vmatmul.mubr.f32.gmra.mrb[0].mxu0 %v323
        %v1567 = vpop.f32.mrb[0].mxu0
        %v1568 = vadd.f32 %v1497, %v1567
        %v1569 = vpop.f32.mrb[0].mxu0
        %v1570 = vadd.f32 %v1499, %v1569
        %1571 = vdwg.mxu0
        %1572 = vmatprep.subr.mxu0 %v342
        %1573 = vmatpush1.xpose.msra.mxu0 %v341
        %1574 = vmatprep.subr.mxu0 %v358
        %1575 = vmatpush1.xpose.msra.mxu0 %v357
        %1576 = vmatprep.subr.mxu0 %v374
        %1577 = vmatpush1.xpose.msra.mxu0 %v373
        %1578 = vmatprep.subr.mxu0 %v390
        %1579 = vmatpush1.xpose.msra.mxu0 %v389
        %1580 = vmatprep.subr.mxu0 %v406
        %1581 = vmatpush1.xpose.msra.mxu0 %v405
        %1582 = vmatprep.subr.mxu0 %v422
        %1583 = vmatpush1.xpose.msra.mxu0 %v421
        %1584 = vmatprep.subr.mxu0 %v438
        %1585 = vmatpush1.xpose.msra.mxu0 %v437
        %1586 = vmatprep.subr.mxu0 %v454
        %1587 = vmatpush1.xpose.msra.mxu0 %v453
        %1588 = vmatprep.subr.mxu0 %v470
        %1589 = vmatpush1.xpose.msra.mxu0 %v469
        %1590 = vmatprep.subr.mxu0 %v486
        %1591 = vmatpush1.xpose.msra.mxu0 %v485
        %1592 = vmatprep.subr.mxu0 %v502
        %1593 = vmatpush1.xpose.msra.mxu0 %v501
        %1594 = vmatprep.subr.mxu0 %v518
        %1595 = vmatpush1.xpose.msra.mxu0 %v517
        %1596 = vmatprep.subr.mxu0 %v534
        %1597 = vmatpush1.xpose.msra.mxu0 %v533
        %1598 = vmatprep.subr.mxu0 %v550
        %1599 = vmatpush1.xpose.msra.mxu0 %v549
        %1600 = vmatprep.subr.mxu0 %v566
        %1601 = vmatpush1.xpose.msra.mxu0 %v565
        %1602 = vmatprep.subr.mxu0 %v582
        %1603 = vmatpush1.xpose.msra.mxu0 %v581
        %1604 = vmatprep.subr.mxu0 %v598
        %1605 = vmatpush1.xpose.msra.mxu0 %v597
        %1606 = vmatprep.subr.mxu0 %v614
        %1607 = vmatpush1.xpose.msra.mxu0 %v613
        %1608 = vmatprep.subr.mxu0 %v630
        %1609 = vmatpush1.xpose.msra.mxu0 %v629
        %1610 = vmatprep.subr.mxu0 %v646
        %1611 = vmatpush1.xpose.msra.mxu0 %v645
        %1612 = vmatprep.subr.mxu0 %v662
        %1613 = vmatpush1.xpose.msra.mxu0 %v661
        %1614 = vmatprep.subr.mxu0 %v678
        %1615 = vmatpush1.xpose.msra.mxu0 %v677
        %1616 = vmatprep.subr.mxu0 %v694
        %1617 = vmatpush1.xpose.msra.mxu0 %v693
        %1618 = vmatprep.subr.mxu0 %v710
        %1619 = vmatpush1.xpose.msra.mxu0 %v709
        %1620 = vmatprep.subr.mxu0 %v726
        %1621 = vmatpush1.xpose.msra.mxu0 %v725
        %1622 = vmatprep.subr.mxu0 %v742
        %1623 = vmatpush1.xpose.msra.mxu0 %v741
        %1624 = vmatprep.subr.mxu0 %v758
        %1625 = vmatpush1.xpose.msra.mxu0 %v757
        %1626 = vmatprep.subr.mxu0 %v774
        %1627 = vmatpush1.xpose.msra.mxu0 %v773
        %1628 = vmatprep.subr.mxu0 %v790
        %1629 = vmatpush1.xpose.msra.mxu0 %v789
        %1630 = vmatprep.subr.mxu0 %v806
        %1631 = vmatpush1.xpose.msra.mxu0 %v805
        %1632 = vmatprep.subr.mxu0 %v822
        %1633 = vmatpush1.xpose.msra.mxu0 %v821
        %1634 = vmatprep.subr.mxu0 %v838
        %1635 = vmatpush1.xpose.msra.mxu0 %v837
        %1636 = vmatprep.mubr.f32.mxu0 %v326
        %1637 = vmatmul.mubr.f32.gmra.mrb[0].mxu0 %v325
        %v1638 = vpop.f32.mrb[0].mxu0
        %v1639 = vadd.f32 %v1568, %v1638
        %v1640 = vpop.f32.mrb[0].mxu0
        %v1641 = vadd.f32 %v1570, %v1640
        %1642 = vdwg.mxu0
        %1643 = vmatprep.subr.mxu0 %v344
        %1644 = vmatpush1.xpose.msra.mxu0 %v343
        %1645 = vmatprep.subr.mxu0 %v360
        %1646 = vmatpush1.xpose.msra.mxu0 %v359
        %1647 = vmatprep.subr.mxu0 %v376
        %1648 = vmatpush1.xpose.msra.mxu0 %v375
        %1649 = vmatprep.subr.mxu0 %v392
        %1650 = vmatpush1.xpose.msra.mxu0 %v391
        %1651 = vmatprep.subr.mxu0 %v408
        %1652 = vmatpush1.xpose.msra.mxu0 %v407
        %1653 = vmatprep.subr.mxu0 %v424
        %1654 = vmatpush1.xpose.msra.mxu0 %v423
        %1655 = vmatprep.subr.mxu0 %v440
        %1656 = vmatpush1.xpose.msra.mxu0 %v439
        %1657 = vmatprep.subr.mxu0 %v456
        %1658 = vmatpush1.xpose.msra.mxu0 %v455
        %1659 = vmatprep.subr.mxu0 %v472
        %1660 = vmatpush1.xpose.msra.mxu0 %v471
        %1661 = vmatprep.subr.mxu0 %v488
        %1662 = vmatpush1.xpose.msra.mxu0 %v487
        %1663 = vmatprep.subr.mxu0 %v504
        %1664 = vmatpush1.xpose.msra.mxu0 %v503
        %1665 = vmatprep.subr.mxu0 %v520
        %1666 = vmatpush1.xpose.msra.mxu0 %v519
        %1667 = vmatprep.subr.mxu0 %v536
        %1668 = vmatpush1.xpose.msra.mxu0 %v535
        %1669 = vmatprep.subr.mxu0 %v552
        %1670 = vmatpush1.xpose.msra.mxu0 %v551
        %1671 = vmatprep.subr.mxu0 %v568
        %1672 = vmatpush1.xpose.msra.mxu0 %v567
        %1673 = vmatprep.subr.mxu0 %v584
        %1674 = vmatpush1.xpose.msra.mxu0 %v583
        %1675 = vmatprep.subr.mxu0 %v600
        %1676 = vmatpush1.xpose.msra.mxu0 %v599
        %1677 = vmatprep.subr.mxu0 %v616
        %1678 = vmatpush1.xpose.msra.mxu0 %v615
        %1679 = vmatprep.subr.mxu0 %v632
        %1680 = vmatpush1.xpose.msra.mxu0 %v631
        %1681 = vmatprep.subr.mxu0 %v648
        %1682 = vmatpush1.xpose.msra.mxu0 %v647
        %1683 = vmatprep.subr.mxu0 %v664
        %1684 = vmatpush1.xpose.msra.mxu0 %v663
        %1685 = vmatprep.subr.mxu0 %v680
        %1686 = vmatpush1.xpose.msra.mxu0 %v679
        %1687 = vmatprep.subr.mxu0 %v696
        %1688 = vmatpush1.xpose.msra.mxu0 %v695
        %1689 = vmatprep.subr.mxu0 %v712
        %1690 = vmatpush1.xpose.msra.mxu0 %v711
        %1691 = vmatprep.subr.mxu0 %v728
        %1692 = vmatpush1.xpose.msra.mxu0 %v727
        %1693 = vmatprep.subr.mxu0 %v744
        %1694 = vmatpush1.xpose.msra.mxu0 %v743
        %1695 = vmatprep.subr.mxu0 %v760
        %1696 = vmatpush1.xpose.msra.mxu0 %v759
        %1697 = vmatprep.subr.mxu0 %v776
        %1698 = vmatpush1.xpose.msra.mxu0 %v775
        %1699 = vmatprep.subr.mxu0 %v792
        %1700 = vmatpush1.xpose.msra.mxu0 %v791
        %1701 = vmatprep.subr.mxu0 %v808
        %1702 = vmatpush1.xpose.msra.mxu0 %v807
        %1703 = vmatprep.subr.mxu0 %v824
        %1704 = vmatpush1.xpose.msra.mxu0 %v823
        %1705 = vmatprep.subr.mxu0 %v840
        %1706 = vmatpush1.xpose.msra.mxu0 %v839
        %1707 = vmatprep.mubr.f32.mxu0 %v328
        %1708 = vmatmul.mubr.f32.gmra.mrb[0].mxu0 %v327
        %v1709 = vpop.f32.mrb[0].mxu0
        %v1710 = vadd.f32 %v1639, %v1709
        %v1711 = vpop.f32.mrb[0].mxu0
        %v1712 = vadd.f32 %v1641, %v1711
        %1713 = vdwg.mxu0
        %1714 = vmatprep.subr.mxu0 %v346
        %1715 = vmatpush1.xpose.msra.mxu0 %v345
        %1716 = vmatprep.subr.mxu0 %v362
        %1717 = vmatpush1.xpose.msra.mxu0 %v361
        %1718 = vmatprep.subr.mxu0 %v378
        %1719 = vmatpush1.xpose.msra.mxu0 %v377
        %1720 = vmatprep.subr.mxu0 %v394
        %1721 = vmatpush1.xpose.msra.mxu0 %v393
        %1722 = vmatprep.subr.mxu0 %v410
        %1723 = vmatpush1.xpose.msra.mxu0 %v409
        %1724 = vmatprep.subr.mxu0 %v426
        %1725 = vmatpush1.xpose.msra.mxu0 %v425
        %1726 = vmatprep.subr.mxu0 %v442
        %1727 = vmatpush1.xpose.msra.mxu0 %v441
        %1728 = vmatprep.subr.mxu0 %v458
        %1729 = vmatpush1.xpose.msra.mxu0 %v457
        %1730 = vmatprep.subr.mxu0 %v474
        %1731 = vmatpush1.xpose.msra.mxu0 %v473
        %1732 = vmatprep.subr.mxu0 %v490
        %1733 = vmatpush1.xpose.msra.mxu0 %v489
        %1734 = vmatprep.subr.mxu0 %v506
        %1735 = vmatpush1.xpose.msra.mxu0 %v505
        %1736 = vmatprep.subr.mxu0 %v522
        %1737 = vmatpush1.xpose.msra.mxu0 %v521
        %1738 = vmatprep.subr.mxu0 %v538
        %1739 = vmatpush1.xpose.msra.mxu0 %v537
        %1740 = vmatprep.subr.mxu0 %v554
        %1741 = vmatpush1.xpose.msra.mxu0 %v553
        %1742 = vmatprep.subr.mxu0 %v570
        %1743 = vmatpush1.xpose.msra.mxu0 %v569
        %1744 = vmatprep.subr.mxu0 %v586
        %1745 = vmatpush1.xpose.msra.mxu0 %v585
        %1746 = vmatprep.subr.mxu0 %v602
        %1747 = vmatpush1.xpose.msra.mxu0 %v601
        %1748 = vmatprep.subr.mxu0 %v618
        %1749 = vmatpush1.xpose.msra.mxu0 %v617
        %1750 = vmatprep.subr.mxu0 %v634
        %1751 = vmatpush1.xpose.msra.mxu0 %v633
        %1752 = vmatprep.subr.mxu0 %v650
        %1753 = vmatpush1.xpose.msra.mxu0 %v649
        %1754 = vmatprep.subr.mxu0 %v666
        %1755 = vmatpush1.xpose.msra.mxu0 %v665
        %1756 = vmatprep.subr.mxu0 %v682
        %1757 = vmatpush1.xpose.msra.mxu0 %v681
        %1758 = vmatprep.subr.mxu0 %v698
        %1759 = vmatpush1.xpose.msra.mxu0 %v697
        %1760 = vmatprep.subr.mxu0 %v714
        %1761 = vmatpush1.xpose.msra.mxu0 %v713
        %1762 = vmatprep.subr.mxu0 %v730
        %1763 = vmatpush1.xpose.msra.mxu0 %v729
        %1764 = vmatprep.subr.mxu0 %v746
        %1765 = vmatpush1.xpose.msra.mxu0 %v745
        %1766 = vmatprep.subr.mxu0 %v762
        %1767 = vmatpush1.xpose.msra.mxu0 %v761
        %1768 = vmatprep.subr.mxu0 %v778
        %1769 = vmatpush1.xpose.msra.mxu0 %v777
        %1770 = vmatprep.subr.mxu0 %v794
        %1771 = vmatpush1.xpose.msra.mxu0 %v793
        %1772 = vmatprep.subr.mxu0 %v810
        %1773 = vmatpush1.xpose.msra.mxu0 %v809
        %1774 = vmatprep.subr.mxu0 %v826
        %1775 = vmatpush1.xpose.msra.mxu0 %v825
        %1776 = vmatprep.subr.mxu0 %v842
        %1777 = vmatpush1.xpose.msra.mxu0 %v841
        %1778 = vmatprep.mubr.f32.mxu0 %v330
        %1779 = vmatmul.mubr.f32.gmra.mrb[0].mxu0 %v329
        %v1780 = vpop.f32.mrb[0].mxu0
        %v1781 = vadd.f32 %v1710, %v1780
        %v1782 = vpop.f32.mrb[0].mxu0
        %v1783 = vadd.f32 %v1712, %v1782
        %1784 = vdwg.mxu0
        %1785 = vmatprep.subr.mxu0 %v348
        %1786 = vmatpush1.xpose.msra.mxu0 %v347
        %1787 = vmatprep.subr.mxu0 %v364
        %1788 = vmatpush1.xpose.msra.mxu0 %v363
        %1789 = vmatprep.subr.mxu0 %v380
        %1790 = vmatpush1.xpose.msra.mxu0 %v379
        %1791 = vmatprep.subr.mxu0 %v396
        %1792 = vmatpush1.xpose.msra.mxu0 %v395
        %1793 = vmatprep.subr.mxu0 %v412
        %1794 = vmatpush1.xpose.msra.mxu0 %v411
        %1795 = vmatprep.subr.mxu0 %v428
        %1796 = vmatpush1.xpose.msra.mxu0 %v427
        %1797 = vmatprep.subr.mxu0 %v444
        %1798 = vmatpush1.xpose.msra.mxu0 %v443
        %1799 = vmatprep.subr.mxu0 %v460
        %1800 = vmatpush1.xpose.msra.mxu0 %v459
        %1801 = vmatprep.subr.mxu0 %v476
        %1802 = vmatpush1.xpose.msra.mxu0 %v475
        %1803 = vmatprep.subr.mxu0 %v492
        %1804 = vmatpush1.xpose.msra.mxu0 %v491
        %1805 = vmatprep.subr.mxu0 %v508
        %1806 = vmatpush1.xpose.msra.mxu0 %v507
        %1807 = vmatprep.subr.mxu0 %v524
        %1808 = vmatpush1.xpose.msra.mxu0 %v523
        %1809 = vmatprep.subr.mxu0 %v540
        %1810 = vmatpush1.xpose.msra.mxu0 %v539
        %1811 = vmatprep.subr.mxu0 %v556
        %1812 = vmatpush1.xpose.msra.mxu0 %v555
        %1813 = vmatprep.subr.mxu0 %v572
        %1814 = vmatpush1.xpose.msra.mxu0 %v571
        %1815 = vmatprep.subr.mxu0 %v588
        %1816 = vmatpush1.xpose.msra.mxu0 %v587
        %1817 = vmatprep.subr.mxu0 %v604
        %1818 = vmatpush1.xpose.msra.mxu0 %v603
        %1819 = vmatprep.subr.mxu0 %v620
        %1820 = vmatpush1.xpose.msra.mxu0 %v619
        %1821 = vmatprep.subr.mxu0 %v636
        %1822 = vmatpush1.xpose.msra.mxu0 %v635
        %1823 = vmatprep.subr.mxu0 %v652
        %1824 = vmatpush1.xpose.msra.mxu0 %v651
        %1825 = vmatprep.subr.mxu0 %v668
        %1826 = vmatpush1.xpose.msra.mxu0 %v667
        %1827 = vmatprep.subr.mxu0 %v684
        %1828 = vmatpush1.xpose.msra.mxu0 %v683
        %1829 = vmatprep.subr.mxu0 %v700
        %1830 = vmatpush1.xpose.msra.mxu0 %v699
        %1831 = vmatprep.subr.mxu0 %v716
        %1832 = vmatpush1.xpose.msra.mxu0 %v715
        %1833 = vmatprep.subr.mxu0 %v732
        %1834 = vmatpush1.xpose.msra.mxu0 %v731
        %1835 = vmatprep.subr.mxu0 %v748
        %1836 = vmatpush1.xpose.msra.mxu0 %v747
        %1837 = vmatprep.subr.mxu0 %v764
        %1838 = vmatpush1.xpose.msra.mxu0 %v763
        %1839 = vmatprep.subr.mxu0 %v780
        %1840 = vmatpush1.xpose.msra.mxu0 %v779
        %1841 = vmatprep.subr.mxu0 %v796
        %1842 = vmatpush1.xpose.msra.mxu0 %v795
        %1843 = vmatprep.subr.mxu0 %v812
        %1844 = vmatpush1.xpose.msra.mxu0 %v811
        %1845 = vmatprep.subr.mxu0 %v828
        %1846 = vmatpush1.xpose.msra.mxu0 %v827
        %1847 = vmatprep.subr.mxu0 %v844
        %1848 = vmatpush1.xpose.msra.mxu0 %v843
        %1849 = vmatprep.mubr.f32.mxu0 %v332
        %1850 = vmatmul.mubr.f32.gmra.mrb[0].mxu0 %v331
        %v1851 = vpop.f32.mrb[0].mxu0
        %v1852 = vadd.f32 %v1781, %v1851
        %v1853 = vpop.f32.mrb[0].mxu0
        %v1854 = vadd.f32 %v1783, %v1853
        %1855 = vdwg.mxu0
        %1856 = vmatprep.subr.mxu0 %v350
        %1857 = vmatpush1.xpose.msra.mxu0 %v349
        %1858 = vmatprep.subr.mxu0 %v366
        %1859 = vmatpush1.xpose.msra.mxu0 %v365
        %1860 = vmatprep.subr.mxu0 %v382
        %1861 = vmatpush1.xpose.msra.mxu0 %v381
        %1862 = vmatprep.subr.mxu0 %v398
        %1863 = vmatpush1.xpose.msra.mxu0 %v397
        %1864 = vmatprep.subr.mxu0 %v414
        %1865 = vmatpush1.xpose.msra.mxu0 %v413
        %1866 = vmatprep.subr.mxu0 %v430
        %1867 = vmatpush1.xpose.msra.mxu0 %v429
        %1868 = vmatprep.subr.mxu0 %v446
        %1869 = vmatpush1.xpose.msra.mxu0 %v445
        %1870 = vmatprep.subr.mxu0 %v462
        %1871 = vmatpush1.xpose.msra.mxu0 %v461
        %1872 = vmatprep.subr.mxu0 %v478
        %1873 = vmatpush1.xpose.msra.mxu0 %v477
        %1874 = vmatprep.subr.mxu0 %v494
        %1875 = vmatpush1.xpose.msra.mxu0 %v493
        %1876 = vmatprep.subr.mxu0 %v510
        %1877 = vmatpush1.xpose.msra.mxu0 %v509
        %1878 = vmatprep.subr.mxu0 %v526
        %1879 = vmatpush1.xpose.msra.mxu0 %v525
        %1880 = vmatprep.subr.mxu0 %v542
        %1881 = vmatpush1.xpose.msra.mxu0 %v541
        %1882 = vmatprep.subr.mxu0 %v558
        %1883 = vmatpush1.xpose.msra.mxu0 %v557
        %1884 = vmatprep.subr.mxu0 %v574
        %1885 = vmatpush1.xpose.msra.mxu0 %v573
        %1886 = vmatprep.subr.mxu0 %v590
        %1887 = vmatpush1.xpose.msra.mxu0 %v589
        %1888 = vmatprep.subr.mxu0 %v606
        %1889 = vmatpush1.xpose.msra.mxu0 %v605
        %1890 = vmatprep.subr.mxu0 %v622
        %1891 = vmatpush1.xpose.msra.mxu0 %v621
        %1892 = vmatprep.subr.mxu0 %v638
        %1893 = vmatpush1.xpose.msra.mxu0 %v637
        %1894 = vmatprep.subr.mxu0 %v654
        %1895 = vmatpush1.xpose.msra.mxu0 %v653
        %1896 = vmatprep.subr.mxu0 %v670
        %1897 = vmatpush1.xpose.msra.mxu0 %v669
        %1898 = vmatprep.subr.mxu0 %v686
        %1899 = vmatpush1.xpose.msra.mxu0 %v685
        %1900 = vmatprep.subr.mxu0 %v702
        %1901 = vmatpush1.xpose.msra.mxu0 %v701
        %1902 = vmatprep.subr.mxu0 %v718
        %1903 = vmatpush1.xpose.msra.mxu0 %v717
        %1904 = vmatprep.subr.mxu0 %v734
        %1905 = vmatpush1.xpose.msra.mxu0 %v733
        %1906 = vmatprep.subr.mxu0 %v750
        %1907 = vmatpush1.xpose.msra.mxu0 %v749
        %1908 = vmatprep.subr.mxu0 %v766
        %1909 = vmatpush1.xpose.msra.mxu0 %v765
        %1910 = vmatprep.subr.mxu0 %v782
        %1911 = vmatpush1.xpose.msra.mxu0 %v781
        %1912 = vmatprep.subr.mxu0 %v798
        %1913 = vmatpush1.xpose.msra.mxu0 %v797
        %1914 = vmatprep.subr.mxu0 %v814
        %1915 = vmatpush1.xpose.msra.mxu0 %v813
        %1916 = vmatprep.subr.mxu0 %v830
        %1917 = vmatpush1.xpose.msra.mxu0 %v829
        %1918 = vmatprep.subr.mxu0 %v846
        %1919 = vmatpush1.xpose.msra.mxu0 %v845
        %1920 = vmatprep.mubr.f32.mxu0 %v334
        %1921 = vmatmul.mubr.f32.gmra.mrb[0].mxu0 %v333
        %v1922 = vpop.f32.mrb[0].mxu0
        %v1923 = vadd.f32 %v1852, %v1922
        %v1924 = vpop.f32.mrb[0].mxu0
        %v1925 = vadd.f32 %v1854, %v1924
        %1926 = vdwg.mxu0
        %1927 = vmatprep.subr.mxu0 %v848
        %1928 = vmatpush1.xpose.msra.mxu0 %v847
        %1929 = vmatprep.subr.mxu0 %v864
        %1930 = vmatpush1.xpose.msra.mxu0 %v863
        %1931 = vmatprep.subr.mxu0 %v880
        %1932 = vmatpush1.xpose.msra.mxu0 %v879
        %1933 = vmatprep.subr.mxu0 %v896
        %1934 = vmatpush1.xpose.msra.mxu0 %v895
        %1935 = vmatprep.subr.mxu0 %v912
        %1936 = vmatpush1.xpose.msra.mxu0 %v911
        %1937 = vmatprep.subr.mxu0 %v928
        %1938 = vmatpush1.xpose.msra.mxu0 %v927
        %1939 = vmatprep.subr.mxu0 %v944
        %1940 = vmatpush1.xpose.msra.mxu0 %v943
        %1941 = vmatprep.subr.mxu0 %v960
        %1942 = vmatpush1.xpose.msra.mxu0 %v959
        %1943 = vmatprep.subr.mxu0 %v976
        %1944 = vmatpush1.xpose.msra.mxu0 %v975
        %1945 = vmatprep.subr.mxu0 %v992
        %1946 = vmatpush1.xpose.msra.mxu0 %v991
        %1947 = vmatprep.subr.mxu0 %v1008
        %1948 = vmatpush1.xpose.msra.mxu0 %v1007
        %1949 = vmatprep.subr.mxu0 %v1024
        %1950 = vmatpush1.xpose.msra.mxu0 %v1023
        %1951 = vmatprep.subr.mxu0 %v1040
        %1952 = vmatpush1.xpose.msra.mxu0 %v1039
        %1953 = vmatprep.subr.mxu0 %v1056
        %1954 = vmatpush1.xpose.msra.mxu0 %v1055
        %1955 = vmatprep.subr.mxu0 %v1072
        %1956 = vmatpush1.xpose.msra.mxu0 %v1071
        %1957 = vmatprep.subr.mxu0 %v1088
        %1958 = vmatpush1.xpose.msra.mxu0 %v1087
        %1959 = vmatprep.subr.mxu0 %v1104
        %1960 = vmatpush1.xpose.msra.mxu0 %v1103
        %1961 = vmatprep.subr.mxu0 %v1120
        %1962 = vmatpush1.xpose.msra.mxu0 %v1119
        %1963 = vmatprep.subr.mxu0 %v1136
        %1964 = vmatpush1.xpose.msra.mxu0 %v1135
        %1965 = vmatprep.subr.mxu0 %v1152
        %1966 = vmatpush1.xpose.msra.mxu0 %v1151
        %1967 = vmatprep.subr.mxu0 %v1168
        %1968 = vmatpush1.xpose.msra.mxu0 %v1167
        %1969 = vmatprep.subr.mxu0 %v1184
        %1970 = vmatpush1.xpose.msra.mxu0 %v1183
        %1971 = vmatprep.subr.mxu0 %v1200
        %1972 = vmatpush1.xpose.msra.mxu0 %v1199
        %1973 = vmatprep.subr.mxu0 %v1216
        %1974 = vmatpush1.xpose.msra.mxu0 %v1215
        %1975 = vmatprep.subr.mxu0 %v1232
        %1976 = vmatpush1.xpose.msra.mxu0 %v1231
        %1977 = vmatprep.subr.mxu0 %v1248
        %1978 = vmatpush1.xpose.msra.mxu0 %v1247
        %1979 = vmatprep.subr.mxu0 %v1264
        %1980 = vmatpush1.xpose.msra.mxu0 %v1263
        %1981 = vmatprep.subr.mxu0 %v1280
        %1982 = vmatpush1.xpose.msra.mxu0 %v1279
        %1983 = vmatprep.subr.mxu0 %v1296
        %1984 = vmatpush1.xpose.msra.mxu0 %v1295
        %1985 = vmatprep.subr.mxu0 %v1312
        %1986 = vmatpush1.xpose.msra.mxu0 %v1311
        %1987 = vmatprep.subr.mxu0 %v1328
        %1988 = vmatpush1.xpose.msra.mxu0 %v1327
        %1989 = vmatprep.subr.mxu0 %v1344
        %1990 = vmatpush1.xpose.msra.mxu0 %v1343
        %1991 = vmatprep.mubr.f32.mxu0 %v320
        %1992 = vmatmul.mubr.f32.gmra.mrb[0].mxu0 %v319
        %v1993 = vpop.f32.mrb[0].mxu0
        %v1994 = vadd.f32 0.0, %v1993
        %v1995 = vpop.f32.mrb[0].mxu0
        %v1996 = vadd.f32 0.0, %v1995
        %1997 = vdwg.mxu0
        %1998 = vmatprep.subr.mxu0 %v850
        %1999 = vmatpush1.xpose.msra.mxu0 %v849
        %2000 = vmatprep.subr.mxu0 %v866
        %2001 = vmatpush1.xpose.msra.mxu0 %v865
        %2002 = vmatprep.subr.mxu0 %v882
        %2003 = vmatpush1.xpose.msra.mxu0 %v881
        %2004 = vmatprep.subr.mxu0 %v898
        %2005 = vmatpush1.xpose.msra.mxu0 %v897
        %2006 = vmatprep.subr.mxu0 %v914
        %2007 = vmatpush1.xpose.msra.mxu0 %v913
        %2008 = vmatprep.subr.mxu0 %v930
        %2009 = vmatpush1.xpose.msra.mxu0 %v929
        %2010 = vmatprep.subr.mxu0 %v946
        %2011 = vmatpush1.xpose.msra.mxu0 %v945
        %2012 = vmatprep.subr.mxu0 %v962
        %2013 = vmatpush1.xpose.msra.mxu0 %v961
        %2014 = vmatprep.subr.mxu0 %v978
        %2015 = vmatpush1.xpose.msra.mxu0 %v977
        %2016 = vmatprep.subr.mxu0 %v994
        %2017 = vmatpush1.xpose.msra.mxu0 %v993
        %2018 = vmatprep.subr.mxu0 %v1010
        %2019 = vmatpush1.xpose.msra.mxu0 %v1009
        %2020 = vmatprep.subr.mxu0 %v1026
        %2021 = vmatpush1.xpose.msra.mxu0 %v1025
        %2022 = vmatprep.subr.mxu0 %v1042
        %2023 = vmatpush1.xpose.msra.mxu0 %v1041
        %2024 = vmatprep.subr.mxu0 %v1058
        %2025 = vmatpush1.xpose.msra.mxu0 %v1057
        %2026 = vmatprep.subr.mxu0 %v1074
        %2027 = vmatpush1.xpose.msra.mxu0 %v1073
        %2028 = vmatprep.subr.mxu0 %v1090
        %2029 = vmatpush1.xpose.msra.mxu0 %v1089
        %2030 = vmatprep.subr.mxu0 %v1106
        %2031 = vmatpush1.xpose.msra.mxu0 %v1105
        %2032 = vmatprep.subr.mxu0 %v1122
        %2033 = vmatpush1.xpose.msra.mxu0 %v1121
        %2034 = vmatprep.subr.mxu0 %v1138
        %2035 = vmatpush1.xpose.msra.mxu0 %v1137
        %2036 = vmatprep.subr.mxu0 %v1154
        %2037 = vmatpush1.xpose.msra.mxu0 %v1153
        %2038 = vmatprep.subr.mxu0 %v1170
        %2039 = vmatpush1.xpose.msra.mxu0 %v1169
        %2040 = vmatprep.subr.mxu0 %v1186
        %2041 = vmatpush1.xpose.msra.mxu0 %v1185
        %2042 = vmatprep.subr.mxu0 %v1202
        %2043 = vmatpush1.xpose.msra.mxu0 %v1201
        %2044 = vmatprep.subr.mxu0 %v1218
        %2045 = vmatpush1.xpose.msra.mxu0 %v1217
        %2046 = vmatprep.subr.mxu0 %v1234
        %2047 = vmatpush1.xpose.msra.mxu0 %v1233
        %2048 = vmatprep.subr.mxu0 %v1250
        %2049 = vmatpush1.xpose.msra.mxu0 %v1249
        %2050 = vmatprep.subr.mxu0 %v1266
        %2051 = vmatpush1.xpose.msra.mxu0 %v1265
        %2052 = vmatprep.subr.mxu0 %v1282
        %2053 = vmatpush1.xpose.msra.mxu0 %v1281
        %2054 = vmatprep.subr.mxu0 %v1298
        %2055 = vmatpush1.xpose.msra.mxu0 %v1297
        %2056 = vmatprep.subr.mxu0 %v1314
        %2057 = vmatpush1.xpose.msra.mxu0 %v1313
        %2058 = vmatprep.subr.mxu0 %v1330
        %2059 = vmatpush1.xpose.msra.mxu0 %v1329
        %2060 = vmatprep.subr.mxu0 %v1346
        %2061 = vmatpush1.xpose.msra.mxu0 %v1345
        %2062 = vmatprep.mubr.f32.mxu0 %v322
        %2063 = vmatmul.mubr.f32.gmra.mrb[0].mxu0 %v321
        %v2064 = vpop.f32.mrb[0].mxu0
        %v2065 = vadd.f32 %v1994, %v2064
        %v2066 = vpop.f32.mrb[0].mxu0
        %v2067 = vadd.f32 %v1996, %v2066
        %2068 = vdwg.mxu0
        %2069 = vmatprep.subr.mxu0 %v852
        %2070 = vmatpush1.xpose.msra.mxu0 %v851
        %2071 = vmatprep.subr.mxu0 %v868
        %2072 = vmatpush1.xpose.msra.mxu0 %v867
        %2073 = vmatprep.subr.mxu0 %v884
        %2074 = vmatpush1.xpose.msra.mxu0 %v883
        %2075 = vmatprep.subr.mxu0 %v900
        %2076 = vmatpush1.xpose.msra.mxu0 %v899
        %2077 = vmatprep.subr.mxu0 %v916
        %2078 = vmatpush1.xpose.msra.mxu0 %v915
        %2079 = vmatprep.subr.mxu0 %v932
        %2080 = vmatpush1.xpose.msra.mxu0 %v931
        %2081 = vmatprep.subr.mxu0 %v948
        %2082 = vmatpush1.xpose.msra.mxu0 %v947
        %2083 = vmatprep.subr.mxu0 %v964
        %2084 = vmatpush1.xpose.msra.mxu0 %v963
        %2085 = vmatprep.subr.mxu0 %v980
        %2086 = vmatpush1.xpose.msra.mxu0 %v979
        %2087 = vmatprep.subr.mxu0 %v996
        %2088 = vmatpush1.xpose.msra.mxu0 %v995
        %2089 = vmatprep.subr.mxu0 %v1012
        %2090 = vmatpush1.xpose.msra.mxu0 %v1011
        %2091 = vmatprep.subr.mxu0 %v1028
        %2092 = vmatpush1.xpose.msra.mxu0 %v1027
        %2093 = vmatprep.subr.mxu0 %v1044
        %2094 = vmatpush1.xpose.msra.mxu0 %v1043
        %2095 = vmatprep.subr.mxu0 %v1060
        %2096 = vmatpush1.xpose.msra.mxu0 %v1059
        %2097 = vmatprep.subr.mxu0 %v1076
        %2098 = vmatpush1.xpose.msra.mxu0 %v1075
        %2099 = vmatprep.subr.mxu0 %v1092
        %2100 = vmatpush1.xpose.msra.mxu0 %v1091
        %2101 = vmatprep.subr.mxu0 %v1108
        %2102 = vmatpush1.xpose.msra.mxu0 %v1107
        %2103 = vmatprep.subr.mxu0 %v1124
        %2104 = vmatpush1.xpose.msra.mxu0 %v1123
        %2105 = vmatprep.subr.mxu0 %v1140
        %2106 = vmatpush1.xpose.msra.mxu0 %v1139
        %2107 = vmatprep.subr.mxu0 %v1156
        %2108 = vmatpush1.xpose.msra.mxu0 %v1155
        %2109 = vmatprep.subr.mxu0 %v1172
        %2110 = vmatpush1.xpose.msra.mxu0 %v1171
        %2111 = vmatprep.subr.mxu0 %v1188
        %2112 = vmatpush1.xpose.msra.mxu0 %v1187
        %2113 = vmatprep.subr.mxu0 %v1204
        %2114 = vmatpush1.xpose.msra.mxu0 %v1203
        %2115 = vmatprep.subr.mxu0 %v1220
        %2116 = vmatpush1.xpose.msra.mxu0 %v1219
        %2117 = vmatprep.subr.mxu0 %v1236
        %2118 = vmatpush1.xpose.msra.mxu0 %v1235
        %2119 = vmatprep.subr.mxu0 %v1252
        %2120 = vmatpush1.xpose.msra.mxu0 %v1251
        %2121 = vmatprep.subr.mxu0 %v1268
        %2122 = vmatpush1.xpose.msra.mxu0 %v1267
        %2123 = vmatprep.subr.mxu0 %v1284
        %2124 = vmatpush1.xpose.msra.mxu0 %v1283
        %2125 = vmatprep.subr.mxu0 %v1300
        %2126 = vmatpush1.xpose.msra.mxu0 %v1299
        %2127 = vmatprep.subr.mxu0 %v1316
        %2128 = vmatpush1.xpose.msra.mxu0 %v1315
        %2129 = vmatprep.subr.mxu0 %v1332
        %2130 = vmatpush1.xpose.msra.mxu0 %v1331
        %2131 = vmatprep.subr.mxu0 %v1348
        %2132 = vmatpush1.xpose.msra.mxu0 %v1347
        %2133 = vmatprep.mubr.f32.mxu0 %v324
        %2134 = vmatmul.mubr.f32.gmra.mrb[0].mxu0 %v323
        %v2135 = vpop.f32.mrb[0].mxu0
        %v2136 = vadd.f32 %v2065, %v2135
        %v2137 = vpop.f32.mrb[0].mxu0
        %v2138 = vadd.f32 %v2067, %v2137
        %2139 = vdwg.mxu0
        %2140 = vmatprep.subr.mxu0 %v854
        %2141 = vmatpush1.xpose.msra.mxu0 %v853
        %2142 = vmatprep.subr.mxu0 %v870
        %2143 = vmatpush1.xpose.msra.mxu0 %v869
        %2144 = vmatprep.subr.mxu0 %v886
        %2145 = vmatpush1.xpose.msra.mxu0 %v885
        %2146 = vmatprep.subr.mxu0 %v902
        %2147 = vmatpush1.xpose.msra.mxu0 %v901
        %2148 = vmatprep.subr.mxu0 %v918
        %2149 = vmatpush1.xpose.msra.mxu0 %v917
        %2150 = vmatprep.subr.mxu0 %v934
        %2151 = vmatpush1.xpose.msra.mxu0 %v933
        %2152 = vmatprep.subr.mxu0 %v950
        %2153 = vmatpush1.xpose.msra.mxu0 %v949
        %2154 = vmatprep.subr.mxu0 %v966
        %2155 = vmatpush1.xpose.msra.mxu0 %v965
        %2156 = vmatprep.subr.mxu0 %v982
        %2157 = vmatpush1.xpose.msra.mxu0 %v981
        %2158 = vmatprep.subr.mxu0 %v998
        %2159 = vmatpush1.xpose.msra.mxu0 %v997
        %2160 = vmatprep.subr.mxu0 %v1014
        %2161 = vmatpush1.xpose.msra.mxu0 %v1013
        %2162 = vmatprep.subr.mxu0 %v1030
        %2163 = vmatpush1.xpose.msra.mxu0 %v1029
        %2164 = vmatprep.subr.mxu0 %v1046
        %2165 = vmatpush1.xpose.msra.mxu0 %v1045
        %2166 = vmatprep.subr.mxu0 %v1062
        %2167 = vmatpush1.xpose.msra.mxu0 %v1061
        %2168 = vmatprep.subr.mxu0 %v1078
        %2169 = vmatpush1.xpose.msra.mxu0 %v1077
        %2170 = vmatprep.subr.mxu0 %v1094
        %2171 = vmatpush1.xpose.msra.mxu0 %v1093
        %2172 = vmatprep.subr.mxu0 %v1110
        %2173 = vmatpush1.xpose.msra.mxu0 %v1109
        %2174 = vmatprep.subr.mxu0 %v1126
        %2175 = vmatpush1.xpose.msra.mxu0 %v1125
        %2176 = vmatprep.subr.mxu0 %v1142
        %2177 = vmatpush1.xpose.msra.mxu0 %v1141
        %2178 = vmatprep.subr.mxu0 %v1158
        %2179 = vmatpush1.xpose.msra.mxu0 %v1157
        %2180 = vmatprep.subr.mxu0 %v1174
        %2181 = vmatpush1.xpose.msra.mxu0 %v1173
        %2182 = vmatprep.subr.mxu0 %v1190
        %2183 = vmatpush1.xpose.msra.mxu0 %v1189
        %2184 = vmatprep.subr.mxu0 %v1206
        %2185 = vmatpush1.xpose.msra.mxu0 %v1205
        %2186 = vmatprep.subr.mxu0 %v1222
        %2187 = vmatpush1.xpose.msra.mxu0 %v1221
        %2188 = vmatprep.subr.mxu0 %v1238
        %2189 = vmatpush1.xpose.msra.mxu0 %v1237
        %2190 = vmatprep.subr.mxu0 %v1254
        %2191 = vmatpush1.xpose.msra.mxu0 %v1253
        %2192 = vmatprep.subr.mxu0 %v1270
        %2193 = vmatpush1.xpose.msra.mxu0 %v1269
        %2194 = vmatprep.subr.mxu0 %v1286
        %2195 = vmatpush1.xpose.msra.mxu0 %v1285
        %2196 = vmatprep.subr.mxu0 %v1302
        %2197 = vmatpush1.xpose.msra.mxu0 %v1301
        %2198 = vmatprep.subr.mxu0 %v1318
        %2199 = vmatpush1.xpose.msra.mxu0 %v1317
        %2200 = vmatprep.subr.mxu0 %v1334
        %2201 = vmatpush1.xpose.msra.mxu0 %v1333
        %2202 = vmatprep.subr.mxu0 %v1350
        %2203 = vmatpush1.xpose.msra.mxu0 %v1349
        %2204 = vmatprep.mubr.f32.mxu0 %v326
        %2205 = vmatmul.mubr.f32.gmra.mrb[0].mxu0 %v325
        %v2206 = vpop.f32.mrb[0].mxu0
        %v2207 = vadd.f32 %v2136, %v2206
        %v2208 = vpop.f32.mrb[0].mxu0
        %v2209 = vadd.f32 %v2138, %v2208
        %2210 = vdwg.mxu0
        %2211 = vmatprep.subr.mxu0 %v856
        %2212 = vmatpush1.xpose.msra.mxu0 %v855
        %2213 = vmatprep.subr.mxu0 %v872
        %2214 = vmatpush1.xpose.msra.mxu0 %v871
        %2215 = vmatprep.subr.mxu0 %v888
        %2216 = vmatpush1.xpose.msra.mxu0 %v887
        %2217 = vmatprep.subr.mxu0 %v904
        %2218 = vmatpush1.xpose.msra.mxu0 %v903
        %2219 = vmatprep.subr.mxu0 %v920
        %2220 = vmatpush1.xpose.msra.mxu0 %v919
        %2221 = vmatprep.subr.mxu0 %v936
        %2222 = vmatpush1.xpose.msra.mxu0 %v935
        %2223 = vmatprep.subr.mxu0 %v952
        %2224 = vmatpush1.xpose.msra.mxu0 %v951
        %2225 = vmatprep.subr.mxu0 %v968
        %2226 = vmatpush1.xpose.msra.mxu0 %v967
        %2227 = vmatprep.subr.mxu0 %v984
        %2228 = vmatpush1.xpose.msra.mxu0 %v983
        %2229 = vmatprep.subr.mxu0 %v1000
        %2230 = vmatpush1.xpose.msra.mxu0 %v999
        %2231 = vmatprep.subr.mxu0 %v1016
        %2232 = vmatpush1.xpose.msra.mxu0 %v1015
        %2233 = vmatprep.subr.mxu0 %v1032
        %2234 = vmatpush1.xpose.msra.mxu0 %v1031
        %2235 = vmatprep.subr.mxu0 %v1048
        %2236 = vmatpush1.xpose.msra.mxu0 %v1047
        %2237 = vmatprep.subr.mxu0 %v1064
        %2238 = vmatpush1.xpose.msra.mxu0 %v1063
        %2239 = vmatprep.subr.mxu0 %v1080
        %2240 = vmatpush1.xpose.msra.mxu0 %v1079
        %2241 = vmatprep.subr.mxu0 %v1096
        %2242 = vmatpush1.xpose.msra.mxu0 %v1095
        %2243 = vmatprep.subr.mxu0 %v1112
        %2244 = vmatpush1.xpose.msra.mxu0 %v1111
        %2245 = vmatprep.subr.mxu0 %v1128
        %2246 = vmatpush1.xpose.msra.mxu0 %v1127
        %2247 = vmatprep.subr.mxu0 %v1144
        %2248 = vmatpush1.xpose.msra.mxu0 %v1143
        %2249 = vmatprep.subr.mxu0 %v1160
        %2250 = vmatpush1.xpose.msra.mxu0 %v1159
        %2251 = vmatprep.subr.mxu0 %v1176
        %2252 = vmatpush1.xpose.msra.mxu0 %v1175
        %2253 = vmatprep.subr.mxu0 %v1192
        %2254 = vmatpush1.xpose.msra.mxu0 %v1191
        %2255 = vmatprep.subr.mxu0 %v1208
        %2256 = vmatpush1.xpose.msra.mxu0 %v1207
        %2257 = vmatprep.subr.mxu0 %v1224
        %2258 = vmatpush1.xpose.msra.mxu0 %v1223
        %2259 = vmatprep.subr.mxu0 %v1240
        %2260 = vmatpush1.xpose.msra.mxu0 %v1239
        %2261 = vmatprep.subr.mxu0 %v1256
        %2262 = vmatpush1.xpose.msra.mxu0 %v1255
        %2263 = vmatprep.subr.mxu0 %v1272
        %2264 = vmatpush1.xpose.msra.mxu0 %v1271
        %2265 = vmatprep.subr.mxu0 %v1288
        %2266 = vmatpush1.xpose.msra.mxu0 %v1287
        %2267 = vmatprep.subr.mxu0 %v1304
        %2268 = vmatpush1.xpose.msra.mxu0 %v1303
        %2269 = vmatprep.subr.mxu0 %v1320
        %2270 = vmatpush1.xpose.msra.mxu0 %v1319
        %2271 = vmatprep.subr.mxu0 %v1336
        %2272 = vmatpush1.xpose.msra.mxu0 %v1335
        %2273 = vmatprep.subr.mxu0 %v1352
        %2274 = vmatpush1.xpose.msra.mxu0 %v1351
        %2275 = vmatprep.mubr.f32.mxu0 %v328
        %2276 = vmatmul.mubr.f32.gmra.mrb[0].mxu0 %v327
        %v2277 = vpop.f32.mrb[0].mxu0
        %v2278 = vadd.f32 %v2207, %v2277
        %v2279 = vpop.f32.mrb[0].mxu0
        %v2280 = vadd.f32 %v2209, %v2279
        %2281 = vdwg.mxu0
        %2282 = vmatprep.subr.mxu0 %v858
        %2283 = vmatpush1.xpose.msra.mxu0 %v857
        %2284 = vmatprep.subr.mxu0 %v874
        %2285 = vmatpush1.xpose.msra.mxu0 %v873
        %2286 = vmatprep.subr.mxu0 %v890
        %2287 = vmatpush1.xpose.msra.mxu0 %v889
        %2288 = vmatprep.subr.mxu0 %v906
        %2289 = vmatpush1.xpose.msra.mxu0 %v905
        %2290 = vmatprep.subr.mxu0 %v922
        %2291 = vmatpush1.xpose.msra.mxu0 %v921
        %2292 = vmatprep.subr.mxu0 %v938
        %2293 = vmatpush1.xpose.msra.mxu0 %v937
        %2294 = vmatprep.subr.mxu0 %v954
        %2295 = vmatpush1.xpose.msra.mxu0 %v953
        %2296 = vmatprep.subr.mxu0 %v970
        %2297 = vmatpush1.xpose.msra.mxu0 %v969
        %2298 = vmatprep.subr.mxu0 %v986
        %2299 = vmatpush1.xpose.msra.mxu0 %v985
        %2300 = vmatprep.subr.mxu0 %v1002
        %2301 = vmatpush1.xpose.msra.mxu0 %v1001
        %2302 = vmatprep.subr.mxu0 %v1018
        %2303 = vmatpush1.xpose.msra.mxu0 %v1017
        %2304 = vmatprep.subr.mxu0 %v1034
        %2305 = vmatpush1.xpose.msra.mxu0 %v1033
        %2306 = vmatprep.subr.mxu0 %v1050
        %2307 = vmatpush1.xpose.msra.mxu0 %v1049
        %2308 = vmatprep.subr.mxu0 %v1066
        %2309 = vmatpush1.xpose.msra.mxu0 %v1065
        %2310 = vmatprep.subr.mxu0 %v1082
        %2311 = vmatpush1.xpose.msra.mxu0 %v1081
        %2312 = vmatprep.subr.mxu0 %v1098
        %2313 = vmatpush1.xpose.msra.mxu0 %v1097
        %2314 = vmatprep.subr.mxu0 %v1114
        %2315 = vmatpush1.xpose.msra.mxu0 %v1113
        %2316 = vmatprep.subr.mxu0 %v1130
        %2317 = vmatpush1.xpose.msra.mxu0 %v1129
        %2318 = vmatprep.subr.mxu0 %v1146
        %2319 = vmatpush1.xpose.msra.mxu0 %v1145
        %2320 = vmatprep.subr.mxu0 %v1162
        %2321 = vmatpush1.xpose.msra.mxu0 %v1161
        %2322 = vmatprep.subr.mxu0 %v1178
        %2323 = vmatpush1.xpose.msra.mxu0 %v1177
        %2324 = vmatprep.subr.mxu0 %v1194
        %2325 = vmatpush1.xpose.msra.mxu0 %v1193
        %2326 = vmatprep.subr.mxu0 %v1210
        %2327 = vmatpush1.xpose.msra.mxu0 %v1209
        %2328 = vmatprep.subr.mxu0 %v1226
        %2329 = vmatpush1.xpose.msra.mxu0 %v1225
        %2330 = vmatprep.subr.mxu0 %v1242
        %2331 = vmatpush1.xpose.msra.mxu0 %v1241
        %2332 = vmatprep.subr.mxu0 %v1258
        %2333 = vmatpush1.xpose.msra.mxu0 %v1257
        %2334 = vmatprep.subr.mxu0 %v1274
        %2335 = vmatpush1.xpose.msra.mxu0 %v1273
        %2336 = vmatprep.subr.mxu0 %v1290
        %2337 = vmatpush1.xpose.msra.mxu0 %v1289
        %2338 = vmatprep.subr.mxu0 %v1306
        %2339 = vmatpush1.xpose.msra.mxu0 %v1305
        %2340 = vmatprep.subr.mxu0 %v1322
        %2341 = vmatpush1.xpose.msra.mxu0 %v1321
        %2342 = vmatprep.subr.mxu0 %v1338
        %2343 = vmatpush1.xpose.msra.mxu0 %v1337
        %2344 = vmatprep.subr.mxu0 %v1354
        %2345 = vmatpush1.xpose.msra.mxu0 %v1353
        %2346 = vmatprep.mubr.f32.mxu0 %v330
        %2347 = vmatmul.mubr.f32.gmra.mrb[0].mxu0 %v329
        %v2348 = vpop.f32.mrb[0].mxu0
        %v2349 = vadd.f32 %v2278, %v2348
        %v2350 = vpop.f32.mrb[0].mxu0
        %v2351 = vadd.f32 %v2280, %v2350
        %2352 = vdwg.mxu0
        %2353 = vmatprep.subr.mxu0 %v860
        %2354 = vmatpush1.xpose.msra.mxu0 %v859
        %2355 = vmatprep.subr.mxu0 %v876
        %2356 = vmatpush1.xpose.msra.mxu0 %v875
        %2357 = vmatprep.subr.mxu0 %v892
        %2358 = vmatpush1.xpose.msra.mxu0 %v891
        %2359 = vmatprep.subr.mxu0 %v908
        %2360 = vmatpush1.xpose.msra.mxu0 %v907
        %2361 = vmatprep.subr.mxu0 %v924
        %2362 = vmatpush1.xpose.msra.mxu0 %v923
        %2363 = vmatprep.subr.mxu0 %v940
        %2364 = vmatpush1.xpose.msra.mxu0 %v939
        %2365 = vmatprep.subr.mxu0 %v956
        %2366 = vmatpush1.xpose.msra.mxu0 %v955
        %2367 = vmatprep.subr.mxu0 %v972
        %2368 = vmatpush1.xpose.msra.mxu0 %v971
        %2369 = vmatprep.subr.mxu0 %v988
        %2370 = vmatpush1.xpose.msra.mxu0 %v987
        %2371 = vmatprep.subr.mxu0 %v1004
        %2372 = vmatpush1.xpose.msra.mxu0 %v1003
        %2373 = vmatprep.subr.mxu0 %v1020
        %2374 = vmatpush1.xpose.msra.mxu0 %v1019
        %2375 = vmatprep.subr.mxu0 %v1036
        %2376 = vmatpush1.xpose.msra.mxu0 %v1035
        %2377 = vmatprep.subr.mxu0 %v1052
        %2378 = vmatpush1.xpose.msra.mxu0 %v1051
        %2379 = vmatprep.subr.mxu0 %v1068
        %2380 = vmatpush1.xpose.msra.mxu0 %v1067
        %2381 = vmatprep.subr.mxu0 %v1084
        %2382 = vmatpush1.xpose.msra.mxu0 %v1083
        %2383 = vmatprep.subr.mxu0 %v1100
        %2384 = vmatpush1.xpose.msra.mxu0 %v1099
        %2385 = vmatprep.subr.mxu0 %v1116
        %2386 = vmatpush1.xpose.msra.mxu0 %v1115
        %2387 = vmatprep.subr.mxu0 %v1132
        %2388 = vmatpush1.xpose.msra.mxu0 %v1131
        %2389 = vmatprep.subr.mxu0 %v1148
        %2390 = vmatpush1.xpose.msra.mxu0 %v1147
        %2391 = vmatprep.subr.mxu0 %v1164
        %2392 = vmatpush1.xpose.msra.mxu0 %v1163
        %2393 = vmatprep.subr.mxu0 %v1180
        %2394 = vmatpush1.xpose.msra.mxu0 %v1179
        %2395 = vmatprep.subr.mxu0 %v1196
        %2396 = vmatpush1.xpose.msra.mxu0 %v1195
        %2397 = vmatprep.subr.mxu0 %v1212
        %2398 = vmatpush1.xpose.msra.mxu0 %v1211
        %2399 = vmatprep.subr.mxu0 %v1228
        %2400 = vmatpush1.xpose.msra.mxu0 %v1227
        %2401 = vmatprep.subr.mxu0 %v1244
        %2402 = vmatpush1.xpose.msra.mxu0 %v1243
        %2403 = vmatprep.subr.mxu0 %v1260
        %2404 = vmatpush1.xpose.msra.mxu0 %v1259
        %2405 = vmatprep.subr.mxu0 %v1276
        %2406 = vmatpush1.xpose.msra.mxu0 %v1275
        %2407 = vmatprep.subr.mxu0 %v1292
        %2408 = vmatpush1.xpose.msra.mxu0 %v1291
        %2409 = vmatprep.subr.mxu0 %v1308
        %2410 = vmatpush1.xpose.msra.mxu0 %v1307
        %2411 = vmatprep.subr.mxu0 %v1324
        %2412 = vmatpush1.xpose.msra.mxu0 %v1323
        %2413 = vmatprep.subr.mxu0 %v1340
        %2414 = vmatpush1.xpose.msra.mxu0 %v1339
        %2415 = vmatprep.subr.mxu0 %v1356
        %2416 = vmatpush1.xpose.msra.mxu0 %v1355
        %2417 = vmatprep.mubr.f32.mxu0 %v332
        %2418 = vmatmul.mubr.f32.gmra.mrb[0].mxu0 %v331
        %v2419 = vpop.f32.mrb[0].mxu0
        %v2420 = vadd.f32 %v2349, %v2419
        %v2421 = vpop.f32.mrb[0].mxu0
        %v2422 = vadd.f32 %v2351, %v2421
        %2423 = vdwg.mxu0
        %2424 = vmatprep.subr.mxu0 %v862
        %2425 = vmatpush1.xpose.msra.mxu0 %v861
        %2426 = vmatprep.subr.mxu0 %v878
        %2427 = vmatpush1.xpose.msra.mxu0 %v877
        %2428 = vmatprep.subr.mxu0 %v894
        %2429 = vmatpush1.xpose.msra.mxu0 %v893
        %2430 = vmatprep.subr.mxu0 %v910
        %2431 = vmatpush1.xpose.msra.mxu0 %v909
        %2432 = vmatprep.subr.mxu0 %v926
        %2433 = vmatpush1.xpose.msra.mxu0 %v925
        %2434 = vmatprep.subr.mxu0 %v942
        %2435 = vmatpush1.xpose.msra.mxu0 %v941
        %2436 = vmatprep.subr.mxu0 %v958
        %2437 = vmatpush1.xpose.msra.mxu0 %v957
        %2438 = vmatprep.subr.mxu0 %v974
        %2439 = vmatpush1.xpose.msra.mxu0 %v973
        %2440 = vmatprep.subr.mxu0 %v990
        %2441 = vmatpush1.xpose.msra.mxu0 %v989
        %2442 = vmatprep.subr.mxu0 %v1006
        %2443 = vmatpush1.xpose.msra.mxu0 %v1005
        %2444 = vmatprep.subr.mxu0 %v1022
        %2445 = vmatpush1.xpose.msra.mxu0 %v1021
        %2446 = vmatprep.subr.mxu0 %v1038
        %2447 = vmatpush1.xpose.msra.mxu0 %v1037
        %2448 = vmatprep.subr.mxu0 %v1054
        %2449 = vmatpush1.xpose.msra.mxu0 %v1053
        %2450 = vmatprep.subr.mxu0 %v1070
        %2451 = vmatpush1.xpose.msra.mxu0 %v1069
        %2452 = vmatprep.subr.mxu0 %v1086
        %2453 = vmatpush1.xpose.msra.mxu0 %v1085
        %2454 = vmatprep.subr.mxu0 %v1102
        %2455 = vmatpush1.xpose.msra.mxu0 %v1101
        %2456 = vmatprep.subr.mxu0 %v1118
        %2457 = vmatpush1.xpose.msra.mxu0 %v1117
        %2458 = vmatprep.subr.mxu0 %v1134
        %2459 = vmatpush1.xpose.msra.mxu0 %v1133
        %2460 = vmatprep.subr.mxu0 %v1150
        %2461 = vmatpush1.xpose.msra.mxu0 %v1149
        %2462 = vmatprep.subr.mxu0 %v1166
        %2463 = vmatpush1.xpose.msra.mxu0 %v1165
        %2464 = vmatprep.subr.mxu0 %v1182
        %2465 = vmatpush1.xpose.msra.mxu0 %v1181
        %2466 = vmatprep.subr.mxu0 %v1198
        %2467 = vmatpush1.xpose.msra.mxu0 %v1197
        %2468 = vmatprep.subr.mxu0 %v1214
        %2469 = vmatpush1.xpose.msra.mxu0 %v1213
        %2470 = vmatprep.subr.mxu0 %v1230
        %2471 = vmatpush1.xpose.msra.mxu0 %v1229
        %2472 = vmatprep.subr.mxu0 %v1246
        %2473 = vmatpush1.xpose.msra.mxu0 %v1245
        %2474 = vmatprep.subr.mxu0 %v1262
        %2475 = vmatpush1.xpose.msra.mxu0 %v1261
        %2476 = vmatprep.subr.mxu0 %v1278
        %2477 = vmatpush1.xpose.msra.mxu0 %v1277
        %2478 = vmatprep.subr.mxu0 %v1294
        %2479 = vmatpush1.xpose.msra.mxu0 %v1293
        %2480 = vmatprep.subr.mxu0 %v1310
        %2481 = vmatpush1.xpose.msra.mxu0 %v1309
        %2482 = vmatprep.subr.mxu0 %v1326
        %2483 = vmatpush1.xpose.msra.mxu0 %v1325
        %2484 = vmatprep.subr.mxu0 %v1342
        %2485 = vmatpush1.xpose.msra.mxu0 %v1341
        %2486 = vmatprep.subr.mxu0 %v1358
        %2487 = vmatpush1.xpose.msra.mxu0 %v1357
        %2488 = vmatprep.mubr.f32.mxu0 %v334
        %2489 = vmatmul.mubr.f32.gmra.mrb[0].mxu0 %v333
        %v2490 = vpop.f32.mrb[0].mxu0
        %v2491 = vadd.f32 %v2420, %v2490
        %v2492 = vpop.f32.mrb[0].mxu0
        %v2493 = vadd.f32 %v2422, %v2492
        %2494 = vdwg.mxu0
        %v2495 = vadd.f32 %v315, %v1923
        %v2496 = vadd.f32 %v316, %v1925
        %v2497 = vadd.f32 %v317, %v2491
        %v2498 = vadd.f32 %v318, %v2493
        %2499 = vst [vmem:[#allocation2] sm:$0xff] %v2495
        %2500 = vst [vmem:[#allocation2 + $0x8] sm:$0xff] %v2496
        %2501 = vst [vmem:[#allocation2 + $0x10] sm:$0xff] %v2497
        %2502 = vst [vmem:[#allocation2 + $0x18] sm:$0xff] %v2498
        %p2503 = scmp.eq.s32.totalorder %s27, 1
        // Predicated region
        $region49: #{simple_feed_forward.3} parent=31 // pred_check
          %p2504 = pneg %p2503
        $region50: #{simple_feed_forward.3} parent=31 // pred_check_branch
          %2506 = sbr.rel (%p2504) target = $region52
        $region51: #{simple_feed_forward.3} parent=31 // pred_region
          %v2507 = vld [vmem:[#allocation2] sm:$0xff]
          %v2508 = vld [vmem:[#allocation2 + $0x8] sm:$0xff]
          %v2509 = vld [vmem:[#allocation2 + $0x10] sm:$0xff]
          %v2510 = vld [vmem:[#allocation2 + $0x18] sm:$0xff]
          %v2511 = vld [vmem:[%s256] sm:$0xf]
          %v2513 = vlaneseq
          %v2514 = vshrl.u32 %v2513, 7
          %v2515 = vsub.s32 0, %v2514
          %v2516 = vrot.slane %v2511, %v2515
          %v2517 = vlaneseq
          %v2518 = vshrl.u32 %v2517, 7
          %v2519 = vsub.s32 1, %v2518
          %v2520 = vrot.slane %v2511, %v2519
          %v2521 = vlaneseq
          %v2522 = vshrl.u32 %v2521, 7
          %v2523 = vsub.s32 2, %v2522
          %v2524 = vrot.slane %v2511, %v2523
          %v2525 = vlaneseq
          %v2526 = vshrl.u32 %v2525, 7
          %v2527 = vsub.s32 3, %v2526
          %v2528 = vrot.slane %v2511, %v2527
          %v2533 = vadd.f32 %v2507, %v2516
          %v2534 = vadd.f32 %v2508, %v2520
          %v2535 = vadd.f32 %v2509, %v2524
          %v2536 = vadd.f32 %v2510, %v2528
          %2537 = vst [vmem:[%s305] sm:$0xff] %v2533
          %2538 = vst [vmem:[%s305 + $0x8] sm:$0xff] %v2534
          %2539 = vst [vmem:[%s305 + $0x10] sm:$0xff] %v2535
          %2540 = vst [vmem:[%s305 + $0x18] sm:$0xff] %v2536
        $region52: #{simple_feed_forward.3} parent=31 // pred_fallthru
          _
        %s2541 = smul.u32 4, %s26
        %p2542 = scmp.lt.s32.totalorder %s25, 0
        %s2543 = scalar_select %p2542, %s25, 0
        %p2544 = scmp.lt.s32.totalorder %s2541, 7
        %s2545 = scalar_select %p2544, %s2541, 7
        %s2546 = smul.addr %s2543, 8
        %s2547 = sadd.s32 %s2545, %s2546
        %s2548 = smul.addr %s2547, 8
        %s2549 = scalar_lea.vmem %s3, %s2548
        // Predicated region
        $region53: #{simple_feed_forward.3} parent=31 // pred_check
          %p2550 = pneg %p141
        $region54: #{simple_feed_forward.3} parent=31 // pred_check_branch
          %2552 = sbr.rel (%p2550) target = $region56
        $region55: #{simple_feed_forward.3} parent=31 // pred_region
          %s2553 = smul.u32 4, %s26
        $region56: #{simple_feed_forward.3} parent=31 // pred_fallthru
          _
      $region32: #{simple_feed_forward.3} parent=5 // pred_fallthru
        _
      %p2554 = scmp.le.s32.totalorder 2, %s15
      // Predicated region
      $region57: #{simple_feed_forward.3} parent=5 // pred_check
        %p2555 = pneg %p2554
      $region58: #{simple_feed_forward.3} parent=5 // pred_check_branch
        %2557 = sbr.rel (%p2555) target = $region60
      $region59: #{simple_feed_forward.3} parent=5 // pred_region
        %s2558 = ssub.s32 %s15, 2
        // Predicated region
        $region61: #{simple_feed_forward.3} parent=59 // pred_check
          %p2559 = pneg %p147
        $region62: #{simple_feed_forward.3} parent=59 // pred_check_branch
          %2561 = sbr.rel (%p2559) target = $region64
        $region63: #{simple_feed_forward.3} parent=59 // pred_region
          %s2562 = smul.u32 4, %s29
          %p2563 = scmp.lt.s32.totalorder %s28, 0
          %s2564 = scalar_select %p2563, %s28, 0
          %p2565 = scmp.lt.s32.totalorder %s2562, 7
          %s2566 = scalar_select %p2565, %s2562, 7
          %s2567 = smul.addr %s2564, 8
          %s2568 = sadd.s32 %s2566, %s2567
          %s2569 = smul.addr %s2568, 8
          %s2570 = scalar_lea.vmem %s3, %s2569
        $region64: #{simple_feed_forward.3} parent=59 // pred_fallthru
          _
      $region60: #{simple_feed_forward.3} parent=5 // pred_fallthru
        _
    $region6: #{simple_feed_forward.3} parent=1 // loop_footer
      %s19 = sadd.s32 1, %s15
    $region7: #{simple_feed_forward.3} parent=1 // loop_footer_branch
      %14 = sbr.rel target = $region3
    $region8: #{simple_feed_forward.3} parent=1 // loop_exit
      _
    %2571 = vsyncpa [#allocation4], 1
    %s2572 = scalar_lea.sflag [#allocation4], 1
    %2573 = vsyncpa %s2572, 1
    %2574 = vsyncpa [#allocation6], 1
    %s2575 = scalar_lea.sflag [#allocation6], 1
    %2576 = vsyncpa %s2575, 1

</llo_original>
